<compile_context>
chip_gen: v7x
topology: tpu7x:2x2x1
jax: 0.10.0
libtpu: 0.0.40
codegen_flags: <defaults>
</compile_context>

<pallas_src>
import functools
import math

import jax
import jax.numpy as jnp
from jax import lax
from jax.experimental import pallas as pl
from jax.experimental.pallas import tpu as pltpu

BN_EPS = 1e-5
F32 = jnp.float32
BF16 = jnp.bfloat16


# --------------------------------------------------------------------------
# The fused Pallas kernel: entire MCNN forward on VMEM-resident tensors.
# --------------------------------------------------------------------------
def _mcnn_fused_kernel(idx_ref, x_ref, lut_ref, wesm_ref, wemb_ref, bemb_ref,
                       wfpn_ref, bfpn_ref, wup_ref, bup_ref, wfc_ref, bfc_ref,
                       out_ref):
    f32, bf16 = jnp.float32, jnp.bfloat16
    dot = functools.partial(jnp.dot, preferred_element_type=f32)
    n_tap, rb, _ = x_ref.shape          # (3, row_block, 1280)
    lut_rows = lut_ref.shape[0]         # 128 (embedding table padded)
    hdim = wemb_ref.shape[-1]           # hidden_dim

    # emb Conv1d(k=3, pad=0) on the length-3 dense sequence + BN1d, with the
    # dual projection fused per tap: one ESM matmul, one one-hot-LUT matmul
    # (in-kernel embedding gather), ReLU, then the BN-folded tap weight.
    conv_emb = jnp.zeros((rb, hdim), f32)
    for k in range(n_tap):
        onehot = (idx_ref[k] ==
                  lax.broadcasted_iota(jnp.int32, (rb, lut_rows), 1)).astype(bf16)
        aa = dot(onehot, lut_ref[...])                   # embed + proj_aa + biases
        esm = dot(x_ref[k], wesm_ref[...])               # proj_esm (K=1280 aligned)
        h_k = jnp.maximum(aa + esm, 0.0).astype(bf16)    # ReLU, single bf16 cast
        conv_emb = conv_emb + dot(h_k, wemb_ref[k])      # BN-folded tap weight
    conv_emb = conv_emb + bemb_ref[...]                  # (rb, H), f32

    # FPN: the whole sub_conv1/2/3 + s_conv1/2/3 (+BN) linear chain pre-folded
    # into one (H, 3H) matmul, then the 4x SeparableConv + conv_2(4,1) fold.
    c_out = jnp.maximum(dot(conv_emb.astype(bf16), wfpn_ref[...])
                        + bfpn_ref[...], 0.0)            # (rb, 3H)
    fpn_out = jnp.maximum(dot(c_out.astype(bf16), wup_ref[...])
                          + bup_ref[...], 0.0)           # (rb, H)

    # TODO(synk): MCAM (multi_head) is not defined in the source -> identity.
    feat = (conv_emb + fpn_out).astype(bf16)

    # fc_out (padded to 128 lanes) + exact, numerically stable sigmoid.
    y = dot(feat, wfc_ref[...]) + bfc_ref[...]           # (rb, 128), f32
    e = jnp.exp(-jnp.abs(y))
    out_ref[...] = jnp.where(y >= 0.0, 1.0, e) / (1.0 + e)


# --------------------------------------------------------------------------
# Parameter init (deterministic, mirrors MCNN.__init__ / init_parameters).
# --------------------------------------------------------------------------
def kaiming_fan_out(key, shape):
    rfs = math.prod(shape[2:]) if len(shape) > 2 else 1
    fan_out = shape[0] * rfs
    return math.sqrt(2.0 / fan_out) * jax.random.normal(key, shape, F32)


def bn_params(c):
    return (jnp.ones((c,), F32), jnp.zeros((c,), F32),
            jnp.zeros((c,), F32), jnp.ones((c,), F32))


def init_params(key, input_dim=512, hidden_dim=32, num_classes=64):
    H = hidden_dim
    keys = iter(jax.random.split(key, 24))
    p = {}
    p["embed"] = jax.random.normal(next(keys), (21, 96), F32)      # nn.Embedding(21, 96)
    p["proj_aa_w"] = 0.001 * jax.random.normal(next(keys), (512, 96), F32)
    p["proj_aa_b"] = jnp.zeros((512,), F32)
    p["proj_esm_w"] = 0.001 * jax.random.normal(next(keys), (512, 1280), F32)
    p["proj_esm_b"] = jnp.zeros((512,), F32)
    p["emb_w"] = kaiming_fan_out(next(keys), (H, input_dim, 3))
    p["emb_b"] = jnp.zeros((H,), F32)
    p["emb_bn"] = bn_params(H)

    fpn = {}
    fpn["sub1_w"] = kaiming_fan_out(next(keys), (H, H, 3))
    fpn["sub1_b"] = jnp.zeros((H,), F32)
    fpn["sub2_w"] = kaiming_fan_out(next(keys), (H // 2, H, 3))
    fpn["sub2_b"] = jnp.zeros((H // 2,), F32)
    fpn["sub3_w"] = kaiming_fan_out(next(keys), (H // 4, H // 2, 3))
    fpn["sub3_b"] = jnp.zeros((H // 4,), F32)
    fpn["s1_w"] = kaiming_fan_out(next(keys), (1, 1, 1, 1))
    fpn["s1_bn"] = bn_params(1)
    fpn["s2_w"] = kaiming_fan_out(next(keys), (2, 1, 1, 1))
    fpn["s2_bn"] = bn_params(2)
    fpn["s3_w"] = kaiming_fan_out(next(keys), (4, 1, 1, 1))
    fpn["s3_bn"] = bn_params(4)
    for i in range(4):
        fpn[f"up{i}_dw_w"] = kaiming_fan_out(next(keys), (3 * H, 1, 3))
        fpn[f"up{i}_bn"] = bn_params(3 * H)
        fpn[f"up{i}_pw_w"] = kaiming_fan_out(next(keys), (H, 3 * H, 1, 1))
    fpn["out_w"] = kaiming_fan_out(next(keys), (1, 4, 1, 1))
    fpn["out_bn"] = bn_params(1)
    p["fpn"] = fpn

    p["fc_w"] = 0.001 * jax.random.normal(next(keys), (num_classes, H), F32)
    p["fc_b"] = jnp.zeros((num_classes,), F32)
    return p


# --------------------------------------------------------------------------
# One-time param prep: fold BN / biases / 1x1 convs / the full FPN chain.
# --------------------------------------------------------------------------
def prepare_params(p, *, hidden_dim, num_classes, eps=BN_EPS,
                   lut_rows=128, out_lanes=128):
    H = hidden_dim
    fpn = p["fpn"]

    def bn_fold(gamma, beta, mean, var):
        s = gamma / jnp.sqrt(var + eps)
        return s, beta - mean * s

    q = {}
    # Embedding + proj_aa (+ proj_aa/proj_esm biases) folded into one lookup
    # table, gathered in-kernel via a one-hot matmul (rows padded to 128).
    lut = p["embed"] @ p["proj_aa_w"].T + p["proj_aa_b"] + p["proj_esm_b"]
    q["lut"] = jnp.pad(lut, ((0, lut_rows - lut.shape[0]), (0, 0))).astype(BF16)
    q["w_esm"] = p["proj_esm_w"].T.astype(BF16)                      # (1280, 512)

    # emb Conv1d + BN1d -> three per-tap (512, H) weights, BN folded in.
    s, t = bn_fold(*p["emb_bn"])
    q["w_emb"] = jnp.transpose(p["emb_w"] * s[:, None, None], (2, 1, 0)).astype(BF16)
    q["b_emb"] = (s * p["emb_b"] + t)[None, :].astype(F32)

    # FPN linear chain: sub_conv1/2/3 centre taps + biases + s_conv1/2/3
    # (1x1 Conv2d + BN2d) + channel-duplicating placement, folded into ONE
    # (H, 3H) weight and (3H,) bias (exact; ReLU only after placement).
    W1 = fpn["sub1_w"][:, :, 1].T
    W2 = fpn["sub2_w"][:, :, 1].T
    W3 = fpn["sub3_w"][:, :, 1].T
    b1, b2, b3 = fpn["sub1_b"], fpn["sub2_b"], fpn["sub3_b"]
    s1, t1 = bn_fold(*fpn["s1_bn"]); a1 = fpn["s1_w"].reshape(1) * s1
    s2, t2 = bn_fold(*fpn["s2_bn"]); a2 = fpn["s2_w"].reshape(2) * s2
    s3, t3 = bn_fold(*fpn["s3_bn"]); a3 = fpn["s3_w"].reshape(4) * s3
    z = lambda r, c: jnp.zeros((r, c), F32)
    eye = lambda n: jnp.eye(n, dtype=F32)
    P1 = jnp.concatenate([a1[0] * eye(H), z(H, 2 * H)], axis=1)
    P2 = jnp.concatenate([z(H // 2, H), a2[0] * eye(H // 2),
                          a2[1] * eye(H // 2), z(H // 2, H)], axis=1)
    P3 = jnp.concatenate([z(H // 4, 2 * H)]
                         + [a3[j] * eye(H // 4) for j in range(4)], axis=1)
    b_sc = jnp.concatenate([jnp.repeat(t1, H), jnp.repeat(t2, H // 2),
                            jnp.repeat(t3, H // 4)])
    M3 = P3
    M2 = P2 + W3 @ M3
    M1 = P1 + W2 @ M2
    q["w_fpn"] = (W1 @ M1).astype(BF16)                              # (H, 3H)
    q["b_fpn"] = (b1 @ M1 + b2 @ M2 + b3 @ M3 + b_sc)[None, :].astype(F32)

    # 4x SeparableConv (depthwise centre tap + BN1d + pointwise) + conv_2(4,1)
    # (1x1 Conv2d + BN2d): outputs are only summed -> one (3H, H) matmul.
    so, to = bn_fold(*fpn["out_bn"])
    a_out = so * fpn["out_w"].reshape(4)
    w_up = jnp.zeros((3 * H, H), F32)
    b_up = jnp.zeros((H,), F32)
    for i in range(4):
        sd, td = bn_fold(*fpn[f"up{i}_bn"])
        dwm = fpn[f"up{i}_dw_w"][:, 0, 1] * sd                       # (3H,)
        pw = fpn[f"up{i}_pw_w"].reshape(H, 3 * H)                    # (H, 3H)
        w_up = w_up + a_out[i] * (pw * dwm[None, :]).T               # (3H, H)
        b_up = b_up + a_out[i] * (pw @ td)
    q["w_up"] = w_up.astype(BF16)
    q["b_up"] = (b_up + to)[None, :].astype(F32)

    # fc_out padded to a lane-dense 128-wide output (sliced in the wrapper).
    wfc = jnp.zeros((H, out_lanes), F32).at[:, :num_classes].set(p["fc_w"].T)
    bfc = jnp.zeros((out_lanes,), F32).at[:num_classes].set(p["fc_b"])
    q["w_fc"] = wfc.astype(BF16)
    q["b_fc"] = bfc[None, :].astype(F32)
    return q


# --------------------------------------------------------------------------
# Forward pass: minimal glue (tap-major reorder + pad) + ONE pallas_call.
# --------------------------------------------------------------------------
def _const_spec(shape):
    rank = len(shape)
    return pl.BlockSpec(shape, lambda g: (0,) * rank)   # same block every step


def mcnn_forward(prep, native_x, x_esm, batch_vec, *, B, nodes_per_graph,
                 num_classes):
    del batch_vec  # to_dense_batch for equal-sized graphs is just a reshape.
    N = nodes_per_graph
    if N - 2 != 1:
        raise ValueError("MCNN's fc_out requires dense length N with N - 2 == 1 (N == 3).")
    H = prep["w_emb"].shape[-1]
    D = prep["w_esm"].shape[0]
    F = prep["w_esm"].shape[1]
    CP = prep["w_fc"].shape[-1]
    LUT = prep["lut"].shape[0]

    # Row-block size: pad graphs to a sublane multiple; cap blocks at 256 rows
    # so weights + double-buffered blocks also fit v7x's 64 MiB VMEM.
    BP0 = -(-B // 8) * 8
    RB = min(BP0, 256)
    BPT = -(-BP0 // RB) * RB
    nb = BPT // RB

    # Glue: tap-major reorder + pad of the two runtime inputs (tiny copies;
    # the old (B*N, 1376) concat and XLA embedding gather are gone).
    idx = native_x.astype(jnp.int32).reshape(B, N).transpose(1, 0)    # (N, B)
    idx = jnp.pad(idx, ((0, 0), (0, BPT - B)))[..., None]             # (N, BPT, 1)
    x_tm = x_esm.astype(BF16).reshape(B, N, D).transpose(1, 0, 2)     # (N, B, D)
    x_tm = jnp.pad(x_tm, ((0, 0), (0, BPT - B), (0, 0)))              # (N, BPT, D)

    w_args = (prep["lut"], prep["w_esm"], prep["w_emb"], prep["b_emb"],
              prep["w_fpn"], prep["b_fpn"], prep["w_up"], prep["b_up"],
              prep["w_fc"], prep["b_fc"])

    in_specs = [pl.BlockSpec((N, RB, 1), lambda g: (0, g, 0)),
                pl.BlockSpec((N, RB, D), lambda g: (0, g, 0))]
    in_specs += [_const_spec(a.shape) for a in w_args]    # weights VMEM-resident
    out_specs = pl.BlockSpec((RB, CP), lambda g: (g, 0))  # lane/sublane-dense

    # Right-sized VMEM budget: weights + double-buffered I/O blocks + headroom.
    weight_bytes = sum(int(a.size) * a.dtype.itemsize for a in w_args)
    io_bytes = 2 * (N * RB * D * 2 + N * RB * 128 * 4) + 2 * RB * CP * 4
    vmem_limit = min(int(weight_bytes + io_bytes) + (4 << 20), 64 << 20)

    flops_row = (N * (2 * LUT * F + 2 * D * F + 2 * F * H)
                 + 2 * H * 3 * H + 2 * 3 * H * H + 2 * H * CP)
    bytes_accessed = int(idx.size * 4 + x_tm.size * 2 + weight_bytes + BPT * CP * 4)

    out = pl.pallas_call(
        _mcnn_fused_kernel,
        grid=(nb,),
        out_shape=jax.ShapeDtypeStruct((BPT, CP), F32),
        in_specs=in_specs,
        out_specs=out_specs,
        compiler_params=pltpu.CompilerParams(
            dimension_semantics=("parallel",),        # 2x on v7x's two TCs
            vmem_limit_bytes=vmem_limit),
        cost_estimate=pl.CostEstimate(flops=int(BPT * flops_row),
                                      transcendentals=int(BPT * CP),
                                      bytes_accessed=bytes_accessed),
    )(idx, x_tm, *w_args)
    return out[:B, :num_classes]


# --------------------------------------------------------------------------
if __name__ == "__main__":
    B = 2
    NODES = 3            # nodes per graph; the module requires N_dense - 2 == 1
    HIDDEN = 32
    NUM_CLASSES = 64
    INPUT_DIM = 512      # forced: proj outputs feed Conv1d(input_dim, hidden)

    key = jax.random.PRNGKey(0)
    k_param, k_idx, k_esm = jax.random.split(key, 3)

    raw_params = init_params(k_param, input_dim=INPUT_DIM, hidden_dim=HIDDEN,
                             num_classes=NUM_CLASSES)
    prep = prepare_params(raw_params, hidden_dim=HIDDEN, num_classes=NUM_CLASSES)

    native_x = jax.random.randint(k_idx, (B * NODES,), 0, 21)         # amino-acid ids
    x_esm = jax.random.normal(k_esm, (B * NODES, 1280), F32)          # ESM features
    batch_vec = jnp.repeat(jnp.arange(B), NODES)

    fwd = jax.jit(functools.partial(mcnn_forward, B=B, nodes_per_graph=NODES,
                                    num_classes=NUM_CLASSES))
    out = jax.block_until_ready(fwd(prep, native_x, x_esm, batch_vec))

    assert out.shape == (B, NUM_CLASSES)
    assert bool(jnp.all(jnp.isfinite(out)))
    print("KERNEL_OK")
</pallas_src>

<mosaic_0001>
module attributes {stable_mosaic.version = 11 : i64} {
  func.func @_mcnn_fused_kernel(%arg0: i32, %arg1: memref<3x8x1xi32, #tpu.memory_space<vmem>>, %arg2: memref<3x8x1280xbf16, #tpu.memory_space<vmem>>, %arg3: memref<128x512xbf16, #tpu.memory_space<vmem>>, %arg4: memref<1280x512xbf16, #tpu.memory_space<vmem>>, %arg5: memref<3x512x32xbf16, #tpu.memory_space<vmem>>, %arg6: memref<1x32xf32, #tpu.memory_space<vmem>>, %arg7: memref<32x96xbf16, #tpu.memory_space<vmem>>, %arg8: memref<1x96xf32, #tpu.memory_space<vmem>>, %arg9: memref<96x32xbf16, #tpu.memory_space<vmem>>, %arg10: memref<1x32xf32, #tpu.memory_space<vmem>>, %arg11: memref<32x128xbf16, #tpu.memory_space<vmem>>, %arg12: memref<1x128xf32, #tpu.memory_space<vmem>>, %arg13: memref<8x128xf32, #tpu.memory_space<vmem>>) attributes {dimension_semantics = [#tpu.dimension_semantics<parallel>], iteration_bounds = array<i64: 1>, scalar_prefetch = 0 : i64, scratch_operands = 0 : i64, tpu.core_type = #tpu.core_type<tc>, window_params = [{transform_indices = @transform_0, window_bounds = array<i64: 3, 8, 1>}, {transform_indices = @transform_1, window_bounds = array<i64: 3, 8, 1280>}, {pipeline_mode = #tpu.pipeline_mode<synchronous>, transform_indices = @transform_2, window_bounds = array<i64: 128, 512>}, {pipeline_mode = #tpu.pipeline_mode<synchronous>, transform_indices = @transform_3, window_bounds = array<i64: 1280, 512>}, {pipeline_mode = #tpu.pipeline_mode<synchronous>, transform_indices = @transform_4, window_bounds = array<i64: 3, 512, 32>}, {pipeline_mode = #tpu.pipeline_mode<synchronous>, transform_indices = @transform_5, window_bounds = array<i64: 1, 32>}, {pipeline_mode = #tpu.pipeline_mode<synchronous>, transform_indices = @transform_6, window_bounds = array<i64: 32, 96>}, {pipeline_mode = #tpu.pipeline_mode<synchronous>, transform_indices = @transform_7, window_bounds = array<i64: 1, 96>}, {pipeline_mode = #tpu.pipeline_mode<synchronous>, transform_indices = @transform_8, window_bounds = array<i64: 96, 32>}, {pipeline_mode = #tpu.pipeline_mode<synchronous>, transform_indices = @transform_9, window_bounds = array<i64: 1, 32>}, {pipeline_mode = #tpu.pipeline_mode<synchronous>, transform_indices = @transform_10, window_bounds = array<i64: 32, 128>}, {pipeline_mode = #tpu.pipeline_mode<synchronous>, transform_indices = @transform_11, window_bounds = array<i64: 1, 128>}, {transform_indices = @transform_12, window_bounds = array<i64: 8, 128>}]} {
    %cst = arith.constant 0.000000e+00 : f32
    %0 = vector.broadcast %cst : f32 to vector<8x32xf32>
    %c0 = arith.constant 0 : index
    %c0_0 = arith.constant 0 : index
    %c0_1 = arith.constant 0 : index
    %1 = vector.load %arg1[%c0, %c0_0, %c0_1] : memref<3x8x1xi32, #tpu.memory_space<vmem>>, vector<1x8x1xi32>
    %2 = vector.shape_cast %1 : vector<1x8x1xi32> to vector<8x1xi32>
    %3 = tpu.iota {dimensions = array<i32: 1>} : vector<8x128xi32>
    %4 = vector.broadcast %2 : vector<8x1xi32> to vector<8x128xi32>
    %5 = arith.cmpi eq, %4, %3 : vector<8x128xi32>
    %6 = arith.extui %5 : vector<8x128xi1> to vector<8x128xi32>
    %7 = arith.sitofp %6 : vector<8x128xi32> to vector<8x128xf32>
    %8 = arith.truncf %7 : vector<8x128xf32> to vector<8x128xbf16>
    %c0_2 = arith.constant 0 : index
    %c0_3 = arith.constant 0 : index
    %9 = vector.load %arg3[%c0_2, %c0_3] : memref<128x512xbf16, #tpu.memory_space<vmem>>, vector<128x512xbf16>
    %cst_4 = arith.constant dense<0.000000e+00> : vector<8x512xf32>
    %10 = tpu.matmul %8, %9, %cst_4 {dimension_numbers = #tpu.dot_dimension_numbers<[1], [0], [0], [1], [0, 0, 1, 1], [], []>} : vector<8x128xbf16>, vector<128x512xbf16>, vector<8x512xf32> -> vector<8x512xf32>
    %c0_5 = arith.constant 0 : index
    %c0_6 = arith.constant 0 : index
    %c0_7 = arith.constant 0 : index
    %11 = vector.load %arg2[%c0_5, %c0_6, %c0_7] : memref<3x8x1280xbf16, #tpu.memory_space<vmem>>, vector<1x8x1280xbf16>
    %12 = vector.shape_cast %11 : vector<1x8x1280xbf16> to vector<8x1280xbf16>
    %c0_8 = arith.constant 0 : index
    %c0_9 = arith.constant 0 : index
    %13 = vector.load %arg4[%c0_8, %c0_9] : memref<1280x512xbf16, #tpu.memory_space<vmem>>, vector<1280x512xbf16>
    %cst_10 = arith.constant dense<0.000000e+00> : vector<8x512xf32>
    %14 = tpu.matmul %12, %13, %cst_10 {dimension_numbers = #tpu.dot_dimension_numbers<[1], [0], [0], [1], [0, 0, 1, 1], [], []>} : vector<8x1280xbf16>, vector<1280x512xbf16>, vector<8x512xf32> -> vector<8x512xf32>
    %15 = arith.addf %10, %14 : vector<8x512xf32>
    %cst_11 = arith.constant 0.000000e+00 : f32
    %16 = vector.broadcast %cst_11 : f32 to vector<8x512xf32>
    %17 = arith.maximumf %15, %16 : vector<8x512xf32>
    %18 = arith.truncf %17 : vector<8x512xf32> to vector<8x512xbf16>
    %c0_12 = arith.constant 0 : index
    %c0_13 = arith.constant 0 : index
    %c0_14 = arith.constant 0 : index
    %19 = vector.load %arg5[%c0_12, %c0_13, %c0_14] : memref<3x512x32xbf16, #tpu.memory_space<vmem>>, vector<1x512x32xbf16>
    %20 = vector.shape_cast %19 : vector<1x512x32xbf16> to vector<512x32xbf16>
    %cst_15 = arith.constant dense<0.000000e+00> : vector<8x32xf32>
    %21 = tpu.matmul %18, %20, %cst_15 {dimension_numbers = #tpu.dot_dimension_numbers<[1], [0], [0], [1], [0, 0, 1, 1], [], []>} : vector<8x512xbf16>, vector<512x32xbf16>, vector<8x32xf32> -> vector<8x32xf32>
    %22 = arith.addf %0, %21 : vector<8x32xf32>
    %c1 = arith.constant 1 : index
    %c0_16 = arith.constant 0 : index
    %c0_17 = arith.constant 0 : index
    %23 = vector.load %arg1[%c1, %c0_16, %c0_17] : memref<3x8x1xi32, #tpu.memory_space<vmem>>, vector<1x8x1xi32>
    %24 = vector.shape_cast %23 : vector<1x8x1xi32> to vector<8x1xi32>
    %25 = tpu.iota {dimensions = array<i32: 1>} : vector<8x128xi32>
    %26 = vector.broadcast %24 : vector<8x1xi32> to vector<8x128xi32>
    %27 = arith.cmpi eq, %26, %25 : vector<8x128xi32>
    %28 = arith.extui %27 : vector<8x128xi1> to vector<8x128xi32>
    %29 = arith.sitofp %28 : vector<8x128xi32> to vector<8x128xf32>
    %30 = arith.truncf %29 : vector<8x128xf32> to vector<8x128xbf16>
    %c0_18 = arith.constant 0 : index
    %c0_19 = arith.constant 0 : index
    %31 = vector.load %arg3[%c0_18, %c0_19] : memref<128x512xbf16, #tpu.memory_space<vmem>>, vector<128x512xbf16>
    %cst_20 = arith.constant dense<0.000000e+00> : vector<8x512xf32>
    %32 = tpu.matmul %30, %31, %cst_20 {dimension_numbers = #tpu.dot_dimension_numbers<[1], [0], [0], [1], [0, 0, 1, 1], [], []>} : vector<8x128xbf16>, vector<128x512xbf16>, vector<8x512xf32> -> vector<8x512xf32>
    %c1_21 = arith.constant 1 : index
    %c0_22 = arith.constant 0 : index
    %c0_23 = arith.constant 0 : index
    %33 = vector.load %arg2[%c1_21, %c0_22, %c0_23] : memref<3x8x1280xbf16, #tpu.memory_space<vmem>>, vector<1x8x1280xbf16>
    %34 = vector.shape_cast %33 : vector<1x8x1280xbf16> to vector<8x1280xbf16>
    %c0_24 = arith.constant 0 : index
    %c0_25 = arith.constant 0 : index
    %35 = vector.load %arg4[%c0_24, %c0_25] : memref<1280x512xbf16, #tpu.memory_space<vmem>>, vector<1280x512xbf16>
    %cst_26 = arith.constant dense<0.000000e+00> : vector<8x512xf32>
    %36 = tpu.matmul %34, %35, %cst_26 {dimension_numbers = #tpu.dot_dimension_numbers<[1], [0], [0], [1], [0, 0, 1, 1], [], []>} : vector<8x1280xbf16>, vector<1280x512xbf16>, vector<8x512xf32> -> vector<8x512xf32>
    %37 = arith.addf %32, %36 : vector<8x512xf32>
    %cst_27 = arith.constant 0.000000e+00 : f32
    %38 = vector.broadcast %cst_27 : f32 to vector<8x512xf32>
    %39 = arith.maximumf %37, %38 : vector<8x512xf32>
    %40 = arith.truncf %39 : vector<8x512xf32> to vector<8x512xbf16>
    %c1_28 = arith.constant 1 : index
    %c0_29 = arith.constant 0 : index
    %c0_30 = arith.constant 0 : index
    %41 = vector.load %arg5[%c1_28, %c0_29, %c0_30] : memref<3x512x32xbf16, #tpu.memory_space<vmem>>, vector<1x512x32xbf16>
    %42 = vector.shape_cast %41 : vector<1x512x32xbf16> to vector<512x32xbf16>
    %cst_31 = arith.constant dense<0.000000e+00> : vector<8x32xf32>
    %43 = tpu.matmul %40, %42, %cst_31 {dimension_numbers = #tpu.dot_dimension_numbers<[1], [0], [0], [1], [0, 0, 1, 1], [], []>} : vector<8x512xbf16>, vector<512x32xbf16>, vector<8x32xf32> -> vector<8x32xf32>
    %44 = arith.addf %22, %43 : vector<8x32xf32>
    %c2 = arith.constant 2 : index
    %c0_32 = arith.constant 0 : index
    %c0_33 = arith.constant 0 : index
    %45 = vector.load %arg1[%c2, %c0_32, %c0_33] : memref<3x8x1xi32, #tpu.memory_space<vmem>>, vector<1x8x1xi32>
    %46 = vector.shape_cast %45 : vector<1x8x1xi32> to vector<8x1xi32>
    %47 = tpu.iota {dimensions = array<i32: 1>} : vector<8x128xi32>
    %48 = vector.broadcast %46 : vector<8x1xi32> to vector<8x128xi32>
    %49 = arith.cmpi eq, %48, %47 : vector<8x128xi32>
    %50 = arith.extui %49 : vector<8x128xi1> to vector<8x128xi32>
    %51 = arith.sitofp %50 : vector<8x128xi32> to vector<8x128xf32>
    %52 = arith.truncf %51 : vector<8x128xf32> to vector<8x128xbf16>
    %c0_34 = arith.constant 0 : index
    %c0_35 = arith.constant 0 : index
    %53 = vector.load %arg3[%c0_34, %c0_35] : memref<128x512xbf16, #tpu.memory_space<vmem>>, vector<128x512xbf16>
    %cst_36 = arith.constant dense<0.000000e+00> : vector<8x512xf32>
    %54 = tpu.matmul %52, %53, %cst_36 {dimension_numbers = #tpu.dot_dimension_numbers<[1], [0], [0], [1], [0, 0, 1, 1], [], []>} : vector<8x128xbf16>, vector<128x512xbf16>, vector<8x512xf32> -> vector<8x512xf32>
    %c2_37 = arith.constant 2 : index
    %c0_38 = arith.constant 0 : index
    %c0_39 = arith.constant 0 : index
    %55 = vector.load %arg2[%c2_37, %c0_38, %c0_39] : memref<3x8x1280xbf16, #tpu.memory_space<vmem>>, vector<1x8x1280xbf16>
    %56 = vector.shape_cast %55 : vector<1x8x1280xbf16> to vector<8x1280xbf16>
    %c0_40 = arith.constant 0 : index
    %c0_41 = arith.constant 0 : index
    %57 = vector.load %arg4[%c0_40, %c0_41] : memref<1280x512xbf16, #tpu.memory_space<vmem>>, vector<1280x512xbf16>
    %cst_42 = arith.constant dense<0.000000e+00> : vector<8x512xf32>
    %58 = tpu.matmul %56, %57, %cst_42 {dimension_numbers = #tpu.dot_dimension_numbers<[1], [0], [0], [1], [0, 0, 1, 1], [], []>} : vector<8x1280xbf16>, vector<1280x512xbf16>, vector<8x512xf32> -> vector<8x512xf32>
    %59 = arith.addf %54, %58 : vector<8x512xf32>
    %cst_43 = arith.constant 0.000000e+00 : f32
    %60 = vector.broadcast %cst_43 : f32 to vector<8x512xf32>
    %61 = arith.maximumf %59, %60 : vector<8x512xf32>
    %62 = arith.truncf %61 : vector<8x512xf32> to vector<8x512xbf16>
    %c2_44 = arith.constant 2 : index
    %c0_45 = arith.constant 0 : index
    %c0_46 = arith.constant 0 : index
    %63 = vector.load %arg5[%c2_44, %c0_45, %c0_46] : memref<3x512x32xbf16, #tpu.memory_space<vmem>>, vector<1x512x32xbf16>
    %64 = vector.shape_cast %63 : vector<1x512x32xbf16> to vector<512x32xbf16>
    %cst_47 = arith.constant dense<0.000000e+00> : vector<8x32xf32>
    %65 = tpu.matmul %62, %64, %cst_47 {dimension_numbers = #tpu.dot_dimension_numbers<[1], [0], [0], [1], [0, 0, 1, 1], [], []>} : vector<8x512xbf16>, vector<512x32xbf16>, vector<8x32xf32> -> vector<8x32xf32>
    %66 = arith.addf %44, %65 : vector<8x32xf32>
    %c0_48 = arith.constant 0 : index
    %c0_49 = arith.constant 0 : index
    %67 = vector.load %arg6[%c0_48, %c0_49] : memref<1x32xf32, #tpu.memory_space<vmem>>, vector<1x32xf32>
    %68 = vector.broadcast %67 : vector<1x32xf32> to vector<8x32xf32>
    %69 = arith.addf %66, %68 : vector<8x32xf32>
    %70 = arith.truncf %69 : vector<8x32xf32> to vector<8x32xbf16>
    %c0_50 = arith.constant 0 : index
    %c0_51 = arith.constant 0 : index
    %71 = vector.load %arg7[%c0_50, %c0_51] : memref<32x96xbf16, #tpu.memory_space<vmem>>, vector<32x96xbf16>
    %cst_52 = arith.constant dense<0.000000e+00> : vector<8x96xf32>
    %72 = tpu.matmul %70, %71, %cst_52 {dimension_numbers = #tpu.dot_dimension_numbers<[1], [0], [0], [1], [0, 0, 1, 1], [], []>} : vector<8x32xbf16>, vector<32x96xbf16>, vector<8x96xf32> -> vector<8x96xf32>
    %c0_53 = arith.constant 0 : index
    %c0_54 = arith.constant 0 : index
    %73 = vector.load %arg8[%c0_53, %c0_54] : memref<1x96xf32, #tpu.memory_space<vmem>>, vector<1x96xf32>
    %74 = vector.broadcast %73 : vector<1x96xf32> to vector<8x96xf32>
    %75 = arith.addf %72, %74 : vector<8x96xf32>
    %cst_55 = arith.constant 0.000000e+00 : f32
    %76 = vector.broadcast %cst_55 : f32 to vector<8x96xf32>
    %77 = arith.maximumf %75, %76 : vector<8x96xf32>
    %78 = arith.truncf %77 : vector<8x96xf32> to vector<8x96xbf16>
    %c0_56 = arith.constant 0 : index
    %c0_57 = arith.constant 0 : index
    %79 = vector.load %arg9[%c0_56, %c0_57] : memref<96x32xbf16, #tpu.memory_space<vmem>>, vector<96x32xbf16>
    %cst_58 = arith.constant dense<0.000000e+00> : vector<8x32xf32>
    %80 = tpu.matmul %78, %79, %cst_58 {dimension_numbers = #tpu.dot_dimension_numbers<[1], [0], [0], [1], [0, 0, 1, 1], [], []>} : vector<8x96xbf16>, vector<96x32xbf16>, vector<8x32xf32> -> vector<8x32xf32>
    %c0_59 = arith.constant 0 : index
    %c0_60 = arith.constant 0 : index
    %81 = vector.load %arg10[%c0_59, %c0_60] : memref<1x32xf32, #tpu.memory_space<vmem>>, vector<1x32xf32>
    %82 = vector.broadcast %81 : vector<1x32xf32> to vector<8x32xf32>
    %83 = arith.addf %80, %82 : vector<8x32xf32>
    %cst_61 = arith.constant 0.000000e+00 : f32
    %84 = vector.broadcast %cst_61 : f32 to vector<8x32xf32>
    %85 = arith.maximumf %83, %84 : vector<8x32xf32>
    %86 = arith.addf %69, %85 : vector<8x32xf32>
    %87 = arith.truncf %86 : vector<8x32xf32> to vector<8x32xbf16>
    %c0_62 = arith.constant 0 : index
    %c0_63 = arith.constant 0 : index
    %88 = vector.load %arg11[%c0_62, %c0_63] : memref<32x128xbf16, #tpu.memory_space<vmem>>, vector<32x128xbf16>
    %cst_64 = arith.constant dense<0.000000e+00> : vector<8x128xf32>
    %89 = tpu.matmul %87, %88, %cst_64 {dimension_numbers = #tpu.dot_dimension_numbers<[1], [0], [0], [1], [0, 0, 1, 1], [], []>} : vector<8x32xbf16>, vector<32x128xbf16>, vector<8x128xf32> -> vector<8x128xf32>
    %c0_65 = arith.constant 0 : index
    %c0_66 = arith.constant 0 : index
    %90 = vector.load %arg12[%c0_65, %c0_66] : memref<1x128xf32, #tpu.memory_space<vmem>>, vector<1x128xf32>
    %91 = vector.broadcast %90 : vector<1x128xf32> to vector<8x128xf32>
    %92 = arith.addf %89, %91 : vector<8x128xf32>
    %93 = math.absf %92 : vector<8x128xf32>
    %cst_67 = arith.constant 0.000000e+00 : f32
    %94 = vector.broadcast %cst_67 : f32 to vector<8x128xf32>
    %95 = arith.subf %94, %93 : vector<8x128xf32>
    %96 = math.exp %95 : vector<8x128xf32>
    %cst_68 = arith.constant 0.000000e+00 : f32
    %97 = vector.broadcast %cst_68 : f32 to vector<8x128xf32>
    %98 = arith.cmpf oge, %92, %97 : vector<8x128xf32>
    %cst_69 = arith.constant 1.000000e+00 : f32
    %99 = vector.broadcast %cst_69 : f32 to vector<8x128xf32>
    %100 = arith.select %98, %99, %96 : vector<8x128xi1>, vector<8x128xf32>
    %cst_70 = arith.constant 1.000000e+00 : f32
    %101 = vector.broadcast %cst_70 : f32 to vector<8x128xf32>
    %102 = arith.addf %101, %96 : vector<8x128xf32>
    %103 = arith.divf %100, %102 : vector<8x128xf32>
    %c0_71 = arith.constant 0 : index
    %c0_72 = arith.constant 0 : index
    %104 = vector.load %arg13[%c0_71, %c0_72] : memref<8x128xf32, #tpu.memory_space<vmem>>, vector<8x128xf32>
    tpu.vector_store %arg13[%c0_71, %c0_72], %103 {strides = array<i32>} : memref<8x128xf32, #tpu.memory_space<vmem>>, vector<8x128xf32>,
    return
  }
  func.func @transform_0(%arg0: i32) -> (i32, i32, i32) {
    %c0_i32 = arith.constant 0 : i32
    %c0_i32_0 = arith.constant 0 : i32
    %c0_i32_1 = arith.constant 0 : i32
    return %c0_i32, %arg0, %c0_i32_0 : i32, i32, i32
  }
  func.func @transform_1(%arg0: i32) -> (i32, i32, i32) {
    %c0_i32 = arith.constant 0 : i32
    %c0_i32_0 = arith.constant 0 : i32
    %c0_i32_1 = arith.constant 0 : i32
    return %c0_i32, %arg0, %c0_i32_0 : i32, i32, i32
  }
  func.func @transform_2(%arg0: i32) -> (i32, i32) {
    %c0_i32 = arith.constant 0 : i32
    %c0_i32_0 = arith.constant 0 : i32
    %c0_i32_1 = arith.constant 0 : i32
    return %c0_i32, %c0_i32_0 : i32, i32
  }
  func.func @transform_3(%arg0: i32) -> (i32, i32) {
    %c0_i32 = arith.constant 0 : i32
    %c0_i32_0 = arith.constant 0 : i32
    %c0_i32_1 = arith.constant 0 : i32
    return %c0_i32, %c0_i32_0 : i32, i32
  }
  func.func @transform_4(%arg0: i32) -> (i32, i32, i32) {
    %c0_i32 = arith.constant 0 : i32
    %c0_i32_0 = arith.constant 0 : i32
    %c0_i32_1 = arith.constant 0 : i32
    %c0_i32_2 = arith.constant 0 : i32
    return %c0_i32, %c0_i32_0, %c0_i32_1 : i32, i32, i32
  }
  func.func @transform_5(%arg0: i32) -> (i32, i32) {
    %c0_i32 = arith.constant 0 : i32
    %c0_i32_0 = arith.constant 0 : i32
    %c0_i32_1 = arith.constant 0 : i32
    return %c0_i32, %c0_i32_0 : i32, i32
  }
  func.func @transform_6(%arg0: i32) -> (i32, i32) {
    %c0_i32 = arith.constant 0 : i32
    %c0_i32_0 = arith.constant 0 : i32
    %c0_i32_1 = arith.constant 0 : i32
    return %c0_i32, %c0_i32_0 : i32, i32
  }
  func.func @transform_7(%arg0: i32) -> (i32, i32) {
    %c0_i32 = arith.constant 0 : i32
    %c0_i32_0 = arith.constant 0 : i32
    %c0_i32_1 = arith.constant 0 : i32
    return %c0_i32, %c0_i32_0 : i32, i32
  }
  func.func @transform_8(%arg0: i32) -> (i32, i32) {
    %c0_i32 = arith.constant 0 : i32
    %c0_i32_0 = arith.constant 0 : i32
    %c0_i32_1 = arith.constant 0 : i32
    return %c0_i32, %c0_i32_0 : i32, i32
  }
  func.func @transform_9(%arg0: i32) -> (i32, i32) {
    %c0_i32 = arith.constant 0 : i32
    %c0_i32_0 = arith.constant 0 : i32
    %c0_i32_1 = arith.constant 0 : i32
    return %c0_i32, %c0_i32_0 : i32, i32
  }
  func.func @transform_10(%arg0: i32) -> (i32, i32) {
    %c0_i32 = arith.constant 0 : i32
    %c0_i32_0 = arith.constant 0 : i32
    %c0_i32_1 = arith.constant 0 : i32
    return %c0_i32, %c0_i32_0 : i32, i32
  }
  func.func @transform_11(%arg0: i32) -> (i32, i32) {
    %c0_i32 = arith.constant 0 : i32
    %c0_i32_0 = arith.constant 0 : i32
    %c0_i32_1 = arith.constant 0 : i32
    return %c0_i32, %c0_i32_0 : i32, i32
  }
  func.func @transform_12(%arg0: i32) -> (i32, i32) {
    %c0_i32 = arith.constant 0 : i32
    %c0_i32_0 = arith.constant 0 : i32
    return %arg0, %c0_i32 : i32, i32
  }
}

</mosaic_0001>

<llo_original>
// kernel: mcnn_forward.1
$region0: #{mcnn_forward.1}
  #allocation0 [shape = 'u32[]', space=smem, size = 0x4, offset = 0x4, fixed_abs, tag = 'smem constant byte address 0x4 - core index']
  #allocation1 [shape = 'u32[144,128]{1,0:T(1,128)}', space=vmem, size = 0x12000, scoped, tag = 'internal scratch']
  %s0 = inlined_call_operand.vmem [shape: s32[3,8,1], index: 0, kind: input, shape index: {}]
  %s1 = inlined_call_operand.vmem [shape: bf16[3,8,1280], index: 1, kind: input, shape index: {}]
  %s2 = inlined_call_operand.hbm [shape: bf16[128,512], index: 2, kind: input, shape index: {}]
  %s3 = inlined_call_operand.hbm [shape: bf16[1280,512], index: 3, kind: input, shape index: {}]
  %s4 = inlined_call_operand.vmem [shape: bf16[3,512,32], index: 4, kind: input, shape index: {}]
  %s5 = inlined_call_operand.hbm [shape: f32[1,32], index: 5, kind: input, shape index: {}]
  %s6 = inlined_call_operand.hbm [shape: bf16[32,96], index: 6, kind: input, shape index: {}]
  %s7 = inlined_call_operand.hbm [shape: f32[1,96], index: 7, kind: input, shape index: {}]
  %s8 = inlined_call_operand.vmem [shape: bf16[96,32], index: 8, kind: input, shape index: {}]
  %s9 = inlined_call_operand.hbm [shape: f32[1,32], index: 9, kind: input, shape index: {}]
  %s10 = inlined_call_operand.hbm [shape: bf16[32,128], index: 10, kind: input, shape index: {}]
  %s11 = inlined_call_operand.hbm [shape: f32[1,128], index: 11, kind: input, shape index: {}]
  %s12 = inlined_call_operand.vmem [shape: f32[8,128], index: 12, kind: output, shape index: {}]
  %s13 = sld [smem:[#allocation0]]
  $region90: #{mcnn_forward.1} parent=0
    _
  %s15 = ssub.s32 1, %s13
  %s16 = scalar_select 0, %s15, %s13
  $region1: #{mcnn_forward.1} parent=0
    #allocation2 [shape = 'u8[131072]{0}', space=vmem, size = 0x20000, scoped, tag = 'input window, operand 2, single buffered']
    #allocation3 [shape = 's32[1]{0}', space=sflag, size = 0x4, scoped, tag = 'scoped memory for mcnn_forward.1']
    #allocation4 [shape = 'u8[1310720]{0}', space=vmem, size = 0x140000, scoped, tag = 'input window, operand 3, single buffered']
    #allocation5 [shape = 's32[1]{0}', space=sflag, size = 0x4, scoped, tag = 'scoped memory for mcnn_forward.1']
    #allocation6 [shape = 'u8[512]{0}', space=vmem, size = 0x400, scoped, tag = 'input window, operand 5, single buffered']
    #allocation7 [shape = 'u8[8192]{0}', space=vmem, size = 0x2000, scoped, tag = 'input window, operand 6, single buffered']
    #allocation8 [shape = 's32[1]{0}', space=sflag, size = 0x4, scoped, tag = 'scoped memory for mcnn_forward.1']
    #allocation9 [shape = 'u8[512]{0}', space=vmem, size = 0x400, scoped, tag = 'input window, operand 7, single buffered']
    #allocation10 [shape = 'u8[512]{0}', space=vmem, size = 0x400, scoped, tag = 'input window, operand 9, single buffered']
    #allocation11 [shape = 's32[1]{0}', space=sflag, size = 0x4, scoped, tag = 'scoped memory for mcnn_forward.1']
    #allocation12 [shape = 'u8[8192]{0}', space=vmem, size = 0x2000, scoped, tag = 'input window, operand 10, single buffered']
    #allocation13 [shape = 'u8[512]{0}', space=vmem, size = 0x400, scoped, tag = 'input window, operand 11, single buffered']
    #allocation14 [shape = 's32[1]{0}', space=sflag, size = 0x4, scoped, tag = 'scoped memory for mcnn_forward.1']
    %17 = vsyncpa [#allocation3], 0
    %18 = vsyncpa [#allocation5], 0
    %19 = vsyncpa [#allocation8], 0
    %20 = vsyncpa [#allocation11], 0
    %21 = vsyncpa [#allocation14], 0
    // Predicated region
    $region2: #{mcnn_forward.1} parent=1 // pred_check
      _
    $region3: #{mcnn_forward.1} parent=1 // pred_check_branch
      %23 = sbr.rel (0) target = $region5
    $region4: #{mcnn_forward.1} parent=1 // pred_region
      _
    $region5: #{mcnn_forward.1} parent=1 // pred_fallthru
      _
    // Predicated region
    $region6: #{mcnn_forward.1} parent=1 // pred_check
      _
    $region7: #{mcnn_forward.1} parent=1 // pred_check_branch
      %25 = sbr.rel (0) target = $region9
    $region8: #{mcnn_forward.1} parent=1 // pred_region
      _
    $region9: #{mcnn_forward.1} parent=1 // pred_fallthru
      _
    // Predicated region
    $region10: #{mcnn_forward.1} parent=1 // pred_check
      _
    $region11: #{mcnn_forward.1} parent=1 // pred_check_branch
      %27 = sbr.rel (0) target = $region13
    $region12: #{mcnn_forward.1} parent=1 // pred_region
      %s29 = ssub.s32 4096, 4096
      %30 = vsyncadd [#allocation3], %s29
      %s31 = sshll.u32 [#allocation2], 4
      %s32 = int_to_ptr.vmem [resolvable:$true] %s31
      %37 = dma.hbm_to_vmem [thread:$0]  %s2, 4096, %s32, [#allocation3], 256, 256, 16
    $region13: #{mcnn_forward.1} parent=1 // pred_fallthru
      _
    // Predicated region
    $region14: #{mcnn_forward.1} parent=1 // pred_check
      _
    $region15: #{mcnn_forward.1} parent=1 // pred_check_branch
      %39 = sbr.rel (0) target = $region17
    $region16: #{mcnn_forward.1} parent=1 // pred_region
      %s41 = ssub.s32 40960, 40960
      %42 = vsyncadd [#allocation5], %s41
      %s43 = sshll.u32 [#allocation4], 4
      %s44 = int_to_ptr.vmem [resolvable:$true] %s43
      %49 = dma.hbm_to_vmem [thread:$0]  %s3, 40960, %s44, [#allocation5], 256, 256, 16
    $region17: #{mcnn_forward.1} parent=1 // pred_fallthru
      _
    // Predicated region
    $region18: #{mcnn_forward.1} parent=1 // pred_check
      _
    $region19: #{mcnn_forward.1} parent=1 // pred_check_branch
      %51 = sbr.rel (0) target = $region21
    $region20: #{mcnn_forward.1} parent=1 // pred_region
      _
    $region21: #{mcnn_forward.1} parent=1 // pred_fallthru
      _
    // Predicated region
    $region22: #{mcnn_forward.1} parent=1 // pred_check
      _
    $region23: #{mcnn_forward.1} parent=1 // pred_check_branch
      %53 = sbr.rel (0) target = $region25
    $region24: #{mcnn_forward.1} parent=1 // pred_region
      %s55 = ssub.s32 16, 16
      %56 = vsyncadd [#allocation5], %s55
      %s58 = sshll.u32 [#allocation6], 4
      %s59 = int_to_ptr.vmem [resolvable:$true] %s58
      %61 = dma.hbm_to_vmem [thread:$0]  %s5, 16, %s59, [#allocation5]
    $region25: #{mcnn_forward.1} parent=1 // pred_fallthru
      _
    // Predicated region
    $region26: #{mcnn_forward.1} parent=1 // pred_check
      _
    $region27: #{mcnn_forward.1} parent=1 // pred_check_branch
      %63 = sbr.rel (0) target = $region29
    $region28: #{mcnn_forward.1} parent=1 // pred_region
      %s65 = ssub.s32 256, 256
      %66 = vsyncadd [#allocation8], %s65
      %s67 = sshll.u32 [#allocation7], 4
      %s68 = int_to_ptr.vmem [resolvable:$true] %s67
      %73 = dma.hbm_to_vmem [thread:$0]  %s6, 256, %s68, [#allocation8], 64, 64, 4
    $region29: #{mcnn_forward.1} parent=1 // pred_fallthru
      _
    // Predicated region
    $region30: #{mcnn_forward.1} parent=1 // pred_check
      _
    $region31: #{mcnn_forward.1} parent=1 // pred_check_branch
      %75 = sbr.rel (0) target = $region33
    $region32: #{mcnn_forward.1} parent=1 // pred_region
      %s77 = ssub.s32 16, 16
      %78 = vsyncadd [#allocation8], %s77
      %s80 = sshll.u32 [#allocation9], 4
      %s81 = int_to_ptr.vmem [resolvable:$true] %s80
      %83 = dma.hbm_to_vmem [thread:$0]  %s7, 16, %s81, [#allocation8]
    $region33: #{mcnn_forward.1} parent=1 // pred_fallthru
      _
    // Predicated region
    $region34: #{mcnn_forward.1} parent=1 // pred_check
      _
    $region35: #{mcnn_forward.1} parent=1 // pred_check_branch
      %85 = sbr.rel (0) target = $region37
    $region36: #{mcnn_forward.1} parent=1 // pred_region
      _
    $region37: #{mcnn_forward.1} parent=1 // pred_fallthru
      _
    // Predicated region
    $region38: #{mcnn_forward.1} parent=1 // pred_check
      _
    $region39: #{mcnn_forward.1} parent=1 // pred_check_branch
      %87 = sbr.rel (0) target = $region41
    $region40: #{mcnn_forward.1} parent=1 // pred_region
      %s89 = ssub.s32 16, 16
      %90 = vsyncadd [#allocation11], %s89
      %s92 = sshll.u32 [#allocation10], 4
      %s93 = int_to_ptr.vmem [resolvable:$true] %s92
      %95 = dma.hbm_to_vmem [thread:$0]  %s9, 16, %s93, [#allocation11]
    $region41: #{mcnn_forward.1} parent=1 // pred_fallthru
      _
    // Predicated region
    $region42: #{mcnn_forward.1} parent=1 // pred_check
      _
    $region43: #{mcnn_forward.1} parent=1 // pred_check_branch
      %97 = sbr.rel (0) target = $region45
    $region44: #{mcnn_forward.1} parent=1 // pred_region
      %s99 = ssub.s32 256, 256
      %100 = vsyncadd [#allocation11], %s99
      %s101 = sshll.u32 [#allocation12], 4
      %s102 = int_to_ptr.vmem [resolvable:$true] %s101
      %107 = dma.hbm_to_vmem [thread:$0]  %s10, 256, %s102, [#allocation11], 64, 64, 4
    $region45: #{mcnn_forward.1} parent=1 // pred_fallthru
      _
    // Predicated region
    $region46: #{mcnn_forward.1} parent=1 // pred_check
      _
    $region47: #{mcnn_forward.1} parent=1 // pred_check_branch
      %109 = sbr.rel (0) target = $region49
    $region48: #{mcnn_forward.1} parent=1 // pred_region
      %s111 = ssub.s32 16, 16
      %112 = vsyncadd [#allocation14], %s111
      %s114 = sshll.u32 [#allocation13], 4
      %s115 = int_to_ptr.vmem [resolvable:$true] %s114
      %117 = dma.hbm_to_vmem [thread:$0]  %s11, 16, %s115, [#allocation14]
    $region49: #{mcnn_forward.1} parent=1 // pred_fallthru
      _
    // Predicated region
    $region50: #{mcnn_forward.1} parent=1 // pred_check
      _
    $region51: #{mcnn_forward.1} parent=1 // pred_check_branch
      %119 = sbr.rel (0) target = $region53
    $region52: #{mcnn_forward.1} parent=1 // pred_region
      %120 = dma.done [#allocation3], 4096
    $region53: #{mcnn_forward.1} parent=1 // pred_fallthru
      _
    // Predicated region
    $region54: #{mcnn_forward.1} parent=1 // pred_check
      _
    $region55: #{mcnn_forward.1} parent=1 // pred_check_branch
      %122 = sbr.rel (0) target = $region57
    $region56: #{mcnn_forward.1} parent=1 // pred_region
      %123 = dma.done [#allocation5], 40960
    $region57: #{mcnn_forward.1} parent=1 // pred_fallthru
      _
    // Predicated region
    $region58: #{mcnn_forward.1} parent=1 // pred_check
      _
    $region59: #{mcnn_forward.1} parent=1 // pred_check_branch
      %125 = sbr.rel (0) target = $region61
    $region60: #{mcnn_forward.1} parent=1 // pred_region
      %126 = dma.done [#allocation5], 16
    $region61: #{mcnn_forward.1} parent=1 // pred_fallthru
      _
    // Predicated region
    $region62: #{mcnn_forward.1} parent=1 // pred_check
      _
    $region63: #{mcnn_forward.1} parent=1 // pred_check_branch
      %128 = sbr.rel (0) target = $region65
    $region64: #{mcnn_forward.1} parent=1 // pred_region
      %129 = dma.done [#allocation8], 256
    $region65: #{mcnn_forward.1} parent=1 // pred_fallthru
      _
    // Predicated region
    $region66: #{mcnn_forward.1} parent=1 // pred_check
      _
    $region67: #{mcnn_forward.1} parent=1 // pred_check_branch
      %131 = sbr.rel (0) target = $region69
    $region68: #{mcnn_forward.1} parent=1 // pred_region
      %132 = dma.done [#allocation8], 16
    $region69: #{mcnn_forward.1} parent=1 // pred_fallthru
      _
    // Predicated region
    $region70: #{mcnn_forward.1} parent=1 // pred_check
      _
    $region71: #{mcnn_forward.1} parent=1 // pred_check_branch
      %134 = sbr.rel (0) target = $region73
    $region72: #{mcnn_forward.1} parent=1 // pred_region
      %135 = dma.done [#allocation11], 16
    $region73: #{mcnn_forward.1} parent=1 // pred_fallthru
      _
    // Predicated region
    $region74: #{mcnn_forward.1} parent=1 // pred_check
      _
    $region75: #{mcnn_forward.1} parent=1 // pred_check_branch
      %137 = sbr.rel (0) target = $region77
    $region76: #{mcnn_forward.1} parent=1 // pred_region
      %138 = dma.done [#allocation11], 256
    $region77: #{mcnn_forward.1} parent=1 // pred_fallthru
      _
    // Predicated region
    $region78: #{mcnn_forward.1} parent=1 // pred_check
      _
    $region79: #{mcnn_forward.1} parent=1 // pred_check_branch
      %140 = sbr.rel (0) target = $region81
    $region80: #{mcnn_forward.1} parent=1 // pred_region
      %141 = dma.done [#allocation14], 16
    $region81: #{mcnn_forward.1} parent=1 // pred_fallthru
      _
    %v143 = vld [vmem:[%s0] sm:$0xff]
    %v144 = vlaneseq
    %v145 = vand.u32 %v144, 127
    %146 = vset.pattern.permute.xlu0 0
    %147 = vperm.xlu0 %146, %v143
    %v148 = vpop.permute.xlu0 %147
    %vm149 = vcmp.eq.s32.totalorder %v148, %v145
    %v150 = vsel %vm149, 1, 0
    %v151 = vcvt.s32.f32 %v150
    %v152 = vpack.c.bf16 %v151, %v151
    %v153 = vld [vmem:[#allocation2] sm:$0xff]
    %v154 = vld [vmem:[#allocation2 + $0x8] sm:$0xff]
    %v155 = vld [vmem:[#allocation2 + $0x10] sm:$0xff]
    %v156 = vld [vmem:[#allocation2 + $0x18] sm:$0xff]
    %v157 = vld [vmem:[#allocation2 + $0x20] sm:$0xff]
    %v158 = vld [vmem:[#allocation2 + $0x28] sm:$0xff]
    %v159 = vld [vmem:[#allocation2 + $0x30] sm:$0xff]
    %v160 = vld [vmem:[#allocation2 + $0x38] sm:$0xff]
    %v161 = vld [vmem:[#allocation2 + $0x40] sm:$0xff]
    %v162 = vld [vmem:[#allocation2 + $0x48] sm:$0xff]
    %v163 = vld [vmem:[#allocation2 + $0x50] sm:$0xff]
    %v164 = vld [vmem:[#allocation2 + $0x58] sm:$0xff]
    %v165 = vld [vmem:[#allocation2 + $0x60] sm:$0xff]
    %v166 = vld [vmem:[#allocation2 + $0x68] sm:$0xff]
    %v167 = vld [vmem:[#allocation2 + $0x70] sm:$0xff]
    %v168 = vld [vmem:[#allocation2 + $0x78] sm:$0xff]
    %v169 = vld [vmem:[#allocation2 + $0x80] sm:$0xff]
    %v170 = vld [vmem:[#allocation2 + $0x88] sm:$0xff]
    %v171 = vld [vmem:[#allocation2 + $0x90] sm:$0xff]
    %v172 = vld [vmem:[#allocation2 + $0x98] sm:$0xff]
    %v173 = vld [vmem:[#allocation2 + $0xa0] sm:$0xff]
    %v174 = vld [vmem:[#allocation2 + $0xa8] sm:$0xff]
    %v175 = vld [vmem:[#allocation2 + $0xb0] sm:$0xff]
    %v176 = vld [vmem:[#allocation2 + $0xb8] sm:$0xff]
    %v177 = vld [vmem:[#allocation2 + $0xc0] sm:$0xff]
    %v178 = vld [vmem:[#allocation2 + $0xc8] sm:$0xff]
    %v179 = vld [vmem:[#allocation2 + $0xd0] sm:$0xff]
    %v180 = vld [vmem:[#allocation2 + $0xd8] sm:$0xff]
    %v181 = vld [vmem:[#allocation2 + $0xe0] sm:$0xff]
    %v182 = vld [vmem:[#allocation2 + $0xe8] sm:$0xff]
    %v183 = vld [vmem:[#allocation2 + $0xf0] sm:$0xff]
    %v184 = vld [vmem:[#allocation2 + $0xf8] sm:$0xff]
    %v185 = vld [vmem:[%s1] sm:$0xff]
    %v186 = vld [vmem:[%s1 + $0x8] sm:$0xff]
    %v187 = vld [vmem:[%s1 + $0x10] sm:$0xff]
    %v188 = vld [vmem:[%s1 + $0x18] sm:$0xff]
    %v189 = vld [vmem:[%s1 + $0x20] sm:$0xff]
    %v190 = vld [vmem:[#allocation4] sm:$0xff]
    %v191 = vld [vmem:[#allocation4 + $0x8] sm:$0xff]
    %v192 = vld [vmem:[#allocation4 + $0x10] sm:$0xff]
    %v193 = vld [vmem:[#allocation4 + $0x18] sm:$0xff]
    %v194 = vld [vmem:[#allocation4 + $0x20] sm:$0xff]
    %v195 = vld [vmem:[#allocation4 + $0x28] sm:$0xff]
    %v196 = vld [vmem:[#allocation4 + $0x30] sm:$0xff]
    %v197 = vld [vmem:[#allocation4 + $0x38] sm:$0xff]
    %v198 = vld [vmem:[#allocation4 + $0x40] sm:$0xff]
    %v199 = vld [vmem:[#allocation4 + $0x48] sm:$0xff]
    %v200 = vld [vmem:[#allocation4 + $0x50] sm:$0xff]
    %v201 = vld [vmem:[#allocation4 + $0x58] sm:$0xff]
    %v202 = vld [vmem:[#allocation4 + $0x60] sm:$0xff]
    %v203 = vld [vmem:[#allocation4 + $0x68] sm:$0xff]
    %v204 = vld [vmem:[#allocation4 + $0x70] sm:$0xff]
    %v205 = vld [vmem:[#allocation4 + $0x78] sm:$0xff]
    %v206 = vld [vmem:[#allocation4 + $0x80] sm:$0xff]
    %v207 = vld [vmem:[#allocation4 + $0x88] sm:$0xff]
    %v208 = vld [vmem:[#allocation4 + $0x90] sm:$0xff]
    %v209 = vld [vmem:[#allocation4 + $0x98] sm:$0xff]
    %v210 = vld [vmem:[#allocation4 + $0xa0] sm:$0xff]
    %v211 = vld [vmem:[#allocation4 + $0xa8] sm:$0xff]
    %v212 = vld [vmem:[#allocation4 + $0xb0] sm:$0xff]
    %v213 = vld [vmem:[#allocation4 + $0xb8] sm:$0xff]
    %v214 = vld [vmem:[#allocation4 + $0xc0] sm:$0xff]
    %v215 = vld [vmem:[#allocation4 + $0xc8] sm:$0xff]
    %v216 = vld [vmem:[#allocation4 + $0xd0] sm:$0xff]
    %v217 = vld [vmem:[#allocation4 + $0xd8] sm:$0xff]
    %v218 = vld [vmem:[#allocation4 + $0xe0] sm:$0xff]
    %v219 = vld [vmem:[#allocation4 + $0xe8] sm:$0xff]
    %v220 = vld [vmem:[#allocation4 + $0xf0] sm:$0xff]
    %v221 = vld [vmem:[#allocation4 + $0xf8] sm:$0xff]
    %v222 = vld [vmem:[#allocation4 + $0x100] sm:$0xff]
    %v223 = vld [vmem:[#allocation4 + $0x108] sm:$0xff]
    %v224 = vld [vmem:[#allocation4 + $0x110] sm:$0xff]
    %v225 = vld [vmem:[#allocation4 + $0x118] sm:$0xff]
    %v226 = vld [vmem:[#allocation4 + $0x120] sm:$0xff]
    %v227 = vld [vmem:[#allocation4 + $0x128] sm:$0xff]
    %v228 = vld [vmem:[#allocation4 + $0x130] sm:$0xff]
    %v229 = vld [vmem:[#allocation4 + $0x138] sm:$0xff]
    %v230 = vld [vmem:[#allocation4 + $0x140] sm:$0xff]
    %v231 = vld [vmem:[#allocation4 + $0x148] sm:$0xff]
    %v232 = vld [vmem:[#allocation4 + $0x150] sm:$0xff]
    %v233 = vld [vmem:[#allocation4 + $0x158] sm:$0xff]
    %v234 = vld [vmem:[#allocation4 + $0x160] sm:$0xff]
    %v235 = vld [vmem:[#allocation4 + $0x168] sm:$0xff]
    %v236 = vld [vmem:[#allocation4 + $0x170] sm:$0xff]
    %v237 = vld [vmem:[#allocation4 + $0x178] sm:$0xff]
    %v238 = vld [vmem:[#allocation4 + $0x180] sm:$0xff]
    %v239 = vld [vmem:[#allocation4 + $0x188] sm:$0xff]
    %v240 = vld [vmem:[#allocation4 + $0x190] sm:$0xff]
    %v241 = vld [vmem:[#allocation4 + $0x198] sm:$0xff]
    %v242 = vld [vmem:[#allocation4 + $0x1a0] sm:$0xff]
    %v243 = vld [vmem:[#allocation4 + $0x1a8] sm:$0xff]
    %v244 = vld [vmem:[#allocation4 + $0x1b0] sm:$0xff]
    %v245 = vld [vmem:[#allocation4 + $0x1b8] sm:$0xff]
    %v246 = vld [vmem:[#allocation4 + $0x1c0] sm:$0xff]
    %v247 = vld [vmem:[#allocation4 + $0x1c8] sm:$0xff]
    %v248 = vld [vmem:[#allocation4 + $0x1d0] sm:$0xff]
    %v249 = vld [vmem:[#allocation4 + $0x1d8] sm:$0xff]
    %v250 = vld [vmem:[#allocation4 + $0x1e0] sm:$0xff]
    %v251 = vld [vmem:[#allocation4 + $0x1e8] sm:$0xff]
    %v252 = vld [vmem:[#allocation4 + $0x1f0] sm:$0xff]
    %v253 = vld [vmem:[#allocation4 + $0x1f8] sm:$0xff]
    %v254 = vld [vmem:[#allocation4 + $0x200] sm:$0xff]
    %v255 = vld [vmem:[#allocation4 + $0x208] sm:$0xff]
    %v256 = vld [vmem:[#allocation4 + $0x210] sm:$0xff]
    %v257 = vld [vmem:[#allocation4 + $0x218] sm:$0xff]
    %v258 = vld [vmem:[#allocation4 + $0x220] sm:$0xff]
    %v259 = vld [vmem:[#allocation4 + $0x228] sm:$0xff]
    %v260 = vld [vmem:[#allocation4 + $0x230] sm:$0xff]
    %v261 = vld [vmem:[#allocation4 + $0x238] sm:$0xff]
    %v262 = vld [vmem:[#allocation4 + $0x240] sm:$0xff]
    %v263 = vld [vmem:[#allocation4 + $0x248] sm:$0xff]
    %v264 = vld [vmem:[#allocation4 + $0x250] sm:$0xff]
    %v265 = vld [vmem:[#allocation4 + $0x258] sm:$0xff]
    %v266 = vld [vmem:[#allocation4 + $0x260] sm:$0xff]
    %v267 = vld [vmem:[#allocation4 + $0x268] sm:$0xff]
    %v268 = vld [vmem:[#allocation4 + $0x270] sm:$0xff]
    %v269 = vld [vmem:[#allocation4 + $0x278] sm:$0xff]
    %v270 = vld [vmem:[#allocation4 + $0x280] sm:$0xff]
    %v271 = vld [vmem:[#allocation4 + $0x288] sm:$0xff]
    %v272 = vld [vmem:[#allocation4 + $0x290] sm:$0xff]
    %v273 = vld [vmem:[#allocation4 + $0x298] sm:$0xff]
    %v274 = vld [vmem:[#allocation4 + $0x2a0] sm:$0xff]
    %v275 = vld [vmem:[#allocation4 + $0x2a8] sm:$0xff]
    %v276 = vld [vmem:[#allocation4 + $0x2b0] sm:$0xff]
    %v277 = vld [vmem:[#allocation4 + $0x2b8] sm:$0xff]
    %v278 = vld [vmem:[#allocation4 + $0x2c0] sm:$0xff]
    %v279 = vld [vmem:[#allocation4 + $0x2c8] sm:$0xff]
    %v280 = vld [vmem:[#allocation4 + $0x2d0] sm:$0xff]
    %v281 = vld [vmem:[#allocation4 + $0x2d8] sm:$0xff]
    %v282 = vld [vmem:[#allocation4 + $0x2e0] sm:$0xff]
    %v283 = vld [vmem:[#allocation4 + $0x2e8] sm:$0xff]
    %v284 = vld [vmem:[#allocation4 + $0x2f0] sm:$0xff]
    %v285 = vld [vmem:[#allocation4 + $0x2f8] sm:$0xff]
    %v286 = vld [vmem:[#allocation4 + $0x300] sm:$0xff]
    %v287 = vld [vmem:[#allocation4 + $0x308] sm:$0xff]
    %v288 = vld [vmem:[#allocation4 + $0x310] sm:$0xff]
    %v289 = vld [vmem:[#allocation4 + $0x318] sm:$0xff]
    %v290 = vld [vmem:[#allocation4 + $0x320] sm:$0xff]
    %v291 = vld [vmem:[#allocation4 + $0x328] sm:$0xff]
    %v292 = vld [vmem:[#allocation4 + $0x330] sm:$0xff]
    %v293 = vld [vmem:[#allocation4 + $0x338] sm:$0xff]
    %v294 = vld [vmem:[#allocation4 + $0x340] sm:$0xff]
    %v295 = vld [vmem:[#allocation4 + $0x348] sm:$0xff]
    %v296 = vld [vmem:[#allocation4 + $0x350] sm:$0xff]
    %v297 = vld [vmem:[#allocation4 + $0x358] sm:$0xff]
    %v298 = vld [vmem:[#allocation4 + $0x360] sm:$0xff]
    %v299 = vld [vmem:[#allocation4 + $0x368] sm:$0xff]
    %v300 = vld [vmem:[#allocation4 + $0x370] sm:$0xff]
    %v301 = vld [vmem:[#allocation4 + $0x378] sm:$0xff]
    %v302 = vld [vmem:[#allocation4 + $0x380] sm:$0xff]
    %v303 = vld [vmem:[#allocation4 + $0x388] sm:$0xff]
    %v304 = vld [vmem:[#allocation4 + $0x390] sm:$0xff]
    %v305 = vld [vmem:[#allocation4 + $0x398] sm:$0xff]
    %v306 = vld [vmem:[#allocation4 + $0x3a0] sm:$0xff]
    %v307 = vld [vmem:[#allocation4 + $0x3a8] sm:$0xff]
    %v308 = vld [vmem:[#allocation4 + $0x3b0] sm:$0xff]
    %v309 = vld [vmem:[#allocation4 + $0x3b8] sm:$0xff]
    %v310 = vld [vmem:[#allocation4 + $0x3c0] sm:$0xff]
    %v311 = vld [vmem:[#allocation4 + $0x3c8] sm:$0xff]
    %v312 = vld [vmem:[#allocation4 + $0x3d0] sm:$0xff]
    %v313 = vld [vmem:[#allocation4 + $0x3d8] sm:$0xff]
    %v314 = vld [vmem:[#allocation4 + $0x3e0] sm:$0xff]
    %v315 = vld [vmem:[#allocation4 + $0x3e8] sm:$0xff]
    %v316 = vld [vmem:[#allocation4 + $0x3f0] sm:$0xff]
    %v317 = vld [vmem:[#allocation4 + $0x3f8] sm:$0xff]
    %v318 = vld [vmem:[#allocation4 + $0x400] sm:$0xff]
    %v319 = vld [vmem:[#allocation4 + $0x408] sm:$0xff]
    %v320 = vld [vmem:[#allocation4 + $0x410] sm:$0xff]
    %v321 = vld [vmem:[#allocation4 + $0x418] sm:$0xff]
    %v322 = vld [vmem:[#allocation4 + $0x420] sm:$0xff]
    %v323 = vld [vmem:[#allocation4 + $0x428] sm:$0xff]
    %v324 = vld [vmem:[#allocation4 + $0x430] sm:$0xff]
    %v325 = vld [vmem:[#allocation4 + $0x438] sm:$0xff]
    %v326 = vld [vmem:[#allocation4 + $0x440] sm:$0xff]
    %v327 = vld [vmem:[#allocation4 + $0x448] sm:$0xff]
    %v328 = vld [vmem:[#allocation4 + $0x450] sm:$0xff]
    %v329 = vld [vmem:[#allocation4 + $0x458] sm:$0xff]
    %v330 = vld [vmem:[#allocation4 + $0x460] sm:$0xff]
    %v331 = vld [vmem:[#allocation4 + $0x468] sm:$0xff]
    %v332 = vld [vmem:[#allocation4 + $0x470] sm:$0xff]
    %v333 = vld [vmem:[#allocation4 + $0x478] sm:$0xff]
    %v334 = vld [vmem:[#allocation4 + $0x480] sm:$0xff]
    %v335 = vld [vmem:[#allocation4 + $0x488] sm:$0xff]
    %v336 = vld [vmem:[#allocation4 + $0x490] sm:$0xff]
    %v337 = vld [vmem:[#allocation4 + $0x498] sm:$0xff]
    %v338 = vld [vmem:[#allocation4 + $0x4a0] sm:$0xff]
    %v339 = vld [vmem:[#allocation4 + $0x4a8] sm:$0xff]
    %v340 = vld [vmem:[#allocation4 + $0x4b0] sm:$0xff]
    %v341 = vld [vmem:[#allocation4 + $0x4b8] sm:$0xff]
    %v342 = vld [vmem:[#allocation4 + $0x4c0] sm:$0xff]
    %v343 = vld [vmem:[#allocation4 + $0x4c8] sm:$0xff]
    %v344 = vld [vmem:[#allocation4 + $0x4d0] sm:$0xff]
    %v345 = vld [vmem:[#allocation4 + $0x4d8] sm:$0xff]
    %v346 = vld [vmem:[#allocation4 + $0x4e0] sm:$0xff]
    %v347 = vld [vmem:[#allocation4 + $0x4e8] sm:$0xff]
    %v348 = vld [vmem:[#allocation4 + $0x4f0] sm:$0xff]
    %v349 = vld [vmem:[#allocation4 + $0x4f8] sm:$0xff]
    %v350 = vld [vmem:[#allocation4 + $0x500] sm:$0xff]
    %v351 = vld [vmem:[#allocation4 + $0x508] sm:$0xff]
    %v352 = vld [vmem:[#allocation4 + $0x510] sm:$0xff]
    %v353 = vld [vmem:[#allocation4 + $0x518] sm:$0xff]
    %v354 = vld [vmem:[#allocation4 + $0x520] sm:$0xff]
    %v355 = vld [vmem:[#allocation4 + $0x528] sm:$0xff]
    %v356 = vld [vmem:[#allocation4 + $0x530] sm:$0xff]
    %v357 = vld [vmem:[#allocation4 + $0x538] sm:$0xff]
    %v358 = vld [vmem:[#allocation4 + $0x540] sm:$0xff]
    %v359 = vld [vmem:[#allocation4 + $0x548] sm:$0xff]
    %v360 = vld [vmem:[#allocation4 + $0x550] sm:$0xff]
    %v361 = vld [vmem:[#allocation4 + $0x558] sm:$0xff]
    %v362 = vld [vmem:[#allocation4 + $0x560] sm:$0xff]
    %v363 = vld [vmem:[#allocation4 + $0x568] sm:$0xff]
    %v364 = vld [vmem:[#allocation4 + $0x570] sm:$0xff]
    %v365 = vld [vmem:[#allocation4 + $0x578] sm:$0xff]
    %v366 = vld [vmem:[#allocation4 + $0x580] sm:$0xff]
    %v367 = vld [vmem:[#allocation4 + $0x588] sm:$0xff]
    %v368 = vld [vmem:[#allocation4 + $0x590] sm:$0xff]
    %v369 = vld [vmem:[#allocation4 + $0x598] sm:$0xff]
    %v370 = vld [vmem:[#allocation4 + $0x5a0] sm:$0xff]
    %v371 = vld [vmem:[#allocation4 + $0x5a8] sm:$0xff]
    %v372 = vld [vmem:[#allocation4 + $0x5b0] sm:$0xff]
    %v373 = vld [vmem:[#allocation4 + $0x5b8] sm:$0xff]
    %v374 = vld [vmem:[#allocation4 + $0x5c0] sm:$0xff]
    %v375 = vld [vmem:[#allocation4 + $0x5c8] sm:$0xff]
    %v376 = vld [vmem:[#allocation4 + $0x5d0] sm:$0xff]
    %v377 = vld [vmem:[#allocation4 + $0x5d8] sm:$0xff]
    %v378 = vld [vmem:[#allocation4 + $0x5e0] sm:$0xff]
    %v379 = vld [vmem:[#allocation4 + $0x5e8] sm:$0xff]
    %v380 = vld [vmem:[#allocation4 + $0x5f0] sm:$0xff]
    %v381 = vld [vmem:[#allocation4 + $0x5f8] sm:$0xff]
    %v382 = vld [vmem:[#allocation4 + $0x600] sm:$0xff]
    %v383 = vld [vmem:[#allocation4 + $0x608] sm:$0xff]
    %v384 = vld [vmem:[#allocation4 + $0x610] sm:$0xff]
    %v385 = vld [vmem:[#allocation4 + $0x618] sm:$0xff]
    %v386 = vld [vmem:[#allocation4 + $0x620] sm:$0xff]
    %v387 = vld [vmem:[#allocation4 + $0x628] sm:$0xff]
    %v388 = vld [vmem:[#allocation4 + $0x630] sm:$0xff]
    %v389 = vld [vmem:[#allocation4 + $0x638] sm:$0xff]
    %v390 = vld [vmem:[#allocation4 + $0x640] sm:$0xff]
    %v391 = vld [vmem:[#allocation4 + $0x648] sm:$0xff]
    %v392 = vld [vmem:[#allocation4 + $0x650] sm:$0xff]
    %v393 = vld [vmem:[#allocation4 + $0x658] sm:$0xff]
    %v394 = vld [vmem:[#allocation4 + $0x660] sm:$0xff]
    %v395 = vld [vmem:[#allocation4 + $0x668] sm:$0xff]
    %v396 = vld [vmem:[#allocation4 + $0x670] sm:$0xff]
    %v397 = vld [vmem:[#allocation4 + $0x678] sm:$0xff]
    %v398 = vld [vmem:[#allocation4 + $0x680] sm:$0xff]
    %v399 = vld [vmem:[#allocation4 + $0x688] sm:$0xff]
    %v400 = vld [vmem:[#allocation4 + $0x690] sm:$0xff]
    %v401 = vld [vmem:[#allocation4 + $0x698] sm:$0xff]
    %v402 = vld [vmem:[#allocation4 + $0x6a0] sm:$0xff]
    %v403 = vld [vmem:[#allocation4 + $0x6a8] sm:$0xff]
    %v404 = vld [vmem:[#allocation4 + $0x6b0] sm:$0xff]
    %v405 = vld [vmem:[#allocation4 + $0x6b8] sm:$0xff]
    %v406 = vld [vmem:[#allocation4 + $0x6c0] sm:$0xff]
    %v407 = vld [vmem:[#allocation4 + $0x6c8] sm:$0xff]
    %v408 = vld [vmem:[#allocation4 + $0x6d0] sm:$0xff]
    %v409 = vld [vmem:[#allocation4 + $0x6d8] sm:$0xff]
    %v410 = vld [vmem:[#allocation4 + $0x6e0] sm:$0xff]
    %v411 = vld [vmem:[#allocation4 + $0x6e8] sm:$0xff]
    %v412 = vld [vmem:[#allocation4 + $0x6f0] sm:$0xff]
    %v413 = vld [vmem:[#allocation4 + $0x6f8] sm:$0xff]
    %v414 = vld [vmem:[#allocation4 + $0x700] sm:$0xff]
    %v415 = vld [vmem:[#allocation4 + $0x708] sm:$0xff]
    %v416 = vld [vmem:[#allocation4 + $0x710] sm:$0xff]
    %v417 = vld [vmem:[#allocation4 + $0x718] sm:$0xff]
    %v418 = vld [vmem:[#allocation4 + $0x720] sm:$0xff]
    %v419 = vld [vmem:[#allocation4 + $0x728] sm:$0xff]
    %v420 = vld [vmem:[#allocation4 + $0x730] sm:$0xff]
    %v421 = vld [vmem:[#allocation4 + $0x738] sm:$0xff]
    %v422 = vld [vmem:[#allocation4 + $0x740] sm:$0xff]
    %v423 = vld [vmem:[#allocation4 + $0x748] sm:$0xff]
    %v424 = vld [vmem:[#allocation4 + $0x750] sm:$0xff]
    %v425 = vld [vmem:[#allocation4 + $0x758] sm:$0xff]
    %v426 = vld [vmem:[#allocation4 + $0x760] sm:$0xff]
    %v427 = vld [vmem:[#allocation4 + $0x768] sm:$0xff]
    %v428 = vld [vmem:[#allocation4 + $0x770] sm:$0xff]
    %v429 = vld [vmem:[#allocation4 + $0x778] sm:$0xff]
    %v430 = vld [vmem:[#allocation4 + $0x780] sm:$0xff]
    %v431 = vld [vmem:[#allocation4 + $0x788] sm:$0xff]
    %v432 = vld [vmem:[#allocation4 + $0x790] sm:$0xff]
    %v433 = vld [vmem:[#allocation4 + $0x798] sm:$0xff]
    %v434 = vld [vmem:[#allocation4 + $0x7a0] sm:$0xff]
    %v435 = vld [vmem:[#allocation4 + $0x7a8] sm:$0xff]
    %v436 = vld [vmem:[#allocation4 + $0x7b0] sm:$0xff]
    %v437 = vld [vmem:[#allocation4 + $0x7b8] sm:$0xff]
    %v438 = vld [vmem:[#allocation4 + $0x7c0] sm:$0xff]
    %v439 = vld [vmem:[#allocation4 + $0x7c8] sm:$0xff]
    %v440 = vld [vmem:[#allocation4 + $0x7d0] sm:$0xff]
    %v441 = vld [vmem:[#allocation4 + $0x7d8] sm:$0xff]
    %v442 = vld [vmem:[#allocation4 + $0x7e0] sm:$0xff]
    %v443 = vld [vmem:[#allocation4 + $0x7e8] sm:$0xff]
    %v444 = vld [vmem:[#allocation4 + $0x7f0] sm:$0xff]
    %v445 = vld [vmem:[#allocation4 + $0x7f8] sm:$0xff]
    %v446 = vld [vmem:[#allocation4 + $0x800] sm:$0xff]
    %v447 = vld [vmem:[#allocation4 + $0x808] sm:$0xff]
    %v448 = vld [vmem:[#allocation4 + $0x810] sm:$0xff]
    %v449 = vld [vmem:[#allocation4 + $0x818] sm:$0xff]
    %v450 = vld [vmem:[#allocation4 + $0x820] sm:$0xff]
    %v451 = vld [vmem:[#allocation4 + $0x828] sm:$0xff]
    %v452 = vld [vmem:[#allocation4 + $0x830] sm:$0xff]
    %v453 = vld [vmem:[#allocation4 + $0x838] sm:$0xff]
    %v454 = vld [vmem:[#allocation4 + $0x840] sm:$0xff]
    %v455 = vld [vmem:[#allocation4 + $0x848] sm:$0xff]
    %v456 = vld [vmem:[#allocation4 + $0x850] sm:$0xff]
    %v457 = vld [vmem:[#allocation4 + $0x858] sm:$0xff]
    %v458 = vld [vmem:[#allocation4 + $0x860] sm:$0xff]
    %v459 = vld [vmem:[#allocation4 + $0x868] sm:$0xff]
    %v460 = vld [vmem:[#allocation4 + $0x870] sm:$0xff]
    %v461 = vld [vmem:[#allocation4 + $0x878] sm:$0xff]
    %v462 = vld [vmem:[#allocation4 + $0x880] sm:$0xff]
    %v463 = vld [vmem:[#allocation4 + $0x888] sm:$0xff]
    %v464 = vld [vmem:[#allocation4 + $0x890] sm:$0xff]
    %v465 = vld [vmem:[#allocation4 + $0x898] sm:$0xff]
    %v466 = vld [vmem:[#allocation4 + $0x8a0] sm:$0xff]
    %v467 = vld [vmem:[#allocation4 + $0x8a8] sm:$0xff]
    %v468 = vld [vmem:[#allocation4 + $0x8b0] sm:$0xff]
    %v469 = vld [vmem:[#allocation4 + $0x8b8] sm:$0xff]
    %v470 = vld [vmem:[#allocation4 + $0x8c0] sm:$0xff]
    %v471 = vld [vmem:[#allocation4 + $0x8c8] sm:$0xff]
    %v472 = vld [vmem:[#allocation4 + $0x8d0] sm:$0xff]
    %v473 = vld [vmem:[#allocation4 + $0x8d8] sm:$0xff]
    %v474 = vld [vmem:[#allocation4 + $0x8e0] sm:$0xff]
    %v475 = vld [vmem:[#allocation4 + $0x8e8] sm:$0xff]
    %v476 = vld [vmem:[#allocation4 + $0x8f0] sm:$0xff]
    %v477 = vld [vmem:[#allocation4 + $0x8f8] sm:$0xff]
    %v478 = vld [vmem:[#allocation4 + $0x900] sm:$0xff]
    %v479 = vld [vmem:[#allocation4 + $0x908] sm:$0xff]
    %v480 = vld [vmem:[#allocation4 + $0x910] sm:$0xff]
    %v481 = vld [vmem:[#allocation4 + $0x918] sm:$0xff]
    %v482 = vld [vmem:[#allocation4 + $0x920] sm:$0xff]
    %v483 = vld [vmem:[#allocation4 + $0x928] sm:$0xff]
    %v484 = vld [vmem:[#allocation4 + $0x930] sm:$0xff]
    %v485 = vld [vmem:[#allocation4 + $0x938] sm:$0xff]
    %v486 = vld [vmem:[#allocation4 + $0x940] sm:$0xff]
    %v487 = vld [vmem:[#allocation4 + $0x948] sm:$0xff]
    %v488 = vld [vmem:[#allocation4 + $0x950] sm:$0xff]
    %v489 = vld [vmem:[#allocation4 + $0x958] sm:$0xff]
    %v490 = vld [vmem:[#allocation4 + $0x960] sm:$0xff]
    %v491 = vld [vmem:[#allocation4 + $0x968] sm:$0xff]
    %v492 = vld [vmem:[#allocation4 + $0x970] sm:$0xff]
    %v493 = vld [vmem:[#allocation4 + $0x978] sm:$0xff]
    %v494 = vld [vmem:[#allocation4 + $0x980] sm:$0xff]
    %v495 = vld [vmem:[#allocation4 + $0x988] sm:$0xff]
    %v496 = vld [vmem:[#allocation4 + $0x990] sm:$0xff]
    %v497 = vld [vmem:[#allocation4 + $0x998] sm:$0xff]
    %v498 = vld [vmem:[#allocation4 + $0x9a0] sm:$0xff]
    %v499 = vld [vmem:[#allocation4 + $0x9a8] sm:$0xff]
    %v500 = vld [vmem:[#allocation4 + $0x9b0] sm:$0xff]
    %v501 = vld [vmem:[#allocation4 + $0x9b8] sm:$0xff]
    %v502 = vld [vmem:[#allocation4 + $0x9c0] sm:$0xff]
    %v503 = vld [vmem:[#allocation4 + $0x9c8] sm:$0xff]
    %v504 = vld [vmem:[#allocation4 + $0x9d0] sm:$0xff]
    %v505 = vld [vmem:[#allocation4 + $0x9d8] sm:$0xff]
    %v506 = vld [vmem:[#allocation4 + $0x9e0] sm:$0xff]
    %v507 = vld [vmem:[#allocation4 + $0x9e8] sm:$0xff]
    %v508 = vld [vmem:[#allocation4 + $0x9f0] sm:$0xff]
    %v509 = vld [vmem:[#allocation4 + $0x9f8] sm:$0xff]
    %v515 = vunpack.c.l.b16 %v185
    %v516 = vunpack.c.h.b16 %v185
    %v517 = vunpack.c.l.b16 %v186
    %v518 = vunpack.c.h.b16 %v186
    %v519 = vunpack.c.l.b16 %v187
    %v520 = vunpack.c.h.b16 %v187
    %v521 = vunpack.c.l.b16 %v188
    %v522 = vunpack.c.h.b16 %v188
    %v523 = vunpack.c.l.b16 %v189
    %v524 = vunpack.c.h.b16 %v189
    %v525 = vpack.c.b16 %v515, %v515
    %v526 = vpack.c.b16 %v516, %v516
    %v527 = vpack.c.b16 %v517, %v517
    %v528 = vpack.c.b16 %v518, %v518
    %v529 = vpack.c.b16 %v519, %v519
    %v530 = vpack.c.b16 %v520, %v520
    %v531 = vpack.c.b16 %v521, %v521
    %v532 = vpack.c.b16 %v522, %v522
    %v533 = vpack.c.b16 %v523, %v523
    %v534 = vpack.c.b16 %v524, %v524
    %v865 = vunpack.c.l.b16 %v190
    %v866 = vunpack.c.h.b16 %v190
    %v867 = vunpack.c.l.b16 %v191
    %v868 = vunpack.c.h.b16 %v191
    %v869 = vunpack.c.l.b16 %v192
    %v870 = vunpack.c.h.b16 %v192
    %v871 = vunpack.c.l.b16 %v193
    %v872 = vunpack.c.h.b16 %v193
    %v873 = vunpack.c.l.b16 %v194
    %v874 = vunpack.c.h.b16 %v194
    %v875 = vunpack.c.l.b16 %v195
    %v876 = vunpack.c.h.b16 %v195
    %v877 = vunpack.c.l.b16 %v196
    %v878 = vunpack.c.h.b16 %v196
    %v879 = vunpack.c.l.b16 %v197
    %v880 = vunpack.c.h.b16 %v197
    %v881 = vunpack.c.l.b16 %v198
    %v882 = vunpack.c.h.b16 %v198
    %v883 = vunpack.c.l.b16 %v199
    %v884 = vunpack.c.h.b16 %v199
    %v885 = vunpack.c.l.b16 %v200
    %v886 = vunpack.c.h.b16 %v200
    %v887 = vunpack.c.l.b16 %v201
    %v888 = vunpack.c.h.b16 %v201
    %v889 = vunpack.c.l.b16 %v202
    %v890 = vunpack.c.h.b16 %v202
    %v891 = vunpack.c.l.b16 %v203
    %v892 = vunpack.c.h.b16 %v203
    %v893 = vunpack.c.l.b16 %v204
    %v894 = vunpack.c.h.b16 %v204
    %v895 = vunpack.c.l.b16 %v205
    %v896 = vunpack.c.h.b16 %v205
    %v897 = vunpack.c.l.b16 %v206
    %v898 = vunpack.c.h.b16 %v206
    %v899 = vunpack.c.l.b16 %v207
    %v900 = vunpack.c.h.b16 %v207
    %v901 = vunpack.c.l.b16 %v208
    %v902 = vunpack.c.h.b16 %v208
    %v903 = vunpack.c.l.b16 %v209
    %v904 = vunpack.c.h.b16 %v209
    %v905 = vunpack.c.l.b16 %v210
    %v906 = vunpack.c.h.b16 %v210
    %v907 = vunpack.c.l.b16 %v211
    %v908 = vunpack.c.h.b16 %v211
    %v909 = vunpack.c.l.b16 %v212
    %v910 = vunpack.c.h.b16 %v212
    %v911 = vunpack.c.l.b16 %v213
    %v912 = vunpack.c.h.b16 %v213
    %v913 = vunpack.c.l.b16 %v214
    %v914 = vunpack.c.h.b16 %v214
    %v915 = vunpack.c.l.b16 %v215
    %v916 = vunpack.c.h.b16 %v215
    %v917 = vunpack.c.l.b16 %v216
    %v918 = vunpack.c.h.b16 %v216
    %v919 = vunpack.c.l.b16 %v217
    %v920 = vunpack.c.h.b16 %v217
    %v921 = vunpack.c.l.b16 %v218
    %v922 = vunpack.c.h.b16 %v218
    %v923 = vunpack.c.l.b16 %v219
    %v924 = vunpack.c.h.b16 %v219
    %v925 = vunpack.c.l.b16 %v220
    %v926 = vunpack.c.h.b16 %v220
    %v927 = vunpack.c.l.b16 %v221
    %v928 = vunpack.c.h.b16 %v221
    %v929 = vunpack.c.l.b16 %v222
    %v930 = vunpack.c.h.b16 %v222
    %v931 = vunpack.c.l.b16 %v223
    %v932 = vunpack.c.h.b16 %v223
    %v933 = vunpack.c.l.b16 %v224
    %v934 = vunpack.c.h.b16 %v224
    %v935 = vunpack.c.l.b16 %v225
    %v936 = vunpack.c.h.b16 %v225
    %v937 = vunpack.c.l.b16 %v226
    %v938 = vunpack.c.h.b16 %v226
    %v939 = vunpack.c.l.b16 %v227
    %v940 = vunpack.c.h.b16 %v227
    %v941 = vunpack.c.l.b16 %v228
    %v942 = vunpack.c.h.b16 %v228
    %v943 = vunpack.c.l.b16 %v229
    %v944 = vunpack.c.h.b16 %v229
    %v945 = vunpack.c.l.b16 %v230
    %v946 = vunpack.c.h.b16 %v230
    %v947 = vunpack.c.l.b16 %v231
    %v948 = vunpack.c.h.b16 %v231
    %v949 = vunpack.c.l.b16 %v232
    %v950 = vunpack.c.h.b16 %v232
    %v951 = vunpack.c.l.b16 %v233
    %v952 = vunpack.c.h.b16 %v233
    %v953 = vunpack.c.l.b16 %v234
    %v954 = vunpack.c.h.b16 %v234
    %v955 = vunpack.c.l.b16 %v235
    %v956 = vunpack.c.h.b16 %v235
    %v957 = vunpack.c.l.b16 %v236
    %v958 = vunpack.c.h.b16 %v236
    %v959 = vunpack.c.l.b16 %v237
    %v960 = vunpack.c.h.b16 %v237
    %v961 = vunpack.c.l.b16 %v238
    %v962 = vunpack.c.h.b16 %v238
    %v963 = vunpack.c.l.b16 %v239
    %v964 = vunpack.c.h.b16 %v239
    %v965 = vunpack.c.l.b16 %v240
    %v966 = vunpack.c.h.b16 %v240
    %v967 = vunpack.c.l.b16 %v241
    %v968 = vunpack.c.h.b16 %v241
    %v969 = vunpack.c.l.b16 %v242
    %v970 = vunpack.c.h.b16 %v242
    %v971 = vunpack.c.l.b16 %v243
    %v972 = vunpack.c.h.b16 %v243
    %v973 = vunpack.c.l.b16 %v244
    %v974 = vunpack.c.h.b16 %v244
    %v975 = vunpack.c.l.b16 %v245
    %v976 = vunpack.c.h.b16 %v245
    %v977 = vunpack.c.l.b16 %v246
    %v978 = vunpack.c.h.b16 %v246
    %v979 = vunpack.c.l.b16 %v247
    %v980 = vunpack.c.h.b16 %v247
    %v981 = vunpack.c.l.b16 %v248
    %v982 = vunpack.c.h.b16 %v248
    %v983 = vunpack.c.l.b16 %v249
    %v984 = vunpack.c.h.b16 %v249
    %v985 = vunpack.c.l.b16 %v250
    %v986 = vunpack.c.h.b16 %v250
    %v987 = vunpack.c.l.b16 %v251
    %v988 = vunpack.c.h.b16 %v251
    %v989 = vunpack.c.l.b16 %v252
    %v990 = vunpack.c.h.b16 %v252
    %v991 = vunpack.c.l.b16 %v253
    %v992 = vunpack.c.h.b16 %v253
    %v993 = vunpack.c.l.b16 %v254
    %v994 = vunpack.c.h.b16 %v254
    %v995 = vunpack.c.l.b16 %v255
    %v996 = vunpack.c.h.b16 %v255
    %v997 = vunpack.c.l.b16 %v256
    %v998 = vunpack.c.h.b16 %v256
    %v999 = vunpack.c.l.b16 %v257
    %v1000 = vunpack.c.h.b16 %v257
    %v1001 = vunpack.c.l.b16 %v258
    %v1002 = vunpack.c.h.b16 %v258
    %v1003 = vunpack.c.l.b16 %v259
    %v1004 = vunpack.c.h.b16 %v259
    %v1005 = vunpack.c.l.b16 %v260
    %v1006 = vunpack.c.h.b16 %v260
    %v1007 = vunpack.c.l.b16 %v261
    %v1008 = vunpack.c.h.b16 %v261
    %v1009 = vunpack.c.l.b16 %v262
    %v1010 = vunpack.c.h.b16 %v262
    %v1011 = vunpack.c.l.b16 %v263
    %v1012 = vunpack.c.h.b16 %v263
    %v1013 = vunpack.c.l.b16 %v264
    %v1014 = vunpack.c.h.b16 %v264
    %v1015 = vunpack.c.l.b16 %v265
    %v1016 = vunpack.c.h.b16 %v265
    %v1017 = vunpack.c.l.b16 %v266
    %v1018 = vunpack.c.h.b16 %v266
    %v1019 = vunpack.c.l.b16 %v267
    %v1020 = vunpack.c.h.b16 %v267
    %v1021 = vunpack.c.l.b16 %v268
    %v1022 = vunpack.c.h.b16 %v268
    %v1023 = vunpack.c.l.b16 %v269
    %v1024 = vunpack.c.h.b16 %v269
    %v1025 = vunpack.c.l.b16 %v270
    %v1026 = vunpack.c.h.b16 %v270
    %v1027 = vunpack.c.l.b16 %v271
    %v1028 = vunpack.c.h.b16 %v271
    %v1029 = vunpack.c.l.b16 %v272
    %v1030 = vunpack.c.h.b16 %v272
    %v1031 = vunpack.c.l.b16 %v273
    %v1032 = vunpack.c.h.b16 %v273
    %v1033 = vunpack.c.l.b16 %v274
    %v1034 = vunpack.c.h.b16 %v274
    %v1035 = vunpack.c.l.b16 %v275
    %v1036 = vunpack.c.h.b16 %v275
    %v1037 = vunpack.c.l.b16 %v276
    %v1038 = vunpack.c.h.b16 %v276
    %v1039 = vunpack.c.l.b16 %v277
    %v1040 = vunpack.c.h.b16 %v277
    %v1041 = vunpack.c.l.b16 %v278
    %v1042 = vunpack.c.h.b16 %v278
    %v1043 = vunpack.c.l.b16 %v279
    %v1044 = vunpack.c.h.b16 %v279
    %v1045 = vunpack.c.l.b16 %v280
    %v1046 = vunpack.c.h.b16 %v280
    %v1047 = vunpack.c.l.b16 %v281
    %v1048 = vunpack.c.h.b16 %v281
    %v1049 = vunpack.c.l.b16 %v282
    %v1050 = vunpack.c.h.b16 %v282
    %v1051 = vunpack.c.l.b16 %v283
    %v1052 = vunpack.c.h.b16 %v283
    %v1053 = vunpack.c.l.b16 %v284
    %v1054 = vunpack.c.h.b16 %v284
    %v1055 = vunpack.c.l.b16 %v285
    %v1056 = vunpack.c.h.b16 %v285
    %v1057 = vunpack.c.l.b16 %v286
    %v1058 = vunpack.c.h.b16 %v286
    %v1059 = vunpack.c.l.b16 %v287
    %v1060 = vunpack.c.h.b16 %v287
    %v1061 = vunpack.c.l.b16 %v288
    %v1062 = vunpack.c.h.b16 %v288
    %v1063 = vunpack.c.l.b16 %v289
    %v1064 = vunpack.c.h.b16 %v289
    %v1065 = vunpack.c.l.b16 %v290
    %v1066 = vunpack.c.h.b16 %v290
    %v1067 = vunpack.c.l.b16 %v291
    %v1068 = vunpack.c.h.b16 %v291
    %v1069 = vunpack.c.l.b16 %v292
    %v1070 = vunpack.c.h.b16 %v292
    %v1071 = vunpack.c.l.b16 %v293
    %v1072 = vunpack.c.h.b16 %v293
    %v1073 = vunpack.c.l.b16 %v294
    %v1074 = vunpack.c.h.b16 %v294
    %v1075 = vunpack.c.l.b16 %v295
    %v1076 = vunpack.c.h.b16 %v295
    %v1077 = vunpack.c.l.b16 %v296
    %v1078 = vunpack.c.h.b16 %v296
    %v1079 = vunpack.c.l.b16 %v297
    %v1080 = vunpack.c.h.b16 %v297
    %v1081 = vunpack.c.l.b16 %v298
    %v1082 = vunpack.c.h.b16 %v298
    %v1083 = vunpack.c.l.b16 %v299
    %v1084 = vunpack.c.h.b16 %v299
    %v1085 = vunpack.c.l.b16 %v300
    %v1086 = vunpack.c.h.b16 %v300
    %v1087 = vunpack.c.l.b16 %v301
    %v1088 = vunpack.c.h.b16 %v301
    %v1089 = vunpack.c.l.b16 %v302
    %v1090 = vunpack.c.h.b16 %v302
    %v1091 = vunpack.c.l.b16 %v303
    %v1092 = vunpack.c.h.b16 %v303
    %v1093 = vunpack.c.l.b16 %v304
    %v1094 = vunpack.c.h.b16 %v304
    %v1095 = vunpack.c.l.b16 %v305
    %v1096 = vunpack.c.h.b16 %v305
    %v1097 = vunpack.c.l.b16 %v306
    %v1098 = vunpack.c.h.b16 %v306
    %v1099 = vunpack.c.l.b16 %v307
    %v1100 = vunpack.c.h.b16 %v307
    %v1101 = vunpack.c.l.b16 %v308
    %v1102 = vunpack.c.h.b16 %v308
    %v1103 = vunpack.c.l.b16 %v309
    %v1104 = vunpack.c.h.b16 %v309
    %v1105 = vunpack.c.l.b16 %v310
    %v1106 = vunpack.c.h.b16 %v310
    %v1107 = vunpack.c.l.b16 %v311
    %v1108 = vunpack.c.h.b16 %v311
    %v1109 = vunpack.c.l.b16 %v312
    %v1110 = vunpack.c.h.b16 %v312
    %v1111 = vunpack.c.l.b16 %v313
    %v1112 = vunpack.c.h.b16 %v313
    %v1113 = vunpack.c.l.b16 %v314
    %v1114 = vunpack.c.h.b16 %v314
    %v1115 = vunpack.c.l.b16 %v315
    %v1116 = vunpack.c.h.b16 %v315
    %v1117 = vunpack.c.l.b16 %v316
    %v1118 = vunpack.c.h.b16 %v316
    %v1119 = vunpack.c.l.b16 %v317
    %v1120 = vunpack.c.h.b16 %v317
    %v1121 = vunpack.c.l.b16 %v318
    %v1122 = vunpack.c.h.b16 %v318
    %v1123 = vunpack.c.l.b16 %v319
    %v1124 = vunpack.c.h.b16 %v319
    %v1125 = vunpack.c.l.b16 %v320
    %v1126 = vunpack.c.h.b16 %v320
    %v1127 = vunpack.c.l.b16 %v321
    %v1128 = vunpack.c.h.b16 %v321
    %v1129 = vunpack.c.l.b16 %v322
    %v1130 = vunpack.c.h.b16 %v322
    %v1131 = vunpack.c.l.b16 %v323
    %v1132 = vunpack.c.h.b16 %v323
    %v1133 = vunpack.c.l.b16 %v324
    %v1134 = vunpack.c.h.b16 %v324
    %v1135 = vunpack.c.l.b16 %v325
    %v1136 = vunpack.c.h.b16 %v325
    %v1137 = vunpack.c.l.b16 %v326
    %v1138 = vunpack.c.h.b16 %v326
    %v1139 = vunpack.c.l.b16 %v327
    %v1140 = vunpack.c.h.b16 %v327
    %v1141 = vunpack.c.l.b16 %v328
    %v1142 = vunpack.c.h.b16 %v328
    %v1143 = vunpack.c.l.b16 %v329
    %v1144 = vunpack.c.h.b16 %v329
    %v1145 = vunpack.c.l.b16 %v330
    %v1146 = vunpack.c.h.b16 %v330
    %v1147 = vunpack.c.l.b16 %v331
    %v1148 = vunpack.c.h.b16 %v331
    %v1149 = vunpack.c.l.b16 %v332
    %v1150 = vunpack.c.h.b16 %v332
    %v1151 = vunpack.c.l.b16 %v333
    %v1152 = vunpack.c.h.b16 %v333
    %v1153 = vunpack.c.l.b16 %v334
    %v1154 = vunpack.c.h.b16 %v334
    %v1155 = vunpack.c.l.b16 %v335
    %v1156 = vunpack.c.h.b16 %v335
    %v1157 = vunpack.c.l.b16 %v336
    %v1158 = vunpack.c.h.b16 %v336
    %v1159 = vunpack.c.l.b16 %v337
    %v1160 = vunpack.c.h.b16 %v337
    %v1161 = vunpack.c.l.b16 %v338
    %v1162 = vunpack.c.h.b16 %v338
    %v1163 = vunpack.c.l.b16 %v339
    %v1164 = vunpack.c.h.b16 %v339
    %v1165 = vunpack.c.l.b16 %v340
    %v1166 = vunpack.c.h.b16 %v340
    %v1167 = vunpack.c.l.b16 %v341
    %v1168 = vunpack.c.h.b16 %v341
    %v1169 = vunpack.c.l.b16 %v342
    %v1170 = vunpack.c.h.b16 %v342
    %v1171 = vunpack.c.l.b16 %v343
    %v1172 = vunpack.c.h.b16 %v343
    %v1173 = vunpack.c.l.b16 %v344
    %v1174 = vunpack.c.h.b16 %v344
    %v1175 = vunpack.c.l.b16 %v345
    %v1176 = vunpack.c.h.b16 %v345
    %v1177 = vunpack.c.l.b16 %v346
    %v1178 = vunpack.c.h.b16 %v346
    %v1179 = vunpack.c.l.b16 %v347
    %v1180 = vunpack.c.h.b16 %v347
    %v1181 = vunpack.c.l.b16 %v348
    %v1182 = vunpack.c.h.b16 %v348
    %v1183 = vunpack.c.l.b16 %v349
    %v1184 = vunpack.c.h.b16 %v349
    %v1185 = vunpack.c.l.b16 %v350
    %v1186 = vunpack.c.h.b16 %v350
    %v1187 = vunpack.c.l.b16 %v351
    %v1188 = vunpack.c.h.b16 %v351
    %v1189 = vunpack.c.l.b16 %v352
    %v1190 = vunpack.c.h.b16 %v352
    %v1191 = vunpack.c.l.b16 %v353
    %v1192 = vunpack.c.h.b16 %v353
    %v1193 = vunpack.c.l.b16 %v354
    %v1194 = vunpack.c.h.b16 %v354
    %v1195 = vunpack.c.l.b16 %v355
    %v1196 = vunpack.c.h.b16 %v355
    %v1197 = vunpack.c.l.b16 %v356
    %v1198 = vunpack.c.h.b16 %v356
    %v1199 = vunpack.c.l.b16 %v357
    %v1200 = vunpack.c.h.b16 %v357
    %v1201 = vunpack.c.l.b16 %v358
    %v1202 = vunpack.c.h.b16 %v358
    %v1203 = vunpack.c.l.b16 %v359
    %v1204 = vunpack.c.h.b16 %v359
    %v1205 = vunpack.c.l.b16 %v360
    %v1206 = vunpack.c.h.b16 %v360
    %v1207 = vunpack.c.l.b16 %v361
    %v1208 = vunpack.c.h.b16 %v361
    %v1209 = vunpack.c.l.b16 %v362
    %v1210 = vunpack.c.h.b16 %v362
    %v1211 = vunpack.c.l.b16 %v363
    %v1212 = vunpack.c.h.b16 %v363
    %v1213 = vunpack.c.l.b16 %v364
    %v1214 = vunpack.c.h.b16 %v364
    %v1215 = vunpack.c.l.b16 %v365
    %v1216 = vunpack.c.h.b16 %v365
    %v1217 = vunpack.c.l.b16 %v366
    %v1218 = vunpack.c.h.b16 %v366
    %v1219 = vunpack.c.l.b16 %v367
    %v1220 = vunpack.c.h.b16 %v367
    %v1221 = vunpack.c.l.b16 %v368
    %v1222 = vunpack.c.h.b16 %v368
    %v1223 = vunpack.c.l.b16 %v369
    %v1224 = vunpack.c.h.b16 %v369
    %v1225 = vunpack.c.l.b16 %v370
    %v1226 = vunpack.c.h.b16 %v370
    %v1227 = vunpack.c.l.b16 %v371
    %v1228 = vunpack.c.h.b16 %v371
    %v1229 = vunpack.c.l.b16 %v372
    %v1230 = vunpack.c.h.b16 %v372
    %v1231 = vunpack.c.l.b16 %v373
    %v1232 = vunpack.c.h.b16 %v373
    %v1233 = vunpack.c.l.b16 %v374
    %v1234 = vunpack.c.h.b16 %v374
    %v1235 = vunpack.c.l.b16 %v375
    %v1236 = vunpack.c.h.b16 %v375
    %v1237 = vunpack.c.l.b16 %v376
    %v1238 = vunpack.c.h.b16 %v376
    %v1239 = vunpack.c.l.b16 %v377
    %v1240 = vunpack.c.h.b16 %v377
    %v1241 = vunpack.c.l.b16 %v378
    %v1242 = vunpack.c.h.b16 %v378
    %v1243 = vunpack.c.l.b16 %v379
    %v1244 = vunpack.c.h.b16 %v379
    %v1245 = vunpack.c.l.b16 %v380
    %v1246 = vunpack.c.h.b16 %v380
    %v1247 = vunpack.c.l.b16 %v381
    %v1248 = vunpack.c.h.b16 %v381
    %v1249 = vunpack.c.l.b16 %v382
    %v1250 = vunpack.c.h.b16 %v382
    %v1251 = vunpack.c.l.b16 %v383
    %v1252 = vunpack.c.h.b16 %v383
    %v1253 = vunpack.c.l.b16 %v384
    %v1254 = vunpack.c.h.b16 %v384
    %v1255 = vunpack.c.l.b16 %v385
    %v1256 = vunpack.c.h.b16 %v385
    %v1257 = vunpack.c.l.b16 %v386
    %v1258 = vunpack.c.h.b16 %v386
    %v1259 = vunpack.c.l.b16 %v387
    %v1260 = vunpack.c.h.b16 %v387
    %v1261 = vunpack.c.l.b16 %v388
    %v1262 = vunpack.c.h.b16 %v388
    %v1263 = vunpack.c.l.b16 %v389
    %v1264 = vunpack.c.h.b16 %v389
    %v1265 = vunpack.c.l.b16 %v390
    %v1266 = vunpack.c.h.b16 %v390
    %v1267 = vunpack.c.l.b16 %v391
    %v1268 = vunpack.c.h.b16 %v391
    %v1269 = vunpack.c.l.b16 %v392
    %v1270 = vunpack.c.h.b16 %v392
    %v1271 = vunpack.c.l.b16 %v393
    %v1272 = vunpack.c.h.b16 %v393
    %v1273 = vunpack.c.l.b16 %v394
    %v1274 = vunpack.c.h.b16 %v394
    %v1275 = vunpack.c.l.b16 %v395
    %v1276 = vunpack.c.h.b16 %v395
    %v1277 = vunpack.c.l.b16 %v396
    %v1278 = vunpack.c.h.b16 %v396
    %v1279 = vunpack.c.l.b16 %v397
    %v1280 = vunpack.c.h.b16 %v397
    %v1281 = vunpack.c.l.b16 %v398
    %v1282 = vunpack.c.h.b16 %v398
    %v1283 = vunpack.c.l.b16 %v399
    %v1284 = vunpack.c.h.b16 %v399
    %v1285 = vunpack.c.l.b16 %v400
    %v1286 = vunpack.c.h.b16 %v400
    %v1287 = vunpack.c.l.b16 %v401
    %v1288 = vunpack.c.h.b16 %v401
    %v1289 = vunpack.c.l.b16 %v402
    %v1290 = vunpack.c.h.b16 %v402
    %v1291 = vunpack.c.l.b16 %v403
    %v1292 = vunpack.c.h.b16 %v403
    %v1293 = vunpack.c.l.b16 %v404
    %v1294 = vunpack.c.h.b16 %v404
    %v1295 = vunpack.c.l.b16 %v405
    %v1296 = vunpack.c.h.b16 %v405
    %v1297 = vunpack.c.l.b16 %v406
    %v1298 = vunpack.c.h.b16 %v406
    %v1299 = vunpack.c.l.b16 %v407
    %v1300 = vunpack.c.h.b16 %v407
    %v1301 = vunpack.c.l.b16 %v408
    %v1302 = vunpack.c.h.b16 %v408
    %v1303 = vunpack.c.l.b16 %v409
    %v1304 = vunpack.c.h.b16 %v409
    %v1305 = vunpack.c.l.b16 %v410
    %v1306 = vunpack.c.h.b16 %v410
    %v1307 = vunpack.c.l.b16 %v411
    %v1308 = vunpack.c.h.b16 %v411
    %v1309 = vunpack.c.l.b16 %v412
    %v1310 = vunpack.c.h.b16 %v412
    %v1311 = vunpack.c.l.b16 %v413
    %v1312 = vunpack.c.h.b16 %v413
    %v1313 = vunpack.c.l.b16 %v414
    %v1314 = vunpack.c.h.b16 %v414
    %v1315 = vunpack.c.l.b16 %v415
    %v1316 = vunpack.c.h.b16 %v415
    %v1317 = vunpack.c.l.b16 %v416
    %v1318 = vunpack.c.h.b16 %v416
    %v1319 = vunpack.c.l.b16 %v417
    %v1320 = vunpack.c.h.b16 %v417
    %v1321 = vunpack.c.l.b16 %v418
    %v1322 = vunpack.c.h.b16 %v418
    %v1323 = vunpack.c.l.b16 %v419
    %v1324 = vunpack.c.h.b16 %v419
    %v1325 = vunpack.c.l.b16 %v420
    %v1326 = vunpack.c.h.b16 %v420
    %v1327 = vunpack.c.l.b16 %v421
    %v1328 = vunpack.c.h.b16 %v421
    %v1329 = vunpack.c.l.b16 %v422
    %v1330 = vunpack.c.h.b16 %v422
    %v1331 = vunpack.c.l.b16 %v423
    %v1332 = vunpack.c.h.b16 %v423
    %v1333 = vunpack.c.l.b16 %v424
    %v1334 = vunpack.c.h.b16 %v424
    %v1335 = vunpack.c.l.b16 %v425
    %v1336 = vunpack.c.h.b16 %v425
    %v1337 = vunpack.c.l.b16 %v426
    %v1338 = vunpack.c.h.b16 %v426
    %v1339 = vunpack.c.l.b16 %v427
    %v1340 = vunpack.c.h.b16 %v427
    %v1341 = vunpack.c.l.b16 %v428
    %v1342 = vunpack.c.h.b16 %v428
    %v1343 = vunpack.c.l.b16 %v429
    %v1344 = vunpack.c.h.b16 %v429
    %v1345 = vunpack.c.l.b16 %v430
    %v1346 = vunpack.c.h.b16 %v430
    %v1347 = vunpack.c.l.b16 %v431
    %v1348 = vunpack.c.h.b16 %v431
    %v1349 = vunpack.c.l.b16 %v432
    %v1350 = vunpack.c.h.b16 %v432
    %v1351 = vunpack.c.l.b16 %v433
    %v1352 = vunpack.c.h.b16 %v433
    %v1353 = vunpack.c.l.b16 %v434
    %v1354 = vunpack.c.h.b16 %v434
    %v1355 = vunpack.c.l.b16 %v435
    %v1356 = vunpack.c.h.b16 %v435
    %v1357 = vunpack.c.l.b16 %v436
    %v1358 = vunpack.c.h.b16 %v436
    %v1359 = vunpack.c.l.b16 %v437
    %v1360 = vunpack.c.h.b16 %v437
    %v1361 = vunpack.c.l.b16 %v438
    %v1362 = vunpack.c.h.b16 %v438
    %v1363 = vunpack.c.l.b16 %v439
    %v1364 = vunpack.c.h.b16 %v439
    %v1365 = vunpack.c.l.b16 %v440
    %v1366 = vunpack.c.h.b16 %v440
    %v1367 = vunpack.c.l.b16 %v441
    %v1368 = vunpack.c.h.b16 %v441
    %v1369 = vunpack.c.l.b16 %v442
    %v1370 = vunpack.c.h.b16 %v442
    %v1371 = vunpack.c.l.b16 %v443
    %v1372 = vunpack.c.h.b16 %v443
    %v1373 = vunpack.c.l.b16 %v444
    %v1374 = vunpack.c.h.b16 %v444
    %v1375 = vunpack.c.l.b16 %v445
    %v1376 = vunpack.c.h.b16 %v445
    %v1377 = vunpack.c.l.b16 %v446
    %v1378 = vunpack.c.h.b16 %v446
    %v1379 = vunpack.c.l.b16 %v447
    %v1380 = vunpack.c.h.b16 %v447
    %v1381 = vunpack.c.l.b16 %v448
    %v1382 = vunpack.c.h.b16 %v448
    %v1383 = vunpack.c.l.b16 %v449
    %v1384 = vunpack.c.h.b16 %v449
    %v1385 = vunpack.c.l.b16 %v450
    %v1386 = vunpack.c.h.b16 %v450
    %v1387 = vunpack.c.l.b16 %v451
    %v1388 = vunpack.c.h.b16 %v451
    %v1389 = vunpack.c.l.b16 %v452
    %v1390 = vunpack.c.h.b16 %v452
    %v1391 = vunpack.c.l.b16 %v453
    %v1392 = vunpack.c.h.b16 %v453
    %v1393 = vunpack.c.l.b16 %v454
    %v1394 = vunpack.c.h.b16 %v454
    %v1395 = vunpack.c.l.b16 %v455
    %v1396 = vunpack.c.h.b16 %v455
    %v1397 = vunpack.c.l.b16 %v456
    %v1398 = vunpack.c.h.b16 %v456
    %v1399 = vunpack.c.l.b16 %v457
    %v1400 = vunpack.c.h.b16 %v457
    %v1401 = vunpack.c.l.b16 %v458
    %v1402 = vunpack.c.h.b16 %v458
    %v1403 = vunpack.c.l.b16 %v459
    %v1404 = vunpack.c.h.b16 %v459
    %v1405 = vunpack.c.l.b16 %v460
    %v1406 = vunpack.c.h.b16 %v460
    %v1407 = vunpack.c.l.b16 %v461
    %v1408 = vunpack.c.h.b16 %v461
    %v1409 = vunpack.c.l.b16 %v462
    %v1410 = vunpack.c.h.b16 %v462
    %v1411 = vunpack.c.l.b16 %v463
    %v1412 = vunpack.c.h.b16 %v463
    %v1413 = vunpack.c.l.b16 %v464
    %v1414 = vunpack.c.h.b16 %v464
    %v1415 = vunpack.c.l.b16 %v465
    %v1416 = vunpack.c.h.b16 %v465
    %v1417 = vunpack.c.l.b16 %v466
    %v1418 = vunpack.c.h.b16 %v466
    %v1419 = vunpack.c.l.b16 %v467
    %v1420 = vunpack.c.h.b16 %v467
    %v1421 = vunpack.c.l.b16 %v468
    %v1422 = vunpack.c.h.b16 %v468
    %v1423 = vunpack.c.l.b16 %v469
    %v1424 = vunpack.c.h.b16 %v469
    %v1425 = vunpack.c.l.b16 %v470
    %v1426 = vunpack.c.h.b16 %v470
    %v1427 = vunpack.c.l.b16 %v471
    %v1428 = vunpack.c.h.b16 %v471
    %v1429 = vunpack.c.l.b16 %v472
    %v1430 = vunpack.c.h.b16 %v472
    %v1431 = vunpack.c.l.b16 %v473
    %v1432 = vunpack.c.h.b16 %v473
    %v1433 = vunpack.c.l.b16 %v474
    %v1434 = vunpack.c.h.b16 %v474
    %v1435 = vunpack.c.l.b16 %v475
    %v1436 = vunpack.c.h.b16 %v475
    %v1437 = vunpack.c.l.b16 %v476
    %v1438 = vunpack.c.h.b16 %v476
    %v1439 = vunpack.c.l.b16 %v477
    %v1440 = vunpack.c.h.b16 %v477
    %v1441 = vunpack.c.l.b16 %v478
    %v1442 = vunpack.c.h.b16 %v478
    %v1443 = vunpack.c.l.b16 %v479
    %v1444 = vunpack.c.h.b16 %v479
    %v1445 = vunpack.c.l.b16 %v480
    %v1446 = vunpack.c.h.b16 %v480
    %v1447 = vunpack.c.l.b16 %v481
    %v1448 = vunpack.c.h.b16 %v481
    %v1449 = vunpack.c.l.b16 %v482
    %v1450 = vunpack.c.h.b16 %v482
    %v1451 = vunpack.c.l.b16 %v483
    %v1452 = vunpack.c.h.b16 %v483
    %v1453 = vunpack.c.l.b16 %v484
    %v1454 = vunpack.c.h.b16 %v484
    %v1455 = vunpack.c.l.b16 %v485
    %v1456 = vunpack.c.h.b16 %v485
    %v1457 = vunpack.c.l.b16 %v486
    %v1458 = vunpack.c.h.b16 %v486
    %v1459 = vunpack.c.l.b16 %v487
    %v1460 = vunpack.c.h.b16 %v487
    %v1461 = vunpack.c.l.b16 %v488
    %v1462 = vunpack.c.h.b16 %v488
    %v1463 = vunpack.c.l.b16 %v489
    %v1464 = vunpack.c.h.b16 %v489
    %v1465 = vunpack.c.l.b16 %v490
    %v1466 = vunpack.c.h.b16 %v490
    %v1467 = vunpack.c.l.b16 %v491
    %v1468 = vunpack.c.h.b16 %v491
    %v1469 = vunpack.c.l.b16 %v492
    %v1470 = vunpack.c.h.b16 %v492
    %v1471 = vunpack.c.l.b16 %v493
    %v1472 = vunpack.c.h.b16 %v493
    %v1473 = vunpack.c.l.b16 %v494
    %v1474 = vunpack.c.h.b16 %v494
    %v1475 = vunpack.c.l.b16 %v495
    %v1476 = vunpack.c.h.b16 %v495
    %v1477 = vunpack.c.l.b16 %v496
    %v1478 = vunpack.c.h.b16 %v496
    %v1479 = vunpack.c.l.b16 %v497
    %v1480 = vunpack.c.h.b16 %v497
    %v1481 = vunpack.c.l.b16 %v498
    %v1482 = vunpack.c.h.b16 %v498
    %v1483 = vunpack.c.l.b16 %v499
    %v1484 = vunpack.c.h.b16 %v499
    %v1485 = vunpack.c.l.b16 %v500
    %v1486 = vunpack.c.h.b16 %v500
    %v1487 = vunpack.c.l.b16 %v501
    %v1488 = vunpack.c.h.b16 %v501
    %v1489 = vunpack.c.l.b16 %v502
    %v1490 = vunpack.c.h.b16 %v502
    %v1491 = vunpack.c.l.b16 %v503
    %v1492 = vunpack.c.h.b16 %v503
    %v1493 = vunpack.c.l.b16 %v504
    %v1494 = vunpack.c.h.b16 %v504
    %v1495 = vunpack.c.l.b16 %v505
    %v1496 = vunpack.c.h.b16 %v505
    %v1497 = vunpack.c.l.b16 %v506
    %v1498 = vunpack.c.h.b16 %v506
    %v1499 = vunpack.c.l.b16 %v507
    %v1500 = vunpack.c.h.b16 %v507
    %v1501 = vunpack.c.l.b16 %v508
    %v1502 = vunpack.c.h.b16 %v508
    %v1503 = vunpack.c.l.b16 %v509
    %v1504 = vunpack.c.h.b16 %v509
    %v1505 = vpack.c.b16 %v869, %v865
    %v1506 = vpack.c.b16 %v870, %v866
    %v1507 = vpack.c.b16 %v871, %v867
    %v1508 = vpack.c.b16 %v872, %v868
    %v1509 = vpack.c.b16 %v877, %v873
    %v1510 = vpack.c.b16 %v878, %v874
    %v1511 = vpack.c.b16 %v879, %v875
    %v1512 = vpack.c.b16 %v880, %v876
    %v1513 = vpack.c.b16 %v885, %v881
    %v1514 = vpack.c.b16 %v886, %v882
    %v1515 = vpack.c.b16 %v887, %v883
    %v1516 = vpack.c.b16 %v888, %v884
    %v1517 = vpack.c.b16 %v893, %v889
    %v1518 = vpack.c.b16 %v894, %v890
    %v1519 = vpack.c.b16 %v895, %v891
    %v1520 = vpack.c.b16 %v896, %v892
    %v1521 = vpack.c.b16 %v901, %v897
    %v1522 = vpack.c.b16 %v902, %v898
    %v1523 = vpack.c.b16 %v903, %v899
    %v1524 = vpack.c.b16 %v904, %v900
    %v1525 = vpack.c.b16 %v909, %v905
    %v1526 = vpack.c.b16 %v910, %v906
    %v1527 = vpack.c.b16 %v911, %v907
    %v1528 = vpack.c.b16 %v912, %v908
    %v1529 = vpack.c.b16 %v917, %v913
    %v1530 = vpack.c.b16 %v918, %v914
    %v1531 = vpack.c.b16 %v919, %v915
    %v1532 = vpack.c.b16 %v920, %v916
    %v1533 = vpack.c.b16 %v925, %v921
    %v1534 = vpack.c.b16 %v926, %v922
    %v1535 = vpack.c.b16 %v927, %v923
    %v1536 = vpack.c.b16 %v928, %v924
    %v1537 = vpack.c.b16 %v933, %v929
    %v1538 = vpack.c.b16 %v934, %v930
    %v1539 = vpack.c.b16 %v935, %v931
    %v1540 = vpack.c.b16 %v936, %v932
    %v1541 = vpack.c.b16 %v941, %v937
    %v1542 = vpack.c.b16 %v942, %v938
    %v1543 = vpack.c.b16 %v943, %v939
    %v1544 = vpack.c.b16 %v944, %v940
    %v1545 = vpack.c.b16 %v949, %v945
    %v1546 = vpack.c.b16 %v950, %v946
    %v1547 = vpack.c.b16 %v951, %v947
    %v1548 = vpack.c.b16 %v952, %v948
    %v1549 = vpack.c.b16 %v957, %v953
    %v1550 = vpack.c.b16 %v958, %v954
    %v1551 = vpack.c.b16 %v959, %v955
    %v1552 = vpack.c.b16 %v960, %v956
    %v1553 = vpack.c.b16 %v965, %v961
    %v1554 = vpack.c.b16 %v966, %v962
    %v1555 = vpack.c.b16 %v967, %v963
    %v1556 = vpack.c.b16 %v968, %v964
    %v1557 = vpack.c.b16 %v973, %v969
    %v1558 = vpack.c.b16 %v974, %v970
    %v1559 = vpack.c.b16 %v975, %v971
    %v1560 = vpack.c.b16 %v976, %v972
    %v1561 = vpack.c.b16 %v981, %v977
    %v1562 = vpack.c.b16 %v982, %v978
    %v1563 = vpack.c.b16 %v983, %v979
    %v1564 = vpack.c.b16 %v984, %v980
    %v1565 = vpack.c.b16 %v989, %v985
    %v1566 = vpack.c.b16 %v990, %v986
    %v1567 = vpack.c.b16 %v991, %v987
    %v1568 = vpack.c.b16 %v992, %v988
    %v1569 = vpack.c.b16 %v997, %v993
    %v1570 = vpack.c.b16 %v998, %v994
    %v1571 = vpack.c.b16 %v999, %v995
    %v1572 = vpack.c.b16 %v1000, %v996
    %v1573 = vpack.c.b16 %v1005, %v1001
    %v1574 = vpack.c.b16 %v1006, %v1002
    %v1575 = vpack.c.b16 %v1007, %v1003
    %v1576 = vpack.c.b16 %v1008, %v1004
    %v1577 = vpack.c.b16 %v1013, %v1009
    %v1578 = vpack.c.b16 %v1014, %v1010
    %v1579 = vpack.c.b16 %v1015, %v1011
    %v1580 = vpack.c.b16 %v1016, %v1012
    %v1581 = vpack.c.b16 %v1021, %v1017
    %v1582 = vpack.c.b16 %v1022, %v1018
    %v1583 = vpack.c.b16 %v1023, %v1019
    %v1584 = vpack.c.b16 %v1024, %v1020
    %v1585 = vpack.c.b16 %v1029, %v1025
    %v1586 = vpack.c.b16 %v1030, %v1026
    %v1587 = vpack.c.b16 %v1031, %v1027
    %v1588 = vpack.c.b16 %v1032, %v1028
    %v1589 = vpack.c.b16 %v1037, %v1033
    %v1590 = vpack.c.b16 %v1038, %v1034
    %v1591 = vpack.c.b16 %v1039, %v1035
    %v1592 = vpack.c.b16 %v1040, %v1036
    %v1593 = vpack.c.b16 %v1045, %v1041
    %v1594 = vpack.c.b16 %v1046, %v1042
    %v1595 = vpack.c.b16 %v1047, %v1043
    %v1596 = vpack.c.b16 %v1048, %v1044
    %v1597 = vpack.c.b16 %v1053, %v1049
    %v1598 = vpack.c.b16 %v1054, %v1050
    %v1599 = vpack.c.b16 %v1055, %v1051
    %v1600 = vpack.c.b16 %v1056, %v1052
    %v1601 = vpack.c.b16 %v1061, %v1057
    %v1602 = vpack.c.b16 %v1062, %v1058
    %v1603 = vpack.c.b16 %v1063, %v1059
    %v1604 = vpack.c.b16 %v1064, %v1060
    %v1605 = vpack.c.b16 %v1069, %v1065
    %v1606 = vpack.c.b16 %v1070, %v1066
    %v1607 = vpack.c.b16 %v1071, %v1067
    %v1608 = vpack.c.b16 %v1072, %v1068
    %v1609 = vpack.c.b16 %v1077, %v1073
    %v1610 = vpack.c.b16 %v1078, %v1074
    %v1611 = vpack.c.b16 %v1079, %v1075
    %v1612 = vpack.c.b16 %v1080, %v1076
    %v1613 = vpack.c.b16 %v1085, %v1081
    %v1614 = vpack.c.b16 %v1086, %v1082
    %v1615 = vpack.c.b16 %v1087, %v1083
    %v1616 = vpack.c.b16 %v1088, %v1084
    %v1617 = vpack.c.b16 %v1093, %v1089
    %v1618 = vpack.c.b16 %v1094, %v1090
    %v1619 = vpack.c.b16 %v1095, %v1091
    %v1620 = vpack.c.b16 %v1096, %v1092
    %v1621 = vpack.c.b16 %v1101, %v1097
    %v1622 = vpack.c.b16 %v1102, %v1098
    %v1623 = vpack.c.b16 %v1103, %v1099
    %v1624 = vpack.c.b16 %v1104, %v1100
    %v1625 = vpack.c.b16 %v1109, %v1105
    %v1626 = vpack.c.b16 %v1110, %v1106
    %v1627 = vpack.c.b16 %v1111, %v1107
    %v1628 = vpack.c.b16 %v1112, %v1108
    %v1629 = vpack.c.b16 %v1117, %v1113
    %v1630 = vpack.c.b16 %v1118, %v1114
    %v1631 = vpack.c.b16 %v1119, %v1115
    %v1632 = vpack.c.b16 %v1120, %v1116
    %v1633 = vpack.c.b16 %v1125, %v1121
    %v1634 = vpack.c.b16 %v1126, %v1122
    %v1635 = vpack.c.b16 %v1127, %v1123
    %v1636 = vpack.c.b16 %v1128, %v1124
    %v1637 = vpack.c.b16 %v1133, %v1129
    %v1638 = vpack.c.b16 %v1134, %v1130
    %v1639 = vpack.c.b16 %v1135, %v1131
    %v1640 = vpack.c.b16 %v1136, %v1132
    %v1641 = vpack.c.b16 %v1141, %v1137
    %v1642 = vpack.c.b16 %v1142, %v1138
    %v1643 = vpack.c.b16 %v1143, %v1139
    %v1644 = vpack.c.b16 %v1144, %v1140
    %v1645 = vpack.c.b16 %v1149, %v1145
    %v1646 = vpack.c.b16 %v1150, %v1146
    %v1647 = vpack.c.b16 %v1151, %v1147
    %v1648 = vpack.c.b16 %v1152, %v1148
    %v1649 = vpack.c.b16 %v1157, %v1153
    %v1650 = vpack.c.b16 %v1158, %v1154
    %v1651 = vpack.c.b16 %v1159, %v1155
    %v1652 = vpack.c.b16 %v1160, %v1156
    %v1653 = vpack.c.b16 %v1165, %v1161
    %v1654 = vpack.c.b16 %v1166, %v1162
    %v1655 = vpack.c.b16 %v1167, %v1163
    %v1656 = vpack.c.b16 %v1168, %v1164
    %v1657 = vpack.c.b16 %v1173, %v1169
    %v1658 = vpack.c.b16 %v1174, %v1170
    %v1659 = vpack.c.b16 %v1175, %v1171
    %v1660 = vpack.c.b16 %v1176, %v1172
    %v1661 = vpack.c.b16 %v1181, %v1177
    %v1662 = vpack.c.b16 %v1182, %v1178
    %v1663 = vpack.c.b16 %v1183, %v1179
    %v1664 = vpack.c.b16 %v1184, %v1180
    %v1665 = vpack.c.b16 %v1189, %v1185
    %v1666 = vpack.c.b16 %v1190, %v1186
    %v1667 = vpack.c.b16 %v1191, %v1187
    %v1668 = vpack.c.b16 %v1192, %v1188
    %v1669 = vpack.c.b16 %v1197, %v1193
    %v1670 = vpack.c.b16 %v1198, %v1194
    %v1671 = vpack.c.b16 %v1199, %v1195
    %v1672 = vpack.c.b16 %v1200, %v1196
    %v1673 = vpack.c.b16 %v1205, %v1201
    %v1674 = vpack.c.b16 %v1206, %v1202
    %v1675 = vpack.c.b16 %v1207, %v1203
    %v1676 = vpack.c.b16 %v1208, %v1204
    %v1677 = vpack.c.b16 %v1213, %v1209
    %v1678 = vpack.c.b16 %v1214, %v1210
    %v1679 = vpack.c.b16 %v1215, %v1211
    %v1680 = vpack.c.b16 %v1216, %v1212
    %v1681 = vpack.c.b16 %v1221, %v1217
    %v1682 = vpack.c.b16 %v1222, %v1218
    %v1683 = vpack.c.b16 %v1223, %v1219
    %v1684 = vpack.c.b16 %v1224, %v1220
    %v1685 = vpack.c.b16 %v1229, %v1225
    %v1686 = vpack.c.b16 %v1230, %v1226
    %v1687 = vpack.c.b16 %v1231, %v1227
    %v1688 = vpack.c.b16 %v1232, %v1228
    %v1689 = vpack.c.b16 %v1237, %v1233
    %v1690 = vpack.c.b16 %v1238, %v1234
    %v1691 = vpack.c.b16 %v1239, %v1235
    %v1692 = vpack.c.b16 %v1240, %v1236
    %v1693 = vpack.c.b16 %v1245, %v1241
    %v1694 = vpack.c.b16 %v1246, %v1242
    %v1695 = vpack.c.b16 %v1247, %v1243
    %v1696 = vpack.c.b16 %v1248, %v1244
    %v1697 = vpack.c.b16 %v1253, %v1249
    %v1698 = vpack.c.b16 %v1254, %v1250
    %v1699 = vpack.c.b16 %v1255, %v1251
    %v1700 = vpack.c.b16 %v1256, %v1252
    %v1701 = vpack.c.b16 %v1261, %v1257
    %v1702 = vpack.c.b16 %v1262, %v1258
    %v1703 = vpack.c.b16 %v1263, %v1259
    %v1704 = vpack.c.b16 %v1264, %v1260
    %v1705 = vpack.c.b16 %v1269, %v1265
    %v1706 = vpack.c.b16 %v1270, %v1266
    %v1707 = vpack.c.b16 %v1271, %v1267
    %v1708 = vpack.c.b16 %v1272, %v1268
    %v1709 = vpack.c.b16 %v1277, %v1273
    %v1710 = vpack.c.b16 %v1278, %v1274
    %v1711 = vpack.c.b16 %v1279, %v1275
    %v1712 = vpack.c.b16 %v1280, %v1276
    %v1713 = vpack.c.b16 %v1285, %v1281
    %v1714 = vpack.c.b16 %v1286, %v1282
    %v1715 = vpack.c.b16 %v1287, %v1283
    %v1716 = vpack.c.b16 %v1288, %v1284
    %v1717 = vpack.c.b16 %v1293, %v1289
    %v1718 = vpack.c.b16 %v1294, %v1290
    %v1719 = vpack.c.b16 %v1295, %v1291
    %v1720 = vpack.c.b16 %v1296, %v1292
    %v1721 = vpack.c.b16 %v1301, %v1297
    %v1722 = vpack.c.b16 %v1302, %v1298
    %v1723 = vpack.c.b16 %v1303, %v1299
    %v1724 = vpack.c.b16 %v1304, %v1300
    %v1725 = vpack.c.b16 %v1309, %v1305
    %v1726 = vpack.c.b16 %v1310, %v1306
    %v1727 = vpack.c.b16 %v1311, %v1307
    %v1728 = vpack.c.b16 %v1312, %v1308
    %v1729 = vpack.c.b16 %v1317, %v1313
    %v1730 = vpack.c.b16 %v1318, %v1314
    %v1731 = vpack.c.b16 %v1319, %v1315
    %v1732 = vpack.c.b16 %v1320, %v1316
    %v1733 = vpack.c.b16 %v1325, %v1321
    %v1734 = vpack.c.b16 %v1326, %v1322
    %v1735 = vpack.c.b16 %v1327, %v1323
    %v1736 = vpack.c.b16 %v1328, %v1324
    %v1737 = vpack.c.b16 %v1333, %v1329
    %v1738 = vpack.c.b16 %v1334, %v1330
    %v1739 = vpack.c.b16 %v1335, %v1331
    %v1740 = vpack.c.b16 %v1336, %v1332
    %v1741 = vpack.c.b16 %v1341, %v1337
    %v1742 = vpack.c.b16 %v1342, %v1338
    %v1743 = vpack.c.b16 %v1343, %v1339
    %v1744 = vpack.c.b16 %v1344, %v1340
    %v1745 = vpack.c.b16 %v1349, %v1345
    %v1746 = vpack.c.b16 %v1350, %v1346
    %v1747 = vpack.c.b16 %v1351, %v1347
    %v1748 = vpack.c.b16 %v1352, %v1348
    %v1749 = vpack.c.b16 %v1357, %v1353
    %v1750 = vpack.c.b16 %v1358, %v1354
    %v1751 = vpack.c.b16 %v1359, %v1355
    %v1752 = vpack.c.b16 %v1360, %v1356
    %v1753 = vpack.c.b16 %v1365, %v1361
    %v1754 = vpack.c.b16 %v1366, %v1362
    %v1755 = vpack.c.b16 %v1367, %v1363
    %v1756 = vpack.c.b16 %v1368, %v1364
    %v1757 = vpack.c.b16 %v1373, %v1369
    %v1758 = vpack.c.b16 %v1374, %v1370
    %v1759 = vpack.c.b16 %v1375, %v1371
    %v1760 = vpack.c.b16 %v1376, %v1372
    %v1761 = vpack.c.b16 %v1381, %v1377
    %v1762 = vpack.c.b16 %v1382, %v1378
    %v1763 = vpack.c.b16 %v1383, %v1379
    %v1764 = vpack.c.b16 %v1384, %v1380
    %v1765 = vpack.c.b16 %v1389, %v1385
    %v1766 = vpack.c.b16 %v1390, %v1386
    %v1767 = vpack.c.b16 %v1391, %v1387
    %v1768 = vpack.c.b16 %v1392, %v1388
    %v1769 = vpack.c.b16 %v1397, %v1393
    %v1770 = vpack.c.b16 %v1398, %v1394
    %v1771 = vpack.c.b16 %v1399, %v1395
    %v1772 = vpack.c.b16 %v1400, %v1396
    %v1773 = vpack.c.b16 %v1405, %v1401
    %v1774 = vpack.c.b16 %v1406, %v1402
    %v1775 = vpack.c.b16 %v1407, %v1403
    %v1776 = vpack.c.b16 %v1408, %v1404
    %v1777 = vpack.c.b16 %v1413, %v1409
    %v1778 = vpack.c.b16 %v1414, %v1410
    %v1779 = vpack.c.b16 %v1415, %v1411
    %v1780 = vpack.c.b16 %v1416, %v1412
    %v1781 = vpack.c.b16 %v1421, %v1417
    %v1782 = vpack.c.b16 %v1422, %v1418
    %v1783 = vpack.c.b16 %v1423, %v1419
    %v1784 = vpack.c.b16 %v1424, %v1420
    %v1785 = vpack.c.b16 %v1429, %v1425
    %v1786 = vpack.c.b16 %v1430, %v1426
    %v1787 = vpack.c.b16 %v1431, %v1427
    %v1788 = vpack.c.b16 %v1432, %v1428
    %v1789 = vpack.c.b16 %v1437, %v1433
    %v1790 = vpack.c.b16 %v1438, %v1434
    %v1791 = vpack.c.b16 %v1439, %v1435
    %v1792 = vpack.c.b16 %v1440, %v1436
    %v1793 = vpack.c.b16 %v1445, %v1441
    %v1794 = vpack.c.b16 %v1446, %v1442
    %v1795 = vpack.c.b16 %v1447, %v1443
    %v1796 = vpack.c.b16 %v1448, %v1444
    %v1797 = vpack.c.b16 %v1453, %v1449
    %v1798 = vpack.c.b16 %v1454, %v1450
    %v1799 = vpack.c.b16 %v1455, %v1451
    %v1800 = vpack.c.b16 %v1456, %v1452
    %v1801 = vpack.c.b16 %v1461, %v1457
    %v1802 = vpack.c.b16 %v1462, %v1458
    %v1803 = vpack.c.b16 %v1463, %v1459
    %v1804 = vpack.c.b16 %v1464, %v1460
    %v1805 = vpack.c.b16 %v1469, %v1465
    %v1806 = vpack.c.b16 %v1470, %v1466
    %v1807 = vpack.c.b16 %v1471, %v1467
    %v1808 = vpack.c.b16 %v1472, %v1468
    %v1809 = vpack.c.b16 %v1477, %v1473
    %v1810 = vpack.c.b16 %v1478, %v1474
    %v1811 = vpack.c.b16 %v1479, %v1475
    %v1812 = vpack.c.b16 %v1480, %v1476
    %v1813 = vpack.c.b16 %v1485, %v1481
    %v1814 = vpack.c.b16 %v1486, %v1482
    %v1815 = vpack.c.b16 %v1487, %v1483
    %v1816 = vpack.c.b16 %v1488, %v1484
    %v1817 = vpack.c.b16 %v1493, %v1489
    %v1818 = vpack.c.b16 %v1494, %v1490
    %v1819 = vpack.c.b16 %v1495, %v1491
    %v1820 = vpack.c.b16 %v1496, %v1492
    %v1821 = vpack.c.b16 %v1501, %v1497
    %v1822 = vpack.c.b16 %v1502, %v1498
    %v1823 = vpack.c.b16 %v1503, %v1499
    %v1824 = vpack.c.b16 %v1504, %v1500
    %2145 = vmatprep.subr.bf16.mxu0 %v1506
    %2146 = vmatpush1.bf16.msra.mxu0 %v1505
    %2147 = vmatprep.subr.bf16.mxu0 %v1510
    %2148 = vmatpush1.bf16.msra.mxu0 %v1509
    %2149 = vmatprep.subr.bf16.mxu0 %v1514
    %2150 = vmatpush1.bf16.msra.mxu0 %v1513
    %2151 = vmatprep.subr.bf16.mxu0 %v1518
    %2152 = vmatpush1.bf16.msra.mxu0 %v1517
    %2153 = vmatprep.subr.bf16.mxu0 %v1522
    %2154 = vmatpush1.bf16.msra.mxu0 %v1521
    %2155 = vmatprep.subr.bf16.mxu0 %v1526
    %2156 = vmatpush1.bf16.msra.mxu0 %v1525
    %2157 = vmatprep.subr.bf16.mxu0 %v1530
    %2158 = vmatpush1.bf16.msra.mxu0 %v1529
    %2159 = vmatprep.subr.bf16.mxu0 %v1534
    %2160 = vmatpush1.bf16.msra.mxu0 %v1533
    %2161 = vmatprep.subr.bf16.mxu0 %v1538
    %2162 = vmatpush1.bf16.msra.mxu0 %v1537
    %2163 = vmatprep.subr.bf16.mxu0 %v1542
    %2164 = vmatpush1.bf16.msra.mxu0 %v1541
    %2165 = vmatprep.subr.bf16.mxu0 %v1546
    %2166 = vmatpush1.bf16.msra.mxu0 %v1545
    %2167 = vmatprep.subr.bf16.mxu0 %v1550
    %2168 = vmatpush1.bf16.msra.mxu0 %v1549
    %2169 = vmatprep.subr.bf16.mxu0 %v1554
    %2170 = vmatpush1.bf16.msra.mxu0 %v1553
    %2171 = vmatprep.subr.bf16.mxu0 %v1558
    %2172 = vmatpush1.bf16.msra.mxu0 %v1557
    %2173 = vmatprep.subr.bf16.mxu0 %v1562
    %2174 = vmatpush1.bf16.msra.mxu0 %v1561
    %2175 = vmatprep.subr.bf16.mxu0 %v1566
    %2176 = vmatpush1.bf16.msra.mxu0 %v1565
    %2177 = vmatprep.mubr.bf16.mxu0 %v526
    %2178 = vmatmul.mubr.bf16.gmra.mrb[0].mxu0 %v525
    %v2179 = vpop.f32.mrb[0].mxu0
    %v2180 = vadd.f32 0.0, %v2179
    %v2181 = vpop.f32.mrb[0].mxu0
    %v2182 = vadd.f32 0.0, %v2181
    %v2183 = vpop.f32.mrb[0].mxu0
    %v2184 = vpop.f32.mrb[0].mxu0
    %2185 = vdwg.mxu0
    %2186 = vmatprep.subr.bf16.mxu0 %v1570
    %2187 = vmatpush1.bf16.msra.mxu0 %v1569
    %2188 = vmatprep.subr.bf16.mxu0 %v1574
    %2189 = vmatpush1.bf16.msra.mxu0 %v1573
    %2190 = vmatprep.subr.bf16.mxu0 %v1578
    %2191 = vmatpush1.bf16.msra.mxu0 %v1577
    %2192 = vmatprep.subr.bf16.mxu0 %v1582
    %2193 = vmatpush1.bf16.msra.mxu0 %v1581
    %2194 = vmatprep.subr.bf16.mxu0 %v1586
    %2195 = vmatpush1.bf16.msra.mxu0 %v1585
    %2196 = vmatprep.subr.bf16.mxu0 %v1590
    %2197 = vmatpush1.bf16.msra.mxu0 %v1589
    %2198 = vmatprep.subr.bf16.mxu0 %v1594
    %2199 = vmatpush1.bf16.msra.mxu0 %v1593
    %2200 = vmatprep.subr.bf16.mxu0 %v1598
    %2201 = vmatpush1.bf16.msra.mxu0 %v1597
    %2202 = vmatprep.subr.bf16.mxu0 %v1602
    %2203 = vmatpush1.bf16.msra.mxu0 %v1601
    %2204 = vmatprep.subr.bf16.mxu0 %v1606
    %2205 = vmatpush1.bf16.msra.mxu0 %v1605
    %2206 = vmatprep.subr.bf16.mxu0 %v1610
    %2207 = vmatpush1.bf16.msra.mxu0 %v1609
    %2208 = vmatprep.subr.bf16.mxu0 %v1614
    %2209 = vmatpush1.bf16.msra.mxu0 %v1613
    %2210 = vmatprep.subr.bf16.mxu0 %v1618
    %2211 = vmatpush1.bf16.msra.mxu0 %v1617
    %2212 = vmatprep.subr.bf16.mxu0 %v1622
    %2213 = vmatpush1.bf16.msra.mxu0 %v1621
    %2214 = vmatprep.subr.bf16.mxu0 %v1626
    %2215 = vmatpush1.bf16.msra.mxu0 %v1625
    %2216 = vmatprep.subr.bf16.mxu0 %v1630
    %2217 = vmatpush1.bf16.msra.mxu0 %v1629
    %2218 = vmatprep.mubr.bf16.mxu0 %v528
    %2219 = vmatmul.mubr.bf16.gmra.mrb[0].mxu0 %v527
    %v2220 = vpop.f32.mrb[0].mxu0
    %v2221 = vadd.f32 %v2180, %v2220
    %v2222 = vpop.f32.mrb[0].mxu0
    %v2223 = vadd.f32 %v2182, %v2222
    %v2224 = vpop.f32.mrb[0].mxu0
    %v2225 = vpop.f32.mrb[0].mxu0
    %2226 = vdwg.mxu0
    %2227 = vmatprep.subr.bf16.mxu0 %v1634
    %2228 = vmatpush1.bf16.msra.mxu0 %v1633
    %2229 = vmatprep.subr.bf16.mxu0 %v1638
    %2230 = vmatpush1.bf16.msra.mxu0 %v1637
    %2231 = vmatprep.subr.bf16.mxu0 %v1642
    %2232 = vmatpush1.bf16.msra.mxu0 %v1641
    %2233 = vmatprep.subr.bf16.mxu0 %v1646
    %2234 = vmatpush1.bf16.msra.mxu0 %v1645
    %2235 = vmatprep.subr.bf16.mxu0 %v1650
    %2236 = vmatpush1.bf16.msra.mxu0 %v1649
    %2237 = vmatprep.subr.bf16.mxu0 %v1654
    %2238 = vmatpush1.bf16.msra.mxu0 %v1653
    %2239 = vmatprep.subr.bf16.mxu0 %v1658
    %2240 = vmatpush1.bf16.msra.mxu0 %v1657
    %2241 = vmatprep.subr.bf16.mxu0 %v1662
    %2242 = vmatpush1.bf16.msra.mxu0 %v1661
    %2243 = vmatprep.subr.bf16.mxu0 %v1666
    %2244 = vmatpush1.bf16.msra.mxu0 %v1665
    %2245 = vmatprep.subr.bf16.mxu0 %v1670
    %2246 = vmatpush1.bf16.msra.mxu0 %v1669
    %2247 = vmatprep.subr.bf16.mxu0 %v1674
    %2248 = vmatpush1.bf16.msra.mxu0 %v1673
    %2249 = vmatprep.subr.bf16.mxu0 %v1678
    %2250 = vmatpush1.bf16.msra.mxu0 %v1677
    %2251 = vmatprep.subr.bf16.mxu0 %v1682
    %2252 = vmatpush1.bf16.msra.mxu0 %v1681
    %2253 = vmatprep.subr.bf16.mxu0 %v1686
    %2254 = vmatpush1.bf16.msra.mxu0 %v1685
    %2255 = vmatprep.subr.bf16.mxu0 %v1690
    %2256 = vmatpush1.bf16.msra.mxu0 %v1689
    %2257 = vmatprep.subr.bf16.mxu0 %v1694
    %2258 = vmatpush1.bf16.msra.mxu0 %v1693
    %2259 = vmatprep.mubr.bf16.mxu0 %v530
    %2260 = vmatmul.mubr.bf16.gmra.mrb[0].mxu0 %v529
    %v2261 = vpop.f32.mrb[0].mxu0
    %v2262 = vadd.f32 %v2221, %v2261
    %v2263 = vpop.f32.mrb[0].mxu0
    %v2264 = vadd.f32 %v2223, %v2263
    %v2265 = vpop.f32.mrb[0].mxu0
    %v2266 = vpop.f32.mrb[0].mxu0
    %2267 = vdwg.mxu0
    %2268 = vmatprep.subr.bf16.mxu0 %v1698
    %2269 = vmatpush1.bf16.msra.mxu0 %v1697
    %2270 = vmatprep.subr.bf16.mxu0 %v1702
    %2271 = vmatpush1.bf16.msra.mxu0 %v1701
    %2272 = vmatprep.subr.bf16.mxu0 %v1706
    %2273 = vmatpush1.bf16.msra.mxu0 %v1705
    %2274 = vmatprep.subr.bf16.mxu0 %v1710
    %2275 = vmatpush1.bf16.msra.mxu0 %v1709
    %2276 = vmatprep.subr.bf16.mxu0 %v1714
    %2277 = vmatpush1.bf16.msra.mxu0 %v1713
    %2278 = vmatprep.subr.bf16.mxu0 %v1718
    %2279 = vmatpush1.bf16.msra.mxu0 %v1717
    %2280 = vmatprep.subr.bf16.mxu0 %v1722
    %2281 = vmatpush1.bf16.msra.mxu0 %v1721
    %2282 = vmatprep.subr.bf16.mxu0 %v1726
    %2283 = vmatpush1.bf16.msra.mxu0 %v1725
    %2284 = vmatprep.subr.bf16.mxu0 %v1730
    %2285 = vmatpush1.bf16.msra.mxu0 %v1729
    %2286 = vmatprep.subr.bf16.mxu0 %v1734
    %2287 = vmatpush1.bf16.msra.mxu0 %v1733
    %2288 = vmatprep.subr.bf16.mxu0 %v1738
    %2289 = vmatpush1.bf16.msra.mxu0 %v1737
    %2290 = vmatprep.subr.bf16.mxu0 %v1742
    %2291 = vmatpush1.bf16.msra.mxu0 %v1741
    %2292 = vmatprep.subr.bf16.mxu0 %v1746
    %2293 = vmatpush1.bf16.msra.mxu0 %v1745
    %2294 = vmatprep.subr.bf16.mxu0 %v1750
    %2295 = vmatpush1.bf16.msra.mxu0 %v1749
    %2296 = vmatprep.subr.bf16.mxu0 %v1754
    %2297 = vmatpush1.bf16.msra.mxu0 %v1753
    %2298 = vmatprep.subr.bf16.mxu0 %v1758
    %2299 = vmatpush1.bf16.msra.mxu0 %v1757
    %2300 = vmatprep.mubr.bf16.mxu0 %v532
    %2301 = vmatmul.mubr.bf16.gmra.mrb[0].mxu0 %v531
    %v2302 = vpop.f32.mrb[0].mxu0
    %v2303 = vadd.f32 %v2262, %v2302
    %v2304 = vpop.f32.mrb[0].mxu0
    %v2305 = vadd.f32 %v2264, %v2304
    %v2306 = vpop.f32.mrb[0].mxu0
    %v2307 = vpop.f32.mrb[0].mxu0
    %2308 = vdwg.mxu0
    %2309 = vmatprep.subr.bf16.mxu0 %v1762
    %2310 = vmatpush1.bf16.msra.mxu0 %v1761
    %2311 = vmatprep.subr.bf16.mxu0 %v1766
    %2312 = vmatpush1.bf16.msra.mxu0 %v1765
    %2313 = vmatprep.subr.bf16.mxu0 %v1770
    %2314 = vmatpush1.bf16.msra.mxu0 %v1769
    %2315 = vmatprep.subr.bf16.mxu0 %v1774
    %2316 = vmatpush1.bf16.msra.mxu0 %v1773
    %2317 = vmatprep.subr.bf16.mxu0 %v1778
    %2318 = vmatpush1.bf16.msra.mxu0 %v1777
    %2319 = vmatprep.subr.bf16.mxu0 %v1782
    %2320 = vmatpush1.bf16.msra.mxu0 %v1781
    %2321 = vmatprep.subr.bf16.mxu0 %v1786
    %2322 = vmatpush1.bf16.msra.mxu0 %v1785
    %2323 = vmatprep.subr.bf16.mxu0 %v1790
    %2324 = vmatpush1.bf16.msra.mxu0 %v1789
    %2325 = vmatprep.subr.bf16.mxu0 %v1794
    %2326 = vmatpush1.bf16.msra.mxu0 %v1793
    %2327 = vmatprep.subr.bf16.mxu0 %v1798
    %2328 = vmatpush1.bf16.msra.mxu0 %v1797
    %2329 = vmatprep.subr.bf16.mxu0 %v1802
    %2330 = vmatpush1.bf16.msra.mxu0 %v1801
    %2331 = vmatprep.subr.bf16.mxu0 %v1806
    %2332 = vmatpush1.bf16.msra.mxu0 %v1805
    %2333 = vmatprep.subr.bf16.mxu0 %v1810
    %2334 = vmatpush1.bf16.msra.mxu0 %v1809
    %2335 = vmatprep.subr.bf16.mxu0 %v1814
    %2336 = vmatpush1.bf16.msra.mxu0 %v1813
    %2337 = vmatprep.subr.bf16.mxu0 %v1818
    %2338 = vmatpush1.bf16.msra.mxu0 %v1817
    %2339 = vmatprep.subr.bf16.mxu0 %v1822
    %2340 = vmatpush1.bf16.msra.mxu0 %v1821
    %2341 = vmatprep.mubr.bf16.mxu0 %v534
    %2342 = vmatmul.mubr.bf16.gmra.mrb[0].mxu0 %v533
    %v2343 = vpop.f32.mrb[0].mxu0
    %v2344 = vadd.f32 %v2303, %v2343
    %v2345 = vpop.f32.mrb[0].mxu0
    %v2346 = vadd.f32 %v2305, %v2345
    %v2347 = vpop.f32.mrb[0].mxu0
    %v2348 = vpop.f32.mrb[0].mxu0
    %2349 = vdwg.mxu0
    %2350 = vmatprep.subr.bf16.mxu0 %v1508
    %2351 = vmatpush1.bf16.msra.mxu0 %v1507
    %2352 = vmatprep.subr.bf16.mxu0 %v1512
    %2353 = vmatpush1.bf16.msra.mxu0 %v1511
    %2354 = vmatprep.subr.bf16.mxu0 %v1516
    %2355 = vmatpush1.bf16.msra.mxu0 %v1515
    %2356 = vmatprep.subr.bf16.mxu0 %v1520
    %2357 = vmatpush1.bf16.msra.mxu0 %v1519
    %2358 = vmatprep.subr.bf16.mxu0 %v1524
    %2359 = vmatpush1.bf16.msra.mxu0 %v1523
    %2360 = vmatprep.subr.bf16.mxu0 %v1528
    %2361 = vmatpush1.bf16.msra.mxu0 %v1527
    %2362 = vmatprep.subr.bf16.mxu0 %v1532
    %2363 = vmatpush1.bf16.msra.mxu0 %v1531
    %2364 = vmatprep.subr.bf16.mxu0 %v1536
    %2365 = vmatpush1.bf16.msra.mxu0 %v1535
    %2366 = vmatprep.subr.bf16.mxu0 %v1540
    %2367 = vmatpush1.bf16.msra.mxu0 %v1539
    %2368 = vmatprep.subr.bf16.mxu0 %v1544
    %2369 = vmatpush1.bf16.msra.mxu0 %v1543
    %2370 = vmatprep.subr.bf16.mxu0 %v1548
    %2371 = vmatpush1.bf16.msra.mxu0 %v1547
    %2372 = vmatprep.subr.bf16.mxu0 %v1552
    %2373 = vmatpush1.bf16.msra.mxu0 %v1551
    %2374 = vmatprep.subr.bf16.mxu0 %v1556
    %2375 = vmatpush1.bf16.msra.mxu0 %v1555
    %2376 = vmatprep.subr.bf16.mxu0 %v1560
    %2377 = vmatpush1.bf16.msra.mxu0 %v1559
    %2378 = vmatprep.subr.bf16.mxu0 %v1564
    %2379 = vmatpush1.bf16.msra.mxu0 %v1563
    %2380 = vmatprep.subr.bf16.mxu0 %v1568
    %2381 = vmatpush1.bf16.msra.mxu0 %v1567
    %2382 = vmatprep.mubr.bf16.mxu0 %v526
    %2383 = vmatmul.mubr.bf16.gmra.mrb[0].mxu0 %v525
    %v2384 = vpop.f32.mrb[0].mxu0
    %v2385 = vadd.f32 0.0, %v2384
    %v2386 = vpop.f32.mrb[0].mxu0
    %v2387 = vadd.f32 0.0, %v2386
    %v2388 = vpop.f32.mrb[0].mxu0
    %v2389 = vpop.f32.mrb[0].mxu0
    %2390 = vdwg.mxu0
    %2391 = vmatprep.subr.bf16.mxu0 %v1572
    %2392 = vmatpush1.bf16.msra.mxu0 %v1571
    %2393 = vmatprep.subr.bf16.mxu0 %v1576
    %2394 = vmatpush1.bf16.msra.mxu0 %v1575
    %2395 = vmatprep.subr.bf16.mxu0 %v1580
    %2396 = vmatpush1.bf16.msra.mxu0 %v1579
    %2397 = vmatprep.subr.bf16.mxu0 %v1584
    %2398 = vmatpush1.bf16.msra.mxu0 %v1583
    %2399 = vmatprep.subr.bf16.mxu0 %v1588
    %2400 = vmatpush1.bf16.msra.mxu0 %v1587
    %2401 = vmatprep.subr.bf16.mxu0 %v1592
    %2402 = vmatpush1.bf16.msra.mxu0 %v1591
    %2403 = vmatprep.subr.bf16.mxu0 %v1596
    %2404 = vmatpush1.bf16.msra.mxu0 %v1595
    %2405 = vmatprep.subr.bf16.mxu0 %v1600
    %2406 = vmatpush1.bf16.msra.mxu0 %v1599
    %2407 = vmatprep.subr.bf16.mxu0 %v1604
    %2408 = vmatpush1.bf16.msra.mxu0 %v1603
    %2409 = vmatprep.subr.bf16.mxu0 %v1608
    %2410 = vmatpush1.bf16.msra.mxu0 %v1607
    %2411 = vmatprep.subr.bf16.mxu0 %v1612
    %2412 = vmatpush1.bf16.msra.mxu0 %v1611
    %2413 = vmatprep.subr.bf16.mxu0 %v1616
    %2414 = vmatpush1.bf16.msra.mxu0 %v1615
    %2415 = vmatprep.subr.bf16.mxu0 %v1620
    %2416 = vmatpush1.bf16.msra.mxu0 %v1619
    %2417 = vmatprep.subr.bf16.mxu0 %v1624
    %2418 = vmatpush1.bf16.msra.mxu0 %v1623
    %2419 = vmatprep.subr.bf16.mxu0 %v1628
    %2420 = vmatpush1.bf16.msra.mxu0 %v1627
    %2421 = vmatprep.subr.bf16.mxu0 %v1632
    %2422 = vmatpush1.bf16.msra.mxu0 %v1631
    %2423 = vmatprep.mubr.bf16.mxu0 %v528
    %2424 = vmatmul.mubr.bf16.gmra.mrb[0].mxu0 %v527
    %v2425 = vpop.f32.mrb[0].mxu0
    %v2426 = vadd.f32 %v2385, %v2425
    %v2427 = vpop.f32.mrb[0].mxu0
    %v2428 = vadd.f32 %v2387, %v2427
    %v2429 = vpop.f32.mrb[0].mxu0
    %v2430 = vpop.f32.mrb[0].mxu0
    %2431 = vdwg.mxu0
    %2432 = vmatprep.subr.bf16.mxu0 %v1636
    %2433 = vmatpush1.bf16.msra.mxu0 %v1635
    %2434 = vmatprep.subr.bf16.mxu0 %v1640
    %2435 = vmatpush1.bf16.msra.mxu0 %v1639
    %2436 = vmatprep.subr.bf16.mxu0 %v1644
    %2437 = vmatpush1.bf16.msra.mxu0 %v1643
    %2438 = vmatprep.subr.bf16.mxu0 %v1648
    %2439 = vmatpush1.bf16.msra.mxu0 %v1647
    %2440 = vmatprep.subr.bf16.mxu0 %v1652
    %2441 = vmatpush1.bf16.msra.mxu0 %v1651
    %2442 = vmatprep.subr.bf16.mxu0 %v1656
    %2443 = vmatpush1.bf16.msra.mxu0 %v1655
    %2444 = vmatprep.subr.bf16.mxu0 %v1660
    %2445 = vmatpush1.bf16.msra.mxu0 %v1659
    %2446 = vmatprep.subr.bf16.mxu0 %v1664
    %2447 = vmatpush1.bf16.msra.mxu0 %v1663
    %2448 = vmatprep.subr.bf16.mxu0 %v1668
    %2449 = vmatpush1.bf16.msra.mxu0 %v1667
    %2450 = vmatprep.subr.bf16.mxu0 %v1672
    %2451 = vmatpush1.bf16.msra.mxu0 %v1671
    %2452 = vmatprep.subr.bf16.mxu0 %v1676
    %2453 = vmatpush1.bf16.msra.mxu0 %v1675
    %2454 = vmatprep.subr.bf16.mxu0 %v1680
    %2455 = vmatpush1.bf16.msra.mxu0 %v1679
    %2456 = vmatprep.subr.bf16.mxu0 %v1684
    %2457 = vmatpush1.bf16.msra.mxu0 %v1683
    %2458 = vmatprep.subr.bf16.mxu0 %v1688
    %2459 = vmatpush1.bf16.msra.mxu0 %v1687
    %2460 = vmatprep.subr.bf16.mxu0 %v1692
    %2461 = vmatpush1.bf16.msra.mxu0 %v1691
    %2462 = vmatprep.subr.bf16.mxu0 %v1696
    %2463 = vmatpush1.bf16.msra.mxu0 %v1695
    %2464 = vmatprep.mubr.bf16.mxu0 %v530
    %2465 = vmatmul.mubr.bf16.gmra.mrb[0].mxu0 %v529
    %v2466 = vpop.f32.mrb[0].mxu0
    %v2467 = vadd.f32 %v2426, %v2466
    %v2468 = vpop.f32.mrb[0].mxu0
    %v2469 = vadd.f32 %v2428, %v2468
    %v2470 = vpop.f32.mrb[0].mxu0
    %v2471 = vpop.f32.mrb[0].mxu0
    %2472 = vdwg.mxu0
    %2473 = vmatprep.subr.bf16.mxu0 %v1700
    %2474 = vmatpush1.bf16.msra.mxu0 %v1699
    %2475 = vmatprep.subr.bf16.mxu0 %v1704
    %2476 = vmatpush1.bf16.msra.mxu0 %v1703
    %2477 = vmatprep.subr.bf16.mxu0 %v1708
    %2478 = vmatpush1.bf16.msra.mxu0 %v1707
    %2479 = vmatprep.subr.bf16.mxu0 %v1712
    %2480 = vmatpush1.bf16.msra.mxu0 %v1711
    %2481 = vmatprep.subr.bf16.mxu0 %v1716
    %2482 = vmatpush1.bf16.msra.mxu0 %v1715
    %2483 = vmatprep.subr.bf16.mxu0 %v1720
    %2484 = vmatpush1.bf16.msra.mxu0 %v1719
    %2485 = vmatprep.subr.bf16.mxu0 %v1724
    %2486 = vmatpush1.bf16.msra.mxu0 %v1723
    %2487 = vmatprep.subr.bf16.mxu0 %v1728
    %2488 = vmatpush1.bf16.msra.mxu0 %v1727
    %2489 = vmatprep.subr.bf16.mxu0 %v1732
    %2490 = vmatpush1.bf16.msra.mxu0 %v1731
    %2491 = vmatprep.subr.bf16.mxu0 %v1736
    %2492 = vmatpush1.bf16.msra.mxu0 %v1735
    %2493 = vmatprep.subr.bf16.mxu0 %v1740
    %2494 = vmatpush1.bf16.msra.mxu0 %v1739
    %2495 = vmatprep.subr.bf16.mxu0 %v1744
    %2496 = vmatpush1.bf16.msra.mxu0 %v1743
    %2497 = vmatprep.subr.bf16.mxu0 %v1748
    %2498 = vmatpush1.bf16.msra.mxu0 %v1747
    %2499 = vmatprep.subr.bf16.mxu0 %v1752
    %2500 = vmatpush1.bf16.msra.mxu0 %v1751
    %2501 = vmatprep.subr.bf16.mxu0 %v1756
    %2502 = vmatpush1.bf16.msra.mxu0 %v1755
    %2503 = vmatprep.subr.bf16.mxu0 %v1760
    %2504 = vmatpush1.bf16.msra.mxu0 %v1759
    %2505 = vmatprep.mubr.bf16.mxu0 %v532
    %2506 = vmatmul.mubr.bf16.gmra.mrb[0].mxu0 %v531
    %v2507 = vpop.f32.mrb[0].mxu0
    %v2508 = vadd.f32 %v2467, %v2507
    %v2509 = vpop.f32.mrb[0].mxu0
    %v2510 = vadd.f32 %v2469, %v2509
    %v2511 = vpop.f32.mrb[0].mxu0
    %v2512 = vpop.f32.mrb[0].mxu0
    %2513 = vdwg.mxu0
    %2514 = vmatprep.subr.bf16.mxu0 %v1764
    %2515 = vmatpush1.bf16.msra.mxu0 %v1763
    %2516 = vmatprep.subr.bf16.mxu0 %v1768
    %2517 = vmatpush1.bf16.msra.mxu0 %v1767
    %2518 = vmatprep.subr.bf16.mxu0 %v1772
    %2519 = vmatpush1.bf16.msra.mxu0 %v1771
    %2520 = vmatprep.subr.bf16.mxu0 %v1776
    %2521 = vmatpush1.bf16.msra.mxu0 %v1775
    %2522 = vmatprep.subr.bf16.mxu0 %v1780
    %2523 = vmatpush1.bf16.msra.mxu0 %v1779
    %2524 = vmatprep.subr.bf16.mxu0 %v1784
    %2525 = vmatpush1.bf16.msra.mxu0 %v1783
    %2526 = vmatprep.subr.bf16.mxu0 %v1788
    %2527 = vmatpush1.bf16.msra.mxu0 %v1787
    %2528 = vmatprep.subr.bf16.mxu0 %v1792
    %2529 = vmatpush1.bf16.msra.mxu0 %v1791
    %2530 = vmatprep.subr.bf16.mxu0 %v1796
    %2531 = vmatpush1.bf16.msra.mxu0 %v1795
    %2532 = vmatprep.subr.bf16.mxu0 %v1800
    %2533 = vmatpush1.bf16.msra.mxu0 %v1799
    %2534 = vmatprep.subr.bf16.mxu0 %v1804
    %2535 = vmatpush1.bf16.msra.mxu0 %v1803
    %2536 = vmatprep.subr.bf16.mxu0 %v1808
    %2537 = vmatpush1.bf16.msra.mxu0 %v1807
    %2538 = vmatprep.subr.bf16.mxu0 %v1812
    %2539 = vmatpush1.bf16.msra.mxu0 %v1811
    %2540 = vmatprep.subr.bf16.mxu0 %v1816
    %2541 = vmatpush1.bf16.msra.mxu0 %v1815
    %2542 = vmatprep.subr.bf16.mxu0 %v1820
    %2543 = vmatpush1.bf16.msra.mxu0 %v1819
    %2544 = vmatprep.subr.bf16.mxu0 %v1824
    %2545 = vmatpush1.bf16.msra.mxu0 %v1823
    %2546 = vmatprep.mubr.bf16.mxu0 %v534
    %2547 = vmatmul.mubr.bf16.gmra.mrb[0].mxu0 %v533
    %v2548 = vpop.f32.mrb[0].mxu0
    %v2549 = vadd.f32 %v2508, %v2548
    %v2550 = vpop.f32.mrb[0].mxu0
    %v2551 = vadd.f32 %v2510, %v2550
    %v2552 = vpop.f32.mrb[0].mxu0
    %v2553 = vpop.f32.mrb[0].mxu0
    %2554 = vdwg.mxu0
    %v2587 = vunpack.c.l.b16 %v153
    %v2588 = vunpack.c.h.b16 %v153
    %v2589 = vunpack.c.l.b16 %v154
    %v2590 = vunpack.c.h.b16 %v154
    %v2591 = vunpack.c.l.b16 %v155
    %v2592 = vunpack.c.h.b16 %v155
    %v2593 = vunpack.c.l.b16 %v156
    %v2594 = vunpack.c.h.b16 %v156
    %v2595 = vunpack.c.l.b16 %v157
    %v2596 = vunpack.c.h.b16 %v157
    %v2597 = vunpack.c.l.b16 %v158
    %v2598 = vunpack.c.h.b16 %v158
    %v2599 = vunpack.c.l.b16 %v159
    %v2600 = vunpack.c.h.b16 %v159
    %v2601 = vunpack.c.l.b16 %v160
    %v2602 = vunpack.c.h.b16 %v160
    %v2603 = vunpack.c.l.b16 %v161
    %v2604 = vunpack.c.h.b16 %v161
    %v2605 = vunpack.c.l.b16 %v162
    %v2606 = vunpack.c.h.b16 %v162
    %v2607 = vunpack.c.l.b16 %v163
    %v2608 = vunpack.c.h.b16 %v163
    %v2609 = vunpack.c.l.b16 %v164
    %v2610 = vunpack.c.h.b16 %v164
    %v2611 = vunpack.c.l.b16 %v165
    %v2612 = vunpack.c.h.b16 %v165
    %v2613 = vunpack.c.l.b16 %v166
    %v2614 = vunpack.c.h.b16 %v166
    %v2615 = vunpack.c.l.b16 %v167
    %v2616 = vunpack.c.h.b16 %v167
    %v2617 = vunpack.c.l.b16 %v168
    %v2618 = vunpack.c.h.b16 %v168
    %v2619 = vunpack.c.l.b16 %v169
    %v2620 = vunpack.c.h.b16 %v169
    %v2621 = vunpack.c.l.b16 %v170
    %v2622 = vunpack.c.h.b16 %v170
    %v2623 = vunpack.c.l.b16 %v171
    %v2624 = vunpack.c.h.b16 %v171
    %v2625 = vunpack.c.l.b16 %v172
    %v2626 = vunpack.c.h.b16 %v172
    %v2627 = vunpack.c.l.b16 %v173
    %v2628 = vunpack.c.h.b16 %v173
    %v2629 = vunpack.c.l.b16 %v174
    %v2630 = vunpack.c.h.b16 %v174
    %v2631 = vunpack.c.l.b16 %v175
    %v2632 = vunpack.c.h.b16 %v175
    %v2633 = vunpack.c.l.b16 %v176
    %v2634 = vunpack.c.h.b16 %v176
    %v2635 = vunpack.c.l.b16 %v177
    %v2636 = vunpack.c.h.b16 %v177
    %v2637 = vunpack.c.l.b16 %v178
    %v2638 = vunpack.c.h.b16 %v178
    %v2639 = vunpack.c.l.b16 %v179
    %v2640 = vunpack.c.h.b16 %v179
    %v2641 = vunpack.c.l.b16 %v180
    %v2642 = vunpack.c.h.b16 %v180
    %v2643 = vunpack.c.l.b16 %v181
    %v2644 = vunpack.c.h.b16 %v181
    %v2645 = vunpack.c.l.b16 %v182
    %v2646 = vunpack.c.h.b16 %v182
    %v2647 = vunpack.c.l.b16 %v183
    %v2648 = vunpack.c.h.b16 %v183
    %v2649 = vunpack.c.l.b16 %v184
    %v2650 = vunpack.c.h.b16 %v184
    %v2651 = vpack.c.b16 %v2591, %v2587
    %v2652 = vpack.c.b16 %v2592, %v2588
    %v2653 = vpack.c.b16 %v2593, %v2589
    %v2654 = vpack.c.b16 %v2594, %v2590
    %v2655 = vpack.c.b16 %v2599, %v2595
    %v2656 = vpack.c.b16 %v2600, %v2596
    %v2657 = vpack.c.b16 %v2601, %v2597
    %v2658 = vpack.c.b16 %v2602, %v2598
    %v2659 = vpack.c.b16 %v2607, %v2603
    %v2660 = vpack.c.b16 %v2608, %v2604
    %v2661 = vpack.c.b16 %v2609, %v2605
    %v2662 = vpack.c.b16 %v2610, %v2606
    %v2663 = vpack.c.b16 %v2615, %v2611
    %v2664 = vpack.c.b16 %v2616, %v2612
    %v2665 = vpack.c.b16 %v2617, %v2613
    %v2666 = vpack.c.b16 %v2618, %v2614
    %v2667 = vpack.c.b16 %v2623, %v2619
    %v2668 = vpack.c.b16 %v2624, %v2620
    %v2669 = vpack.c.b16 %v2625, %v2621
    %v2670 = vpack.c.b16 %v2626, %v2622
    %v2671 = vpack.c.b16 %v2631, %v2627
    %v2672 = vpack.c.b16 %v2632, %v2628
    %v2673 = vpack.c.b16 %v2633, %v2629
    %v2674 = vpack.c.b16 %v2634, %v2630
    %v2675 = vpack.c.b16 %v2639, %v2635
    %v2676 = vpack.c.b16 %v2640, %v2636
    %v2677 = vpack.c.b16 %v2641, %v2637
    %v2678 = vpack.c.b16 %v2642, %v2638
    %v2679 = vpack.c.b16 %v2647, %v2643
    %v2680 = vpack.c.b16 %v2648, %v2644
    %v2681 = vpack.c.b16 %v2649, %v2645
    %v2682 = vpack.c.b16 %v2650, %v2646
    %2715 = vmatprep.subr.bf16.mxu0 %v2652
    %2716 = vmatpush1.bf16.msra.mxu0 %v2651
    %2717 = vmatprep.subr.bf16.mxu0 %v2656
    %2718 = vmatpush1.bf16.msra.mxu0 %v2655
    %2719 = vmatprep.subr.bf16.mxu0 %v2660
    %2720 = vmatpush1.bf16.msra.mxu0 %v2659
    %2721 = vmatprep.subr.bf16.mxu0 %v2664
    %2722 = vmatpush1.bf16.msra.mxu0 %v2663
    %2723 = vmatprep.subr.bf16.mxu0 %v2668
    %2724 = vmatpush1.bf16.msra.mxu0 %v2667
    %2725 = vmatprep.subr.bf16.mxu0 %v2672
    %2726 = vmatpush1.bf16.msra.mxu0 %v2671
    %2727 = vmatprep.subr.bf16.mxu0 %v2676
    %2728 = vmatpush1.bf16.msra.mxu0 %v2675
    %2729 = vmatprep.subr.bf16.mxu0 %v2680
    %2730 = vmatpush1.bf16.msra.mxu0 %v2679
    %2731 = vmatprep.subr.bf16.mxu0 0
    %2732 = vmatpush1.bf16.msra.mxu0 0
    %2733 = vmatprep.subr.bf16.mxu0 0
    %2734 = vmatpush1.bf16.msra.mxu0 0
    %2735 = vmatprep.subr.bf16.mxu0 0
    %2736 = vmatpush1.bf16.msra.mxu0 0
    %2737 = vmatprep.subr.bf16.mxu0 0
    %2738 = vmatpush1.bf16.msra.mxu0 0
    %2739 = vmatprep.subr.bf16.mxu0 0
    %2740 = vmatpush1.bf16.msra.mxu0 0
    %2741 = vmatprep.subr.bf16.mxu0 0
    %2742 = vmatpush1.bf16.msra.mxu0 0
    %2743 = vmatprep.subr.bf16.mxu0 0
    %2744 = vmatpush1.bf16.msra.mxu0 0
    %2745 = vmatprep.subr.bf16.mxu0 0
    %2746 = vmatpush1.bf16.msra.mxu0 0
    %2747 = vmatprep.mubr.bf16.mxu0 0
    %2748 = vmatmul.mubr.bf16.gmra.mrb[0].mxu0 %v152
    %v2749 = vpop.f32.mrb[0].mxu0
    %v2750 = vadd.f32 %v2344, %v2749
    %v2751 = vpop.f32.mrb[0].mxu0
    %v2752 = vadd.f32 %v2346, %v2751
    %v2753 = vpop.f32.mrb[0].mxu0
    %v2754 = vpop.f32.mrb[0].mxu0
    %2755 = vdwg.mxu0
    %2756 = vmatprep.subr.bf16.mxu0 %v2654
    %2757 = vmatpush1.bf16.msra.mxu0 %v2653
    %2758 = vmatprep.subr.bf16.mxu0 %v2658
    %2759 = vmatpush1.bf16.msra.mxu0 %v2657
    %2760 = vmatprep.subr.bf16.mxu0 %v2662
    %2761 = vmatpush1.bf16.msra.mxu0 %v2661
    %2762 = vmatprep.subr.bf16.mxu0 %v2666
    %2763 = vmatpush1.bf16.msra.mxu0 %v2665
    %2764 = vmatprep.subr.bf16.mxu0 %v2670
    %2765 = vmatpush1.bf16.msra.mxu0 %v2669
    %2766 = vmatprep.subr.bf16.mxu0 %v2674
    %2767 = vmatpush1.bf16.msra.mxu0 %v2673
    %2768 = vmatprep.subr.bf16.mxu0 %v2678
    %2769 = vmatpush1.bf16.msra.mxu0 %v2677
    %2770 = vmatprep.subr.bf16.mxu0 %v2682
    %2771 = vmatpush1.bf16.msra.mxu0 %v2681
    %2772 = vmatprep.subr.bf16.mxu0 0
    %2773 = vmatpush1.bf16.msra.mxu0 0
    %2774 = vmatprep.subr.bf16.mxu0 0
    %2775 = vmatpush1.bf16.msra.mxu0 0
    %2776 = vmatprep.subr.bf16.mxu0 0
    %2777 = vmatpush1.bf16.msra.mxu0 0
    %2778 = vmatprep.subr.bf16.mxu0 0
    %2779 = vmatpush1.bf16.msra.mxu0 0
    %2780 = vmatprep.subr.bf16.mxu0 0
    %2781 = vmatpush1.bf16.msra.mxu0 0
    %2782 = vmatprep.subr.bf16.mxu0 0
    %2783 = vmatpush1.bf16.msra.mxu0 0
    %2784 = vmatprep.subr.bf16.mxu0 0
    %2785 = vmatpush1.bf16.msra.mxu0 0
    %2786 = vmatprep.subr.bf16.mxu0 0
    %2787 = vmatpush1.bf16.msra.mxu0 0
    %2788 = vmatprep.mubr.bf16.mxu0 0
    %2789 = vmatmul.mubr.bf16.gmra.mrb[0].mxu0 %v152
    %v2790 = vpop.f32.mrb[0].mxu0
    %v2791 = vadd.f32 %v2549, %v2790
    %v2792 = vpop.f32.mrb[0].mxu0
    %v2793 = vadd.f32 %v2551, %v2792
    %v2794 = vpop.f32.mrb[0].mxu0
    %v2795 = vpop.f32.mrb[0].mxu0
    %2796 = vdwg.mxu0
    %v2797 = vmax.f32 %v2750, 0.0
    %v2798 = vmax.f32 %v2752, 0.0
    %v2799 = vmax.f32 %v2791, 0.0
    %v2800 = vmax.f32 %v2793, 0.0
    %v2801 = vpack.c.bf16 %v2797, %v2797
    %v2802 = vpack.c.bf16 %v2798, %v2798
    %v2803 = vpack.c.bf16 %v2799, %v2799
    %v2804 = vpack.c.bf16 %v2800, %v2800
    %v2805 = vld [vmem:[%s4] sm:$0xf]
    %v2806 = vld [vmem:[%s4 + $0x4] sm:$0xf]
    %v2807 = vld [vmem:[%s4 + $0x8] sm:$0xf]
    %v2808 = vld [vmem:[%s4 + $0xc] sm:$0xf]
    %v2809 = vld [vmem:[%s4 + $0x10] sm:$0xf]
    %v2810 = vld [vmem:[%s4 + $0x14] sm:$0xf]
    %v2811 = vld [vmem:[%s4 + $0x18] sm:$0xf]
    %v2812 = vld [vmem:[%s4 + $0x1c] sm:$0xf]
    %v2813 = vld [vmem:[%s4 + $0x20] sm:$0xf]
    %v2814 = vld [vmem:[%s4 + $0x24] sm:$0xf]
    %v2815 = vld [vmem:[%s4 + $0x28] sm:$0xf]
    %v2816 = vld [vmem:[%s4 + $0x2c] sm:$0xf]
    %v2817 = vld [vmem:[%s4 + $0x30] sm:$0xf]
    %v2818 = vld [vmem:[%s4 + $0x34] sm:$0xf]
    %v2819 = vld [vmem:[%s4 + $0x38] sm:$0xf]
    %v2820 = vld [vmem:[%s4 + $0x3c] sm:$0xf]
    %v2821 = vld [vmem:[%s4 + $0x40] sm:$0xf]
    %v2822 = vld [vmem:[%s4 + $0x44] sm:$0xf]
    %v2823 = vld [vmem:[%s4 + $0x48] sm:$0xf]
    %v2824 = vld [vmem:[%s4 + $0x4c] sm:$0xf]
    %v2825 = vld [vmem:[%s4 + $0x50] sm:$0xf]
    %v2826 = vld [vmem:[%s4 + $0x54] sm:$0xf]
    %v2827 = vld [vmem:[%s4 + $0x58] sm:$0xf]
    %v2828 = vld [vmem:[%s4 + $0x5c] sm:$0xf]
    %v2829 = vld [vmem:[%s4 + $0x60] sm:$0xf]
    %v2830 = vld [vmem:[%s4 + $0x64] sm:$0xf]
    %v2831 = vld [vmem:[%s4 + $0x68] sm:$0xf]
    %v2832 = vld [vmem:[%s4 + $0x6c] sm:$0xf]
    %v2833 = vld [vmem:[%s4 + $0x70] sm:$0xf]
    %v2834 = vld [vmem:[%s4 + $0x74] sm:$0xf]
    %v2835 = vld [vmem:[%s4 + $0x78] sm:$0xf]
    %v2836 = vld [vmem:[%s4 + $0x7c] sm:$0xf]
    %v2837 = vld [vmem:[%s4 + $0x80] sm:$0xf]
    %v2838 = vld [vmem:[%s4 + $0x84] sm:$0xf]
    %v2839 = vld [vmem:[%s4 + $0x88] sm:$0xf]
    %v2840 = vld [vmem:[%s4 + $0x8c] sm:$0xf]
    %v2841 = vld [vmem:[%s4 + $0x90] sm:$0xf]
    %v2842 = vld [vmem:[%s4 + $0x94] sm:$0xf]
    %v2843 = vld [vmem:[%s4 + $0x98] sm:$0xf]
    %v2844 = vld [vmem:[%s4 + $0x9c] sm:$0xf]
    %v2845 = vld [vmem:[%s4 + $0xa0] sm:$0xf]
    %v2846 = vld [vmem:[%s4 + $0xa4] sm:$0xf]
    %v2847 = vld [vmem:[%s4 + $0xa8] sm:$0xf]
    %v2848 = vld [vmem:[%s4 + $0xac] sm:$0xf]
    %v2849 = vld [vmem:[%s4 + $0xb0] sm:$0xf]
    %v2850 = vld [vmem:[%s4 + $0xb4] sm:$0xf]
    %v2851 = vld [vmem:[%s4 + $0xb8] sm:$0xf]
    %v2852 = vld [vmem:[%s4 + $0xbc] sm:$0xf]
    %v2853 = vld [vmem:[%s4 + $0xc0] sm:$0xf]
    %v2854 = vld [vmem:[%s4 + $0xc4] sm:$0xf]
    %v2855 = vld [vmem:[%s4 + $0xc8] sm:$0xf]
    %v2856 = vld [vmem:[%s4 + $0xcc] sm:$0xf]
    %v2857 = vld [vmem:[%s4 + $0xd0] sm:$0xf]
    %v2858 = vld [vmem:[%s4 + $0xd4] sm:$0xf]
    %v2859 = vld [vmem:[%s4 + $0xd8] sm:$0xf]
    %v2860 = vld [vmem:[%s4 + $0xdc] sm:$0xf]
    %v2861 = vld [vmem:[%s4 + $0xe0] sm:$0xf]
    %v2862 = vld [vmem:[%s4 + $0xe4] sm:$0xf]
    %v2863 = vld [vmem:[%s4 + $0xe8] sm:$0xf]
    %v2864 = vld [vmem:[%s4 + $0xec] sm:$0xf]
    %v2865 = vld [vmem:[%s4 + $0xf0] sm:$0xf]
    %v2866 = vld [vmem:[%s4 + $0xf4] sm:$0xf]
    %v2867 = vld [vmem:[%s4 + $0xf8] sm:$0xf]
    %v2868 = vld [vmem:[%s4 + $0xfc] sm:$0xf]
    %s2869 = scalar_lea.vmem %s0, 8
    %v2870 = vld [vmem:[%s2869] sm:$0xff]
    %2871 = vset.pattern.permute.xlu0 0
    %2872 = vperm.xlu0 %2871, %v2870
    %v2873 = vpop.permute.xlu0 %2872
    %vm2874 = vcmp.eq.s32.totalorder %v2873, %v145
    %v2875 = vsel %vm2874, 1, 0
    %v2876 = vcvt.s32.f32 %v2875
    %v2877 = vpack.c.bf16 %v2876, %v2876
    %s2878 = scalar_lea.vmem %s1, 40
    %v2879 = vld [vmem:[%s2878] sm:$0xff]
    %v2880 = vld [vmem:[%s2878 + $0x8] sm:$0xff]
    %v2881 = vld [vmem:[%s2878 + $0x10] sm:$0xff]
    %v2882 = vld [vmem:[%s2878 + $0x18] sm:$0xff]
    %v2883 = vld [vmem:[%s2878 + $0x20] sm:$0xff]
    %v2889 = vunpack.c.l.b16 %v2879
    %v2890 = vunpack.c.h.b16 %v2879
    %v2891 = vunpack.c.l.b16 %v2880
    %v2892 = vunpack.c.h.b16 %v2880
    %v2893 = vunpack.c.l.b16 %v2881
    %v2894 = vunpack.c.h.b16 %v2881
    %v2895 = vunpack.c.l.b16 %v2882
    %v2896 = vunpack.c.h.b16 %v2882
    %v2897 = vunpack.c.l.b16 %v2883
    %v2898 = vunpack.c.h.b16 %v2883
    %v2899 = vpack.c.b16 %v2889, %v2889
    %v2900 = vpack.c.b16 %v2890, %v2890
    %v2901 = vpack.c.b16 %v2891, %v2891
    %v2902 = vpack.c.b16 %v2892, %v2892
    %v2903 = vpack.c.b16 %v2893, %v2893
    %v2904 = vpack.c.b16 %v2894, %v2894
    %v2905 = vpack.c.b16 %v2895, %v2895
    %v2906 = vpack.c.b16 %v2896, %v2896
    %v2907 = vpack.c.b16 %v2897, %v2897
    %v2908 = vpack.c.b16 %v2898, %v2898
    %2919 = vmatprep.subr.bf16.mxu0 %v1506
    %2920 = vmatpush1.bf16.msra.mxu0 %v1505
    %2921 = vmatprep.subr.bf16.mxu0 %v1510
    %2922 = vmatpush1.bf16.msra.mxu0 %v1509
    %2923 = vmatprep.subr.bf16.mxu0 %v1514
    %2924 = vmatpush1.bf16.msra.mxu0 %v1513
    %2925 = vmatprep.subr.bf16.mxu0 %v1518
    %2926 = vmatpush1.bf16.msra.mxu0 %v1517
    %2927 = vmatprep.subr.bf16.mxu0 %v1522
    %2928 = vmatpush1.bf16.msra.mxu0 %v1521
    %2929 = vmatprep.subr.bf16.mxu0 %v1526
    %2930 = vmatpush1.bf16.msra.mxu0 %v1525
    %2931 = vmatprep.subr.bf16.mxu0 %v1530
    %2932 = vmatpush1.bf16.msra.mxu0 %v1529
    %2933 = vmatprep.subr.bf16.mxu0 %v1534
    %2934 = vmatpush1.bf16.msra.mxu0 %v1533
    %2935 = vmatprep.subr.bf16.mxu0 %v1538
    %2936 = vmatpush1.bf16.msra.mxu0 %v1537
    %2937 = vmatprep.subr.bf16.mxu0 %v1542
    %2938 = vmatpush1.bf16.msra.mxu0 %v1541
    %2939 = vmatprep.subr.bf16.mxu0 %v1546
    %2940 = vmatpush1.bf16.msra.mxu0 %v1545
    %2941 = vmatprep.subr.bf16.mxu0 %v1550
    %2942 = vmatpush1.bf16.msra.mxu0 %v1549
    %2943 = vmatprep.subr.bf16.mxu0 %v1554
    %2944 = vmatpush1.bf16.msra.mxu0 %v1553
    %2945 = vmatprep.subr.bf16.mxu0 %v1558
    %2946 = vmatpush1.bf16.msra.mxu0 %v1557
    %2947 = vmatprep.subr.bf16.mxu0 %v1562
    %2948 = vmatpush1.bf16.msra.mxu0 %v1561
    %2949 = vmatprep.subr.bf16.mxu0 %v1566
    %2950 = vmatpush1.bf16.msra.mxu0 %v1565
    %2951 = vmatprep.mubr.bf16.mxu0 %v2900
    %2952 = vmatmul.mubr.bf16.gmra.mrb[0].mxu0 %v2899
    %v2953 = vpop.f32.mrb[0].mxu0
    %v2954 = vadd.f32 0.0, %v2953
    %v2955 = vpop.f32.mrb[0].mxu0
    %v2956 = vadd.f32 0.0, %v2955
    %v2957 = vpop.f32.mrb[0].mxu0
    %v2958 = vpop.f32.mrb[0].mxu0
    %2959 = vdwg.mxu0
    %2960 = vmatprep.subr.bf16.mxu0 %v1570
    %2961 = vmatpush1.bf16.msra.mxu0 %v1569
    %2962 = vmatprep.subr.bf16.mxu0 %v1574
    %2963 = vmatpush1.bf16.msra.mxu0 %v1573
    %2964 = vmatprep.subr.bf16.mxu0 %v1578
    %2965 = vmatpush1.bf16.msra.mxu0 %v1577
    %2966 = vmatprep.subr.bf16.mxu0 %v1582
    %2967 = vmatpush1.bf16.msra.mxu0 %v1581
    %2968 = vmatprep.subr.bf16.mxu0 %v1586
    %2969 = vmatpush1.bf16.msra.mxu0 %v1585
    %2970 = vmatprep.subr.bf16.mxu0 %v1590
    %2971 = vmatpush1.bf16.msra.mxu0 %v1589
    %2972 = vmatprep.subr.bf16.mxu0 %v1594
    %2973 = vmatpush1.bf16.msra.mxu0 %v1593
    %2974 = vmatprep.subr.bf16.mxu0 %v1598
    %2975 = vmatpush1.bf16.msra.mxu0 %v1597
    %2976 = vmatprep.subr.bf16.mxu0 %v1602
    %2977 = vmatpush1.bf16.msra.mxu0 %v1601
    %2978 = vmatprep.subr.bf16.mxu0 %v1606
    %2979 = vmatpush1.bf16.msra.mxu0 %v1605
    %2980 = vmatprep.subr.bf16.mxu0 %v1610
    %2981 = vmatpush1.bf16.msra.mxu0 %v1609
    %2982 = vmatprep.subr.bf16.mxu0 %v1614
    %2983 = vmatpush1.bf16.msra.mxu0 %v1613
    %2984 = vmatprep.subr.bf16.mxu0 %v1618
    %2985 = vmatpush1.bf16.msra.mxu0 %v1617
    %2986 = vmatprep.subr.bf16.mxu0 %v1622
    %2987 = vmatpush1.bf16.msra.mxu0 %v1621
    %2988 = vmatprep.subr.bf16.mxu0 %v1626
    %2989 = vmatpush1.bf16.msra.mxu0 %v1625
    %2990 = vmatprep.subr.bf16.mxu0 %v1630
    %2991 = vmatpush1.bf16.msra.mxu0 %v1629
    %2992 = vmatprep.mubr.bf16.mxu0 %v2902
    %2993 = vmatmul.mubr.bf16.gmra.mrb[0].mxu0 %v2901
    %v2994 = vpop.f32.mrb[0].mxu0
    %v2995 = vadd.f32 %v2954, %v2994
    %v2996 = vpop.f32.mrb[0].mxu0
    %v2997 = vadd.f32 %v2956, %v2996
    %v2998 = vpop.f32.mrb[0].mxu0
    %v2999 = vpop.f32.mrb[0].mxu0
    %3000 = vdwg.mxu0
    %3001 = vmatprep.subr.bf16.mxu0 %v1634
    %3002 = vmatpush1.bf16.msra.mxu0 %v1633
    %3003 = vmatprep.subr.bf16.mxu0 %v1638
    %3004 = vmatpush1.bf16.msra.mxu0 %v1637
    %3005 = vmatprep.subr.bf16.mxu0 %v1642
    %3006 = vmatpush1.bf16.msra.mxu0 %v1641
    %3007 = vmatprep.subr.bf16.mxu0 %v1646
    %3008 = vmatpush1.bf16.msra.mxu0 %v1645
    %3009 = vmatprep.subr.bf16.mxu0 %v1650
    %3010 = vmatpush1.bf16.msra.mxu0 %v1649
    %3011 = vmatprep.subr.bf16.mxu0 %v1654
    %3012 = vmatpush1.bf16.msra.mxu0 %v1653
    %3013 = vmatprep.subr.bf16.mxu0 %v1658
    %3014 = vmatpush1.bf16.msra.mxu0 %v1657
    %3015 = vmatprep.subr.bf16.mxu0 %v1662
    %3016 = vmatpush1.bf16.msra.mxu0 %v1661
    %3017 = vmatprep.subr.bf16.mxu0 %v1666
    %3018 = vmatpush1.bf16.msra.mxu0 %v1665
    %3019 = vmatprep.subr.bf16.mxu0 %v1670
    %3020 = vmatpush1.bf16.msra.mxu0 %v1669
    %3021 = vmatprep.subr.bf16.mxu0 %v1674
    %3022 = vmatpush1.bf16.msra.mxu0 %v1673
    %3023 = vmatprep.subr.bf16.mxu0 %v1678
    %3024 = vmatpush1.bf16.msra.mxu0 %v1677
    %3025 = vmatprep.subr.bf16.mxu0 %v1682
    %3026 = vmatpush1.bf16.msra.mxu0 %v1681
    %3027 = vmatprep.subr.bf16.mxu0 %v1686
    %3028 = vmatpush1.bf16.msra.mxu0 %v1685
    %3029 = vmatprep.subr.bf16.mxu0 %v1690
    %3030 = vmatpush1.bf16.msra.mxu0 %v1689
    %3031 = vmatprep.subr.bf16.mxu0 %v1694
    %3032 = vmatpush1.bf16.msra.mxu0 %v1693
    %3033 = vmatprep.mubr.bf16.mxu0 %v2904
    %3034 = vmatmul.mubr.bf16.gmra.mrb[0].mxu0 %v2903
    %v3035 = vpop.f32.mrb[0].mxu0
    %v3036 = vadd.f32 %v2995, %v3035
    %v3037 = vpop.f32.mrb[0].mxu0
    %v3038 = vadd.f32 %v2997, %v3037
    %v3039 = vpop.f32.mrb[0].mxu0
    %v3040 = vpop.f32.mrb[0].mxu0
    %3041 = vdwg.mxu0
    %3042 = vmatprep.subr.bf16.mxu0 %v1698
    %3043 = vmatpush1.bf16.msra.mxu0 %v1697
    %3044 = vmatprep.subr.bf16.mxu0 %v1702
    %3045 = vmatpush1.bf16.msra.mxu0 %v1701
    %3046 = vmatprep.subr.bf16.mxu0 %v1706
    %3047 = vmatpush1.bf16.msra.mxu0 %v1705
    %3048 = vmatprep.subr.bf16.mxu0 %v1710
    %3049 = vmatpush1.bf16.msra.mxu0 %v1709
    %3050 = vmatprep.subr.bf16.mxu0 %v1714
    %3051 = vmatpush1.bf16.msra.mxu0 %v1713
    %3052 = vmatprep.subr.bf16.mxu0 %v1718
    %3053 = vmatpush1.bf16.msra.mxu0 %v1717
    %3054 = vmatprep.subr.bf16.mxu0 %v1722
    %3055 = vmatpush1.bf16.msra.mxu0 %v1721
    %3056 = vmatprep.subr.bf16.mxu0 %v1726
    %3057 = vmatpush1.bf16.msra.mxu0 %v1725
    %3058 = vmatprep.subr.bf16.mxu0 %v1730
    %3059 = vmatpush1.bf16.msra.mxu0 %v1729
    %3060 = vmatprep.subr.bf16.mxu0 %v1734
    %3061 = vmatpush1.bf16.msra.mxu0 %v1733
    %3062 = vmatprep.subr.bf16.mxu0 %v1738
    %3063 = vmatpush1.bf16.msra.mxu0 %v1737
    %3064 = vmatprep.subr.bf16.mxu0 %v1742
    %3065 = vmatpush1.bf16.msra.mxu0 %v1741
    %3066 = vmatprep.subr.bf16.mxu0 %v1746
    %3067 = vmatpush1.bf16.msra.mxu0 %v1745
    %3068 = vmatprep.subr.bf16.mxu0 %v1750
    %3069 = vmatpush1.bf16.msra.mxu0 %v1749
    %3070 = vmatprep.subr.bf16.mxu0 %v1754
    %3071 = vmatpush1.bf16.msra.mxu0 %v1753
    %3072 = vmatprep.subr.bf16.mxu0 %v1758
    %3073 = vmatpush1.bf16.msra.mxu0 %v1757
    %3074 = vmatprep.mubr.bf16.mxu0 %v2906
    %3075 = vmatmul.mubr.bf16.gmra.mrb[0].mxu0 %v2905
    %v3076 = vpop.f32.mrb[0].mxu0
    %v3077 = vadd.f32 %v3036, %v3076
    %v3078 = vpop.f32.mrb[0].mxu0
    %v3079 = vadd.f32 %v3038, %v3078
    %v3080 = vpop.f32.mrb[0].mxu0
    %v3081 = vpop.f32.mrb[0].mxu0
    %3082 = vdwg.mxu0
    %3083 = vmatprep.subr.bf16.mxu0 %v1762
    %3084 = vmatpush1.bf16.msra.mxu0 %v1761
    %3085 = vmatprep.subr.bf16.mxu0 %v1766
    %3086 = vmatpush1.bf16.msra.mxu0 %v1765
    %3087 = vmatprep.subr.bf16.mxu0 %v1770
    %3088 = vmatpush1.bf16.msra.mxu0 %v1769
    %3089 = vmatprep.subr.bf16.mxu0 %v1774
    %3090 = vmatpush1.bf16.msra.mxu0 %v1773
    %3091 = vmatprep.subr.bf16.mxu0 %v1778
    %3092 = vmatpush1.bf16.msra.mxu0 %v1777
    %3093 = vmatprep.subr.bf16.mxu0 %v1782
    %3094 = vmatpush1.bf16.msra.mxu0 %v1781
    %3095 = vmatprep.subr.bf16.mxu0 %v1786
    %3096 = vmatpush1.bf16.msra.mxu0 %v1785
    %3097 = vmatprep.subr.bf16.mxu0 %v1790
    %3098 = vmatpush1.bf16.msra.mxu0 %v1789
    %3099 = vmatprep.subr.bf16.mxu0 %v1794
    %3100 = vmatpush1.bf16.msra.mxu0 %v1793
    %3101 = vmatprep.subr.bf16.mxu0 %v1798
    %3102 = vmatpush1.bf16.msra.mxu0 %v1797
    %3103 = vmatprep.subr.bf16.mxu0 %v1802
    %3104 = vmatpush1.bf16.msra.mxu0 %v1801
    %3105 = vmatprep.subr.bf16.mxu0 %v1806
    %3106 = vmatpush1.bf16.msra.mxu0 %v1805
    %3107 = vmatprep.subr.bf16.mxu0 %v1810
    %3108 = vmatpush1.bf16.msra.mxu0 %v1809
    %3109 = vmatprep.subr.bf16.mxu0 %v1814
    %3110 = vmatpush1.bf16.msra.mxu0 %v1813
    %3111 = vmatprep.subr.bf16.mxu0 %v1818
    %3112 = vmatpush1.bf16.msra.mxu0 %v1817
    %3113 = vmatprep.subr.bf16.mxu0 %v1822
    %3114 = vmatpush1.bf16.msra.mxu0 %v1821
    %3115 = vmatprep.mubr.bf16.mxu0 %v2908
    %3116 = vmatmul.mubr.bf16.gmra.mrb[0].mxu0 %v2907
    %v3117 = vpop.f32.mrb[0].mxu0
    %v3118 = vadd.f32 %v3077, %v3117
    %v3119 = vpop.f32.mrb[0].mxu0
    %v3120 = vadd.f32 %v3079, %v3119
    %v3121 = vpop.f32.mrb[0].mxu0
    %v3122 = vpop.f32.mrb[0].mxu0
    %3123 = vdwg.mxu0
    %3124 = vmatprep.subr.bf16.mxu0 %v1508
    %3125 = vmatpush1.bf16.msra.mxu0 %v1507
    %3126 = vmatprep.subr.bf16.mxu0 %v1512
    %3127 = vmatpush1.bf16.msra.mxu0 %v1511
    %3128 = vmatprep.subr.bf16.mxu0 %v1516
    %3129 = vmatpush1.bf16.msra.mxu0 %v1515
    %3130 = vmatprep.subr.bf16.mxu0 %v1520
    %3131 = vmatpush1.bf16.msra.mxu0 %v1519
    %3132 = vmatprep.subr.bf16.mxu0 %v1524
    %3133 = vmatpush1.bf16.msra.mxu0 %v1523
    %3134 = vmatprep.subr.bf16.mxu0 %v1528
    %3135 = vmatpush1.bf16.msra.mxu0 %v1527
    %3136 = vmatprep.subr.bf16.mxu0 %v1532
    %3137 = vmatpush1.bf16.msra.mxu0 %v1531
    %3138 = vmatprep.subr.bf16.mxu0 %v1536
    %3139 = vmatpush1.bf16.msra.mxu0 %v1535
    %3140 = vmatprep.subr.bf16.mxu0 %v1540
    %3141 = vmatpush1.bf16.msra.mxu0 %v1539
    %3142 = vmatprep.subr.bf16.mxu0 %v1544
    %3143 = vmatpush1.bf16.msra.mxu0 %v1543
    %3144 = vmatprep.subr.bf16.mxu0 %v1548
    %3145 = vmatpush1.bf16.msra.mxu0 %v1547
    %3146 = vmatprep.subr.bf16.mxu0 %v1552
    %3147 = vmatpush1.bf16.msra.mxu0 %v1551
    %3148 = vmatprep.subr.bf16.mxu0 %v1556
    %3149 = vmatpush1.bf16.msra.mxu0 %v1555
    %3150 = vmatprep.subr.bf16.mxu0 %v1560
    %3151 = vmatpush1.bf16.msra.mxu0 %v1559
    %3152 = vmatprep.subr.bf16.mxu0 %v1564
    %3153 = vmatpush1.bf16.msra.mxu0 %v1563
    %3154 = vmatprep.subr.bf16.mxu0 %v1568
    %3155 = vmatpush1.bf16.msra.mxu0 %v1567
    %3156 = vmatprep.mubr.bf16.mxu0 %v2900
    %3157 = vmatmul.mubr.bf16.gmra.mrb[0].mxu0 %v2899
    %v3158 = vpop.f32.mrb[0].mxu0
    %v3159 = vadd.f32 0.0, %v3158
    %v3160 = vpop.f32.mrb[0].mxu0
    %v3161 = vadd.f32 0.0, %v3160
    %v3162 = vpop.f32.mrb[0].mxu0
    %v3163 = vpop.f32.mrb[0].mxu0
    %3164 = vdwg.mxu0
    %3165 = vmatprep.subr.bf16.mxu0 %v1572
    %3166 = vmatpush1.bf16.msra.mxu0 %v1571
    %3167 = vmatprep.subr.bf16.mxu0 %v1576
    %3168 = vmatpush1.bf16.msra.mxu0 %v1575
    %3169 = vmatprep.subr.bf16.mxu0 %v1580
    %3170 = vmatpush1.bf16.msra.mxu0 %v1579
    %3171 = vmatprep.subr.bf16.mxu0 %v1584
    %3172 = vmatpush1.bf16.msra.mxu0 %v1583
    %3173 = vmatprep.subr.bf16.mxu0 %v1588
    %3174 = vmatpush1.bf16.msra.mxu0 %v1587
    %3175 = vmatprep.subr.bf16.mxu0 %v1592
    %3176 = vmatpush1.bf16.msra.mxu0 %v1591
    %3177 = vmatprep.subr.bf16.mxu0 %v1596
    %3178 = vmatpush1.bf16.msra.mxu0 %v1595
    %3179 = vmatprep.subr.bf16.mxu0 %v1600
    %3180 = vmatpush1.bf16.msra.mxu0 %v1599
    %3181 = vmatprep.subr.bf16.mxu0 %v1604
    %3182 = vmatpush1.bf16.msra.mxu0 %v1603
    %3183 = vmatprep.subr.bf16.mxu0 %v1608
    %3184 = vmatpush1.bf16.msra.mxu0 %v1607
    %3185 = vmatprep.subr.bf16.mxu0 %v1612
    %3186 = vmatpush1.bf16.msra.mxu0 %v1611
    %3187 = vmatprep.subr.bf16.mxu0 %v1616
    %3188 = vmatpush1.bf16.msra.mxu0 %v1615
    %3189 = vmatprep.subr.bf16.mxu0 %v1620
    %3190 = vmatpush1.bf16.msra.mxu0 %v1619
    %3191 = vmatprep.subr.bf16.mxu0 %v1624
    %3192 = vmatpush1.bf16.msra.mxu0 %v1623
    %3193 = vmatprep.subr.bf16.mxu0 %v1628
    %3194 = vmatpush1.bf16.msra.mxu0 %v1627
    %3195 = vmatprep.subr.bf16.mxu0 %v1632
    %3196 = vmatpush1.bf16.msra.mxu0 %v1631
    %3197 = vmatprep.mubr.bf16.mxu0 %v2902
    %3198 = vmatmul.mubr.bf16.gmra.mrb[0].mxu0 %v2901
    %v3199 = vpop.f32.mrb[0].mxu0
    %v3200 = vadd.f32 %v3159, %v3199
    %v3201 = vpop.f32.mrb[0].mxu0
    %v3202 = vadd.f32 %v3161, %v3201
    %v3203 = vpop.f32.mrb[0].mxu0
    %v3204 = vpop.f32.mrb[0].mxu0
    %3205 = vdwg.mxu0
    %3206 = vmatprep.subr.bf16.mxu0 %v1636
    %3207 = vmatpush1.bf16.msra.mxu0 %v1635
    %3208 = vmatprep.subr.bf16.mxu0 %v1640
    %3209 = vmatpush1.bf16.msra.mxu0 %v1639
    %3210 = vmatprep.subr.bf16.mxu0 %v1644
    %3211 = vmatpush1.bf16.msra.mxu0 %v1643
    %3212 = vmatprep.subr.bf16.mxu0 %v1648
    %3213 = vmatpush1.bf16.msra.mxu0 %v1647
    %3214 = vmatprep.subr.bf16.mxu0 %v1652
    %3215 = vmatpush1.bf16.msra.mxu0 %v1651
    %3216 = vmatprep.subr.bf16.mxu0 %v1656
    %3217 = vmatpush1.bf16.msra.mxu0 %v1655
    %3218 = vmatprep.subr.bf16.mxu0 %v1660
    %3219 = vmatpush1.bf16.msra.mxu0 %v1659
    %3220 = vmatprep.subr.bf16.mxu0 %v1664
    %3221 = vmatpush1.bf16.msra.mxu0 %v1663
    %3222 = vmatprep.subr.bf16.mxu0 %v1668
    %3223 = vmatpush1.bf16.msra.mxu0 %v1667
    %3224 = vmatprep.subr.bf16.mxu0 %v1672
    %3225 = vmatpush1.bf16.msra.mxu0 %v1671
    %3226 = vmatprep.subr.bf16.mxu0 %v1676
    %3227 = vmatpush1.bf16.msra.mxu0 %v1675
    %3228 = vmatprep.subr.bf16.mxu0 %v1680
    %3229 = vmatpush1.bf16.msra.mxu0 %v1679
    %3230 = vmatprep.subr.bf16.mxu0 %v1684
    %3231 = vmatpush1.bf16.msra.mxu0 %v1683
    %3232 = vmatprep.subr.bf16.mxu0 %v1688
    %3233 = vmatpush1.bf16.msra.mxu0 %v1687
    %3234 = vmatprep.subr.bf16.mxu0 %v1692
    %3235 = vmatpush1.bf16.msra.mxu0 %v1691
    %3236 = vmatprep.subr.bf16.mxu0 %v1696
    %3237 = vmatpush1.bf16.msra.mxu0 %v1695
    %3238 = vmatprep.mubr.bf16.mxu0 %v2904
    %3239 = vmatmul.mubr.bf16.gmra.mrb[0].mxu0 %v2903
    %v3240 = vpop.f32.mrb[0].mxu0
    %v3241 = vadd.f32 %v3200, %v3240
    %v3242 = vpop.f32.mrb[0].mxu0
    %v3243 = vadd.f32 %v3202, %v3242
    %v3244 = vpop.f32.mrb[0].mxu0
    %v3245 = vpop.f32.mrb[0].mxu0
    %3246 = vdwg.mxu0
    %3247 = vmatprep.subr.bf16.mxu0 %v1700
    %3248 = vmatpush1.bf16.msra.mxu0 %v1699
    %3249 = vmatprep.subr.bf16.mxu0 %v1704
    %3250 = vmatpush1.bf16.msra.mxu0 %v1703
    %3251 = vmatprep.subr.bf16.mxu0 %v1708
    %3252 = vmatpush1.bf16.msra.mxu0 %v1707
    %3253 = vmatprep.subr.bf16.mxu0 %v1712
    %3254 = vmatpush1.bf16.msra.mxu0 %v1711
    %3255 = vmatprep.subr.bf16.mxu0 %v1716
    %3256 = vmatpush1.bf16.msra.mxu0 %v1715
    %3257 = vmatprep.subr.bf16.mxu0 %v1720
    %3258 = vmatpush1.bf16.msra.mxu0 %v1719
    %3259 = vmatprep.subr.bf16.mxu0 %v1724
    %3260 = vmatpush1.bf16.msra.mxu0 %v1723
    %3261 = vmatprep.subr.bf16.mxu0 %v1728
    %3262 = vmatpush1.bf16.msra.mxu0 %v1727
    %3263 = vmatprep.subr.bf16.mxu0 %v1732
    %3264 = vmatpush1.bf16.msra.mxu0 %v1731
    %3265 = vmatprep.subr.bf16.mxu0 %v1736
    %3266 = vmatpush1.bf16.msra.mxu0 %v1735
    %3267 = vmatprep.subr.bf16.mxu0 %v1740
    %3268 = vmatpush1.bf16.msra.mxu0 %v1739
    %3269 = vmatprep.subr.bf16.mxu0 %v1744
    %3270 = vmatpush1.bf16.msra.mxu0 %v1743
    %3271 = vmatprep.subr.bf16.mxu0 %v1748
    %3272 = vmatpush1.bf16.msra.mxu0 %v1747
    %3273 = vmatprep.subr.bf16.mxu0 %v1752
    %3274 = vmatpush1.bf16.msra.mxu0 %v1751
    %3275 = vmatprep.subr.bf16.mxu0 %v1756
    %3276 = vmatpush1.bf16.msra.mxu0 %v1755
    %3277 = vmatprep.subr.bf16.mxu0 %v1760
    %3278 = vmatpush1.bf16.msra.mxu0 %v1759
    %3279 = vmatprep.mubr.bf16.mxu0 %v2906
    %3280 = vmatmul.mubr.bf16.gmra.mrb[0].mxu0 %v2905
    %v3281 = vpop.f32.mrb[0].mxu0
    %v3282 = vadd.f32 %v3241, %v3281
    %v3283 = vpop.f32.mrb[0].mxu0
    %v3284 = vadd.f32 %v3243, %v3283
    %v3285 = vpop.f32.mrb[0].mxu0
    %v3286 = vpop.f32.mrb[0].mxu0
    %3287 = vdwg.mxu0
    %3288 = vmatprep.subr.bf16.mxu0 %v1764
    %3289 = vmatpush1.bf16.msra.mxu0 %v1763
    %3290 = vmatprep.subr.bf16.mxu0 %v1768
    %3291 = vmatpush1.bf16.msra.mxu0 %v1767
    %3292 = vmatprep.subr.bf16.mxu0 %v1772
    %3293 = vmatpush1.bf16.msra.mxu0 %v1771
    %3294 = vmatprep.subr.bf16.mxu0 %v1776
    %3295 = vmatpush1.bf16.msra.mxu0 %v1775
    %3296 = vmatprep.subr.bf16.mxu0 %v1780
    %3297 = vmatpush1.bf16.msra.mxu0 %v1779
    %3298 = vmatprep.subr.bf16.mxu0 %v1784
    %3299 = vmatpush1.bf16.msra.mxu0 %v1783
    %3300 = vmatprep.subr.bf16.mxu0 %v1788
    %3301 = vmatpush1.bf16.msra.mxu0 %v1787
    %3302 = vmatprep.subr.bf16.mxu0 %v1792
    %3303 = vmatpush1.bf16.msra.mxu0 %v1791
    %3304 = vmatprep.subr.bf16.mxu0 %v1796
    %3305 = vmatpush1.bf16.msra.mxu0 %v1795
    %3306 = vmatprep.subr.bf16.mxu0 %v1800
    %3307 = vmatpush1.bf16.msra.mxu0 %v1799
    %3308 = vmatprep.subr.bf16.mxu0 %v1804
    %3309 = vmatpush1.bf16.msra.mxu0 %v1803
    %3310 = vmatprep.subr.bf16.mxu0 %v1808
    %3311 = vmatpush1.bf16.msra.mxu0 %v1807
    %3312 = vmatprep.subr.bf16.mxu0 %v1812
    %3313 = vmatpush1.bf16.msra.mxu0 %v1811
    %3314 = vmatprep.subr.bf16.mxu0 %v1816
    %3315 = vmatpush1.bf16.msra.mxu0 %v1815
    %3316 = vmatprep.subr.bf16.mxu0 %v1820
    %3317 = vmatpush1.bf16.msra.mxu0 %v1819
    %3318 = vmatprep.subr.bf16.mxu0 %v1824
    %3319 = vmatpush1.bf16.msra.mxu0 %v1823
    %3320 = vmatprep.mubr.bf16.mxu0 %v2908
    %3321 = vmatmul.mubr.bf16.gmra.mrb[0].mxu0 %v2907
    %v3322 = vpop.f32.mrb[0].mxu0
    %v3323 = vadd.f32 %v3282, %v3322
    %v3324 = vpop.f32.mrb[0].mxu0
    %v3325 = vadd.f32 %v3284, %v3324
    %v3326 = vpop.f32.mrb[0].mxu0
    %v3327 = vpop.f32.mrb[0].mxu0
    %3328 = vdwg.mxu0
    %3329 = vmatprep.subr.bf16.mxu0 %v2652
    %3330 = vmatpush1.bf16.msra.mxu0 %v2651
    %3331 = vmatprep.subr.bf16.mxu0 %v2656
    %3332 = vmatpush1.bf16.msra.mxu0 %v2655
    %3333 = vmatprep.subr.bf16.mxu0 %v2660
    %3334 = vmatpush1.bf16.msra.mxu0 %v2659
    %3335 = vmatprep.subr.bf16.mxu0 %v2664
    %3336 = vmatpush1.bf16.msra.mxu0 %v2663
    %3337 = vmatprep.subr.bf16.mxu0 %v2668
    %3338 = vmatpush1.bf16.msra.mxu0 %v2667
    %3339 = vmatprep.subr.bf16.mxu0 %v2672
    %3340 = vmatpush1.bf16.msra.mxu0 %v2671
    %3341 = vmatprep.subr.bf16.mxu0 %v2676
    %3342 = vmatpush1.bf16.msra.mxu0 %v2675
    %3343 = vmatprep.subr.bf16.mxu0 %v2680
    %3344 = vmatpush1.bf16.msra.mxu0 %v2679
    %3345 = vmatprep.subr.bf16.mxu0 0
    %3346 = vmatpush1.bf16.msra.mxu0 0
    %3347 = vmatprep.subr.bf16.mxu0 0
    %3348 = vmatpush1.bf16.msra.mxu0 0
    %3349 = vmatprep.subr.bf16.mxu0 0
    %3350 = vmatpush1.bf16.msra.mxu0 0
    %3351 = vmatprep.subr.bf16.mxu0 0
    %3352 = vmatpush1.bf16.msra.mxu0 0
    %3353 = vmatprep.subr.bf16.mxu0 0
    %3354 = vmatpush1.bf16.msra.mxu0 0
    %3355 = vmatprep.subr.bf16.mxu0 0
    %3356 = vmatpush1.bf16.msra.mxu0 0
    %3357 = vmatprep.subr.bf16.mxu0 0
    %3358 = vmatpush1.bf16.msra.mxu0 0
    %3359 = vmatprep.subr.bf16.mxu0 0
    %3360 = vmatpush1.bf16.msra.mxu0 0
    %3361 = vmatprep.mubr.bf16.mxu0 0
    %3362 = vmatmul.mubr.bf16.gmra.mrb[0].mxu0 %v2877
    %v3363 = vpop.f32.mrb[0].mxu0
    %v3364 = vadd.f32 %v3118, %v3363
    %v3365 = vpop.f32.mrb[0].mxu0
    %v3366 = vadd.f32 %v3120, %v3365
    %v3367 = vpop.f32.mrb[0].mxu0
    %v3368 = vpop.f32.mrb[0].mxu0
    %3369 = vdwg.mxu0
    %3370 = vmatprep.subr.bf16.mxu0 %v2654
    %3371 = vmatpush1.bf16.msra.mxu0 %v2653
    %3372 = vmatprep.subr.bf16.mxu0 %v2658
    %3373 = vmatpush1.bf16.msra.mxu0 %v2657
    %3374 = vmatprep.subr.bf16.mxu0 %v2662
    %3375 = vmatpush1.bf16.msra.mxu0 %v2661
    %3376 = vmatprep.subr.bf16.mxu0 %v2666
    %3377 = vmatpush1.bf16.msra.mxu0 %v2665
    %3378 = vmatprep.subr.bf16.mxu0 %v2670
    %3379 = vmatpush1.bf16.msra.mxu0 %v2669
    %3380 = vmatprep.subr.bf16.mxu0 %v2674
    %3381 = vmatpush1.bf16.msra.mxu0 %v2673
    %3382 = vmatprep.subr.bf16.mxu0 %v2678
    %3383 = vmatpush1.bf16.msra.mxu0 %v2677
    %3384 = vmatprep.subr.bf16.mxu0 %v2682
    %3385 = vmatpush1.bf16.msra.mxu0 %v2681
    %3386 = vmatprep.subr.bf16.mxu0 0
    %3387 = vmatpush1.bf16.msra.mxu0 0
    %3388 = vmatprep.subr.bf16.mxu0 0
    %3389 = vmatpush1.bf16.msra.mxu0 0
    %3390 = vmatprep.subr.bf16.mxu0 0
    %3391 = vmatpush1.bf16.msra.mxu0 0
    %3392 = vmatprep.subr.bf16.mxu0 0
    %3393 = vmatpush1.bf16.msra.mxu0 0
    %3394 = vmatprep.subr.bf16.mxu0 0
    %3395 = vmatpush1.bf16.msra.mxu0 0
    %3396 = vmatprep.subr.bf16.mxu0 0
    %3397 = vmatpush1.bf16.msra.mxu0 0
    %3398 = vmatprep.subr.bf16.mxu0 0
    %3399 = vmatpush1.bf16.msra.mxu0 0
    %3400 = vmatprep.subr.bf16.mxu0 0
    %3401 = vmatpush1.bf16.msra.mxu0 0
    %3402 = vmatprep.mubr.bf16.mxu0 0
    %3403 = vmatmul.mubr.bf16.gmra.mrb[0].mxu0 %v2877
    %v3404 = vpop.f32.mrb[0].mxu0
    %v3405 = vadd.f32 %v3323, %v3404
    %v3406 = vpop.f32.mrb[0].mxu0
    %v3407 = vadd.f32 %v3325, %v3406
    %v3408 = vpop.f32.mrb[0].mxu0
    %v3409 = vpop.f32.mrb[0].mxu0
    %3410 = vdwg.mxu0
    %v3411 = vmax.f32 %v3364, 0.0
    %v3412 = vmax.f32 %v3366, 0.0
    %v3413 = vmax.f32 %v3405, 0.0
    %v3414 = vmax.f32 %v3407, 0.0
    %v3415 = vpack.c.bf16 %v3411, %v3411
    %v3416 = vpack.c.bf16 %v3412, %v3412
    %v3417 = vpack.c.bf16 %v3413, %v3413
    %v3418 = vpack.c.bf16 %v3414, %v3414
    %s3419 = scalar_lea.vmem %s4, 256
    %v3420 = vld [vmem:[%s3419] sm:$0xf]
    %v3421 = vld [vmem:[%s3419 + $0x4] sm:$0xf]
    %v3422 = vld [vmem:[%s3419 + $0x8] sm:$0xf]
    %v3423 = vld [vmem:[%s3419 + $0xc] sm:$0xf]
    %v3424 = vld [vmem:[%s3419 + $0x10] sm:$0xf]
    %v3425 = vld [vmem:[%s3419 + $0x14] sm:$0xf]
    %v3426 = vld [vmem:[%s3419 + $0x18] sm:$0xf]
    %v3427 = vld [vmem:[%s3419 + $0x1c] sm:$0xf]
    %v3428 = vld [vmem:[%s3419 + $0x20] sm:$0xf]
    %v3429 = vld [vmem:[%s3419 + $0x24] sm:$0xf]
    %v3430 = vld [vmem:[%s3419 + $0x28] sm:$0xf]
    %v3431 = vld [vmem:[%s3419 + $0x2c] sm:$0xf]
    %v3432 = vld [vmem:[%s3419 + $0x30] sm:$0xf]
    %v3433 = vld [vmem:[%s3419 + $0x34] sm:$0xf]
    %v3434 = vld [vmem:[%s3419 + $0x38] sm:$0xf]
    %v3435 = vld [vmem:[%s3419 + $0x3c] sm:$0xf]
    %v3436 = vld [vmem:[%s3419 + $0x40] sm:$0xf]
    %v3437 = vld [vmem:[%s3419 + $0x44] sm:$0xf]
    %v3438 = vld [vmem:[%s3419 + $0x48] sm:$0xf]
    %v3439 = vld [vmem:[%s3419 + $0x4c] sm:$0xf]
    %v3440 = vld [vmem:[%s3419 + $0x50] sm:$0xf]
    %v3441 = vld [vmem:[%s3419 + $0x54] sm:$0xf]
    %v3442 = vld [vmem:[%s3419 + $0x58] sm:$0xf]
    %v3443 = vld [vmem:[%s3419 + $0x5c] sm:$0xf]
    %v3444 = vld [vmem:[%s3419 + $0x60] sm:$0xf]
    %v3445 = vld [vmem:[%s3419 + $0x64] sm:$0xf]
    %v3446 = vld [vmem:[%s3419 + $0x68] sm:$0xf]
    %v3447 = vld [vmem:[%s3419 + $0x6c] sm:$0xf]
    %v3448 = vld [vmem:[%s3419 + $0x70] sm:$0xf]
    %v3449 = vld [vmem:[%s3419 + $0x74] sm:$0xf]
    %v3450 = vld [vmem:[%s3419 + $0x78] sm:$0xf]
    %v3451 = vld [vmem:[%s3419 + $0x7c] sm:$0xf]
    %v3452 = vld [vmem:[%s3419 + $0x80] sm:$0xf]
    %v3453 = vld [vmem:[%s3419 + $0x84] sm:$0xf]
    %v3454 = vld [vmem:[%s3419 + $0x88] sm:$0xf]
    %v3455 = vld [vmem:[%s3419 + $0x8c] sm:$0xf]
    %v3456 = vld [vmem:[%s3419 + $0x90] sm:$0xf]
    %v3457 = vld [vmem:[%s3419 + $0x94] sm:$0xf]
    %v3458 = vld [vmem:[%s3419 + $0x98] sm:$0xf]
    %v3459 = vld [vmem:[%s3419 + $0x9c] sm:$0xf]
    %v3460 = vld [vmem:[%s3419 + $0xa0] sm:$0xf]
    %v3461 = vld [vmem:[%s3419 + $0xa4] sm:$0xf]
    %v3462 = vld [vmem:[%s3419 + $0xa8] sm:$0xf]
    %v3463 = vld [vmem:[%s3419 + $0xac] sm:$0xf]
    %v3464 = vld [vmem:[%s3419 + $0xb0] sm:$0xf]
    %v3465 = vld [vmem:[%s3419 + $0xb4] sm:$0xf]
    %v3466 = vld [vmem:[%s3419 + $0xb8] sm:$0xf]
    %v3467 = vld [vmem:[%s3419 + $0xbc] sm:$0xf]
    %v3468 = vld [vmem:[%s3419 + $0xc0] sm:$0xf]
    %v3469 = vld [vmem:[%s3419 + $0xc4] sm:$0xf]
    %v3470 = vld [vmem:[%s3419 + $0xc8] sm:$0xf]
    %v3471 = vld [vmem:[%s3419 + $0xcc] sm:$0xf]
    %v3472 = vld [vmem:[%s3419 + $0xd0] sm:$0xf]
    %v3473 = vld [vmem:[%s3419 + $0xd4] sm:$0xf]
    %v3474 = vld [vmem:[%s3419 + $0xd8] sm:$0xf]
    %v3475 = vld [vmem:[%s3419 + $0xdc] sm:$0xf]
    %v3476 = vld [vmem:[%s3419 + $0xe0] sm:$0xf]
    %v3477 = vld [vmem:[%s3419 + $0xe4] sm:$0xf]
    %v3478 = vld [vmem:[%s3419 + $0xe8] sm:$0xf]
    %v3479 = vld [vmem:[%s3419 + $0xec] sm:$0xf]
    %v3480 = vld [vmem:[%s3419 + $0xf0] sm:$0xf]
    %v3481 = vld [vmem:[%s3419 + $0xf4] sm:$0xf]
    %v3482 = vld [vmem:[%s3419 + $0xf8] sm:$0xf]
    %v3483 = vld [vmem:[%s3419 + $0xfc] sm:$0xf]
    %v3548 = vunpack.c.l.b16 %v3420
    %v3549 = vunpack.c.l.b16 %v3421
    %v3550 = vunpack.c.l.b16 %v3422
    %v3551 = vunpack.c.l.b16 %v3423
    %v3552 = vunpack.c.l.b16 %v3424
    %v3553 = vunpack.c.l.b16 %v3425
    %v3554 = vunpack.c.l.b16 %v3426
    %v3555 = vunpack.c.l.b16 %v3427
    %v3556 = vunpack.c.l.b16 %v3428
    %v3557 = vunpack.c.l.b16 %v3429
    %v3558 = vunpack.c.l.b16 %v3430
    %v3559 = vunpack.c.l.b16 %v3431
    %v3560 = vunpack.c.l.b16 %v3432
    %v3561 = vunpack.c.l.b16 %v3433
    %v3562 = vunpack.c.l.b16 %v3434
    %v3563 = vunpack.c.l.b16 %v3435
    %v3564 = vunpack.c.l.b16 %v3436
    %v3565 = vunpack.c.l.b16 %v3437
    %v3566 = vunpack.c.l.b16 %v3438
    %v3567 = vunpack.c.l.b16 %v3439
    %v3568 = vunpack.c.l.b16 %v3440
    %v3569 = vunpack.c.l.b16 %v3441
    %v3570 = vunpack.c.l.b16 %v3442
    %v3571 = vunpack.c.l.b16 %v3443
    %v3572 = vunpack.c.l.b16 %v3444
    %v3573 = vunpack.c.l.b16 %v3445
    %v3574 = vunpack.c.l.b16 %v3446
    %v3575 = vunpack.c.l.b16 %v3447
    %v3576 = vunpack.c.l.b16 %v3448
    %v3577 = vunpack.c.l.b16 %v3449
    %v3578 = vunpack.c.l.b16 %v3450
    %v3579 = vunpack.c.l.b16 %v3451
    %v3580 = vunpack.c.l.b16 %v3452
    %v3581 = vunpack.c.l.b16 %v3453
    %v3582 = vunpack.c.l.b16 %v3454
    %v3583 = vunpack.c.l.b16 %v3455
    %v3584 = vunpack.c.l.b16 %v3456
    %v3585 = vunpack.c.l.b16 %v3457
    %v3586 = vunpack.c.l.b16 %v3458
    %v3587 = vunpack.c.l.b16 %v3459
    %v3588 = vunpack.c.l.b16 %v3460
    %v3589 = vunpack.c.l.b16 %v3461
    %v3590 = vunpack.c.l.b16 %v3462
    %v3591 = vunpack.c.l.b16 %v3463
    %v3592 = vunpack.c.l.b16 %v3464
    %v3593 = vunpack.c.l.b16 %v3465
    %v3594 = vunpack.c.l.b16 %v3466
    %v3595 = vunpack.c.l.b16 %v3467
    %v3596 = vunpack.c.l.b16 %v3468
    %v3597 = vunpack.c.l.b16 %v3469
    %v3598 = vunpack.c.l.b16 %v3470
    %v3599 = vunpack.c.l.b16 %v3471
    %v3600 = vunpack.c.l.b16 %v3472
    %v3601 = vunpack.c.l.b16 %v3473
    %v3602 = vunpack.c.l.b16 %v3474
    %v3603 = vunpack.c.l.b16 %v3475
    %v3604 = vunpack.c.l.b16 %v3476
    %v3605 = vunpack.c.l.b16 %v3477
    %v3606 = vunpack.c.l.b16 %v3478
    %v3607 = vunpack.c.l.b16 %v3479
    %v3608 = vunpack.c.l.b16 %v3480
    %v3609 = vunpack.c.l.b16 %v3481
    %v3610 = vunpack.c.l.b16 %v3482
    %v3611 = vunpack.c.l.b16 %v3483
    %v3612 = vpack.c.b16 %v3549, %v3548
    %v3613 = vpack.c.b16 %v3551, %v3550
    %v3614 = vpack.c.b16 %v3553, %v3552
    %v3615 = vpack.c.b16 %v3555, %v3554
    %v3616 = vpack.c.b16 %v3557, %v3556
    %v3617 = vpack.c.b16 %v3559, %v3558
    %v3618 = vpack.c.b16 %v3561, %v3560
    %v3619 = vpack.c.b16 %v3563, %v3562
    %v3620 = vpack.c.b16 %v3565, %v3564
    %v3621 = vpack.c.b16 %v3567, %v3566
    %v3622 = vpack.c.b16 %v3569, %v3568
    %v3623 = vpack.c.b16 %v3571, %v3570
    %v3624 = vpack.c.b16 %v3573, %v3572
    %v3625 = vpack.c.b16 %v3575, %v3574
    %v3626 = vpack.c.b16 %v3577, %v3576
    %v3627 = vpack.c.b16 %v3579, %v3578
    %v3628 = vpack.c.b16 %v3581, %v3580
    %v3629 = vpack.c.b16 %v3583, %v3582
    %v3630 = vpack.c.b16 %v3585, %v3584
    %v3631 = vpack.c.b16 %v3587, %v3586
    %v3632 = vpack.c.b16 %v3589, %v3588
    %v3633 = vpack.c.b16 %v3591, %v3590
    %v3634 = vpack.c.b16 %v3593, %v3592
    %v3635 = vpack.c.b16 %v3595, %v3594
    %v3636 = vpack.c.b16 %v3597, %v3596
    %v3637 = vpack.c.b16 %v3599, %v3598
    %v3638 = vpack.c.b16 %v3601, %v3600
    %v3639 = vpack.c.b16 %v3603, %v3602
    %v3640 = vpack.c.b16 %v3605, %v3604
    %v3641 = vpack.c.b16 %v3607, %v3606
    %v3642 = vpack.c.b16 %v3609, %v3608
    %v3643 = vpack.c.b16 %v3611, %v3610
    %3676 = vmatprep.subr.bf16.mxu0 0
    %3677 = vmatpush1.bf16.msra.mxu0 %v3612
    %3678 = vmatprep.subr.bf16.mxu0 0
    %3679 = vmatpush1.bf16.msra.mxu0 %v3613
    %3680 = vmatprep.subr.bf16.mxu0 0
    %3681 = vmatpush1.bf16.msra.mxu0 %v3614
    %3682 = vmatprep.subr.bf16.mxu0 0
    %3683 = vmatpush1.bf16.msra.mxu0 %v3615
    %3684 = vmatprep.subr.bf16.mxu0 0
    %3685 = vmatpush1.bf16.msra.mxu0 %v3616
    %3686 = vmatprep.subr.bf16.mxu0 0
    %3687 = vmatpush1.bf16.msra.mxu0 %v3617
    %3688 = vmatprep.subr.bf16.mxu0 0
    %3689 = vmatpush1.bf16.msra.mxu0 %v3618
    %3690 = vmatprep.subr.bf16.mxu0 0
    %3691 = vmatpush1.bf16.msra.mxu0 %v3619
    %3692 = vmatprep.subr.bf16.mxu0 0
    %3693 = vmatpush1.bf16.msra.mxu0 %v3620
    %3694 = vmatprep.subr.bf16.mxu0 0
    %3695 = vmatpush1.bf16.msra.mxu0 %v3621
    %3696 = vmatprep.subr.bf16.mxu0 0
    %3697 = vmatpush1.bf16.msra.mxu0 %v3622
    %3698 = vmatprep.subr.bf16.mxu0 0
    %3699 = vmatpush1.bf16.msra.mxu0 %v3623
    %3700 = vmatprep.subr.bf16.mxu0 0
    %3701 = vmatpush1.bf16.msra.mxu0 %v3624
    %3702 = vmatprep.subr.bf16.mxu0 0
    %3703 = vmatpush1.bf16.msra.mxu0 %v3625
    %3704 = vmatprep.subr.bf16.mxu0 0
    %3705 = vmatpush1.bf16.msra.mxu0 %v3626
    %3706 = vmatprep.subr.bf16.mxu0 0
    %3707 = vmatpush1.bf16.msra.mxu0 %v3627
    %3708 = vmatprep.mubr.bf16.mxu0 %v3416
    %3709 = vmatmul.mubr.bf16.gmra.mrb[0].mxu0 %v3415
    %v3710 = vpop.f32.mrb[0].mxu0
    %v3711 = vadd.f32 0.0, %v3710
    %v3712 = vpop.f32.mrb[0].mxu0
    %v3713 = vpop.f32.mrb[0].mxu0
    %v3714 = vpop.f32.mrb[0].mxu0
    %3715 = vdwg.mxu0
    %3716 = vmatprep.subr.bf16.mxu0 0
    %3717 = vmatpush1.bf16.msra.mxu0 %v3628
    %3718 = vmatprep.subr.bf16.mxu0 0
    %3719 = vmatpush1.bf16.msra.mxu0 %v3629
    %3720 = vmatprep.subr.bf16.mxu0 0
    %3721 = vmatpush1.bf16.msra.mxu0 %v3630
    %3722 = vmatprep.subr.bf16.mxu0 0
    %3723 = vmatpush1.bf16.msra.mxu0 %v3631
    %3724 = vmatprep.subr.bf16.mxu0 0
    %3725 = vmatpush1.bf16.msra.mxu0 %v3632
    %3726 = vmatprep.subr.bf16.mxu0 0
    %3727 = vmatpush1.bf16.msra.mxu0 %v3633
    %3728 = vmatprep.subr.bf16.mxu0 0
    %3729 = vmatpush1.bf16.msra.mxu0 %v3634
    %3730 = vmatprep.subr.bf16.mxu0 0
    %3731 = vmatpush1.bf16.msra.mxu0 %v3635
    %3732 = vmatprep.subr.bf16.mxu0 0
    %3733 = vmatpush1.bf16.msra.mxu0 %v3636
    %3734 = vmatprep.subr.bf16.mxu0 0
    %3735 = vmatpush1.bf16.msra.mxu0 %v3637
    %3736 = vmatprep.subr.bf16.mxu0 0
    %3737 = vmatpush1.bf16.msra.mxu0 %v3638
    %3738 = vmatprep.subr.bf16.mxu0 0
    %3739 = vmatpush1.bf16.msra.mxu0 %v3639
    %3740 = vmatprep.subr.bf16.mxu0 0
    %3741 = vmatpush1.bf16.msra.mxu0 %v3640
    %3742 = vmatprep.subr.bf16.mxu0 0
    %3743 = vmatpush1.bf16.msra.mxu0 %v3641
    %3744 = vmatprep.subr.bf16.mxu0 0
    %3745 = vmatpush1.bf16.msra.mxu0 %v3642
    %3746 = vmatprep.subr.bf16.mxu0 0
    %3747 = vmatpush1.bf16.msra.mxu0 %v3643
    %3748 = vmatprep.mubr.bf16.mxu0 %v3418
    %3749 = vmatmul.mubr.bf16.gmra.mrb[0].mxu0 %v3417
    %v3750 = vpop.f32.mrb[0].mxu0
    %v3751 = vadd.f32 %v3711, %v3750
    %v3752 = vpop.f32.mrb[0].mxu0
    %v3753 = vpop.f32.mrb[0].mxu0
    %v3754 = vpop.f32.mrb[0].mxu0
    %3755 = vdwg.mxu0
    %v3820 = vunpack.c.l.b16 %v2805
    %v3821 = vunpack.c.l.b16 %v2806
    %v3822 = vunpack.c.l.b16 %v2807
    %v3823 = vunpack.c.l.b16 %v2808
    %v3824 = vunpack.c.l.b16 %v2809
    %v3825 = vunpack.c.l.b16 %v2810
    %v3826 = vunpack.c.l.b16 %v2811
    %v3827 = vunpack.c.l.b16 %v2812
    %v3828 = vunpack.c.l.b16 %v2813
    %v3829 = vunpack.c.l.b16 %v2814
    %v3830 = vunpack.c.l.b16 %v2815
    %v3831 = vunpack.c.l.b16 %v2816
    %v3832 = vunpack.c.l.b16 %v2817
    %v3833 = vunpack.c.l.b16 %v2818
    %v3834 = vunpack.c.l.b16 %v2819
    %v3835 = vunpack.c.l.b16 %v2820
    %v3836 = vunpack.c.l.b16 %v2821
    %v3837 = vunpack.c.l.b16 %v2822
    %v3838 = vunpack.c.l.b16 %v2823
    %v3839 = vunpack.c.l.b16 %v2824
    %v3840 = vunpack.c.l.b16 %v2825
    %v3841 = vunpack.c.l.b16 %v2826
    %v3842 = vunpack.c.l.b16 %v2827
    %v3843 = vunpack.c.l.b16 %v2828
    %v3844 = vunpack.c.l.b16 %v2829
    %v3845 = vunpack.c.l.b16 %v2830
    %v3846 = vunpack.c.l.b16 %v2831
    %v3847 = vunpack.c.l.b16 %v2832
    %v3848 = vunpack.c.l.b16 %v2833
    %v3849 = vunpack.c.l.b16 %v2834
    %v3850 = vunpack.c.l.b16 %v2835
    %v3851 = vunpack.c.l.b16 %v2836
    %v3852 = vunpack.c.l.b16 %v2837
    %v3853 = vunpack.c.l.b16 %v2838
    %v3854 = vunpack.c.l.b16 %v2839
    %v3855 = vunpack.c.l.b16 %v2840
    %v3856 = vunpack.c.l.b16 %v2841
    %v3857 = vunpack.c.l.b16 %v2842
    %v3858 = vunpack.c.l.b16 %v2843
    %v3859 = vunpack.c.l.b16 %v2844
    %v3860 = vunpack.c.l.b16 %v2845
    %v3861 = vunpack.c.l.b16 %v2846
    %v3862 = vunpack.c.l.b16 %v2847
    %v3863 = vunpack.c.l.b16 %v2848
    %v3864 = vunpack.c.l.b16 %v2849
    %v3865 = vunpack.c.l.b16 %v2850
    %v3866 = vunpack.c.l.b16 %v2851
    %v3867 = vunpack.c.l.b16 %v2852
    %v3868 = vunpack.c.l.b16 %v2853
    %v3869 = vunpack.c.l.b16 %v2854
    %v3870 = vunpack.c.l.b16 %v2855
    %v3871 = vunpack.c.l.b16 %v2856
    %v3872 = vunpack.c.l.b16 %v2857
    %v3873 = vunpack.c.l.b16 %v2858
    %v3874 = vunpack.c.l.b16 %v2859
    %v3875 = vunpack.c.l.b16 %v2860
    %v3876 = vunpack.c.l.b16 %v2861
    %v3877 = vunpack.c.l.b16 %v2862
    %v3878 = vunpack.c.l.b16 %v2863
    %v3879 = vunpack.c.l.b16 %v2864
    %v3880 = vunpack.c.l.b16 %v2865
    %v3881 = vunpack.c.l.b16 %v2866
    %v3882 = vunpack.c.l.b16 %v2867
    %v3883 = vunpack.c.l.b16 %v2868
    %v3884 = vpack.c.b16 %v3821, %v3820
    %v3885 = vpack.c.b16 %v3823, %v3822
    %v3886 = vpack.c.b16 %v3825, %v3824
    %v3887 = vpack.c.b16 %v3827, %v3826
    %v3888 = vpack.c.b16 %v3829, %v3828
    %v3889 = vpack.c.b16 %v3831, %v3830
    %v3890 = vpack.c.b16 %v3833, %v3832
    %v3891 = vpack.c.b16 %v3835, %v3834
    %v3892 = vpack.c.b16 %v3837, %v3836
    %v3893 = vpack.c.b16 %v3839, %v3838
    %v3894 = vpack.c.b16 %v3841, %v3840
    %v3895 = vpack.c.b16 %v3843, %v3842
    %v3896 = vpack.c.b16 %v3845, %v3844
    %v3897 = vpack.c.b16 %v3847, %v3846
    %v3898 = vpack.c.b16 %v3849, %v3848
    %v3899 = vpack.c.b16 %v3851, %v3850
    %v3900 = vpack.c.b16 %v3853, %v3852
    %v3901 = vpack.c.b16 %v3855, %v3854
    %v3902 = vpack.c.b16 %v3857, %v3856
    %v3903 = vpack.c.b16 %v3859, %v3858
    %v3904 = vpack.c.b16 %v3861, %v3860
    %v3905 = vpack.c.b16 %v3863, %v3862
    %v3906 = vpack.c.b16 %v3865, %v3864
    %v3907 = vpack.c.b16 %v3867, %v3866
    %v3908 = vpack.c.b16 %v3869, %v3868
    %v3909 = vpack.c.b16 %v3871, %v3870
    %v3910 = vpack.c.b16 %v3873, %v3872
    %v3911 = vpack.c.b16 %v3875, %v3874
    %v3912 = vpack.c.b16 %v3877, %v3876
    %v3913 = vpack.c.b16 %v3879, %v3878
    %v3914 = vpack.c.b16 %v3881, %v3880
    %v3915 = vpack.c.b16 %v3883, %v3882
    %3948 = vmatprep.subr.bf16.mxu0 0
    %3949 = vmatpush1.bf16.msra.mxu0 %v3884
    %3950 = vmatprep.subr.bf16.mxu0 0
    %3951 = vmatpush1.bf16.msra.mxu0 %v3885
    %3952 = vmatprep.subr.bf16.mxu0 0
    %3953 = vmatpush1.bf16.msra.mxu0 %v3886
    %3954 = vmatprep.subr.bf16.mxu0 0
    %3955 = vmatpush1.bf16.msra.mxu0 %v3887
    %3956 = vmatprep.subr.bf16.mxu0 0
    %3957 = vmatpush1.bf16.msra.mxu0 %v3888
    %3958 = vmatprep.subr.bf16.mxu0 0
    %3959 = vmatpush1.bf16.msra.mxu0 %v3889
    %3960 = vmatprep.subr.bf16.mxu0 0
    %3961 = vmatpush1.bf16.msra.mxu0 %v3890
    %3962 = vmatprep.subr.bf16.mxu0 0
    %3963 = vmatpush1.bf16.msra.mxu0 %v3891
    %3964 = vmatprep.subr.bf16.mxu0 0
    %3965 = vmatpush1.bf16.msra.mxu0 %v3892
    %3966 = vmatprep.subr.bf16.mxu0 0
    %3967 = vmatpush1.bf16.msra.mxu0 %v3893
    %3968 = vmatprep.subr.bf16.mxu0 0
    %3969 = vmatpush1.bf16.msra.mxu0 %v3894
    %3970 = vmatprep.subr.bf16.mxu0 0
    %3971 = vmatpush1.bf16.msra.mxu0 %v3895
    %3972 = vmatprep.subr.bf16.mxu0 0
    %3973 = vmatpush1.bf16.msra.mxu0 %v3896
    %3974 = vmatprep.subr.bf16.mxu0 0
    %3975 = vmatpush1.bf16.msra.mxu0 %v3897
    %3976 = vmatprep.subr.bf16.mxu0 0
    %3977 = vmatpush1.bf16.msra.mxu0 %v3898
    %3978 = vmatprep.subr.bf16.mxu0 0
    %3979 = vmatpush1.bf16.msra.mxu0 %v3899
    %3980 = vmatprep.mubr.bf16.mxu0 %v2802
    %3981 = vmatmul.mubr.bf16.gmra.mrb[0].mxu0 %v2801
    %v3982 = vpop.f32.mrb[0].mxu0
    %v3983 = vadd.f32 %v3751, %v3982
    %v3984 = vpop.f32.mrb[0].mxu0
    %v3985 = vpop.f32.mrb[0].mxu0
    %v3986 = vpop.f32.mrb[0].mxu0
    %3987 = vdwg.mxu0
    %3988 = vmatprep.subr.bf16.mxu0 0
    %3989 = vmatpush1.bf16.msra.mxu0 %v3900
    %3990 = vmatprep.subr.bf16.mxu0 0
    %3991 = vmatpush1.bf16.msra.mxu0 %v3901
    %3992 = vmatprep.subr.bf16.mxu0 0
    %3993 = vmatpush1.bf16.msra.mxu0 %v3902
    %3994 = vmatprep.subr.bf16.mxu0 0
    %3995 = vmatpush1.bf16.msra.mxu0 %v3903
    %3996 = vmatprep.subr.bf16.mxu0 0
    %3997 = vmatpush1.bf16.msra.mxu0 %v3904
    %3998 = vmatprep.subr.bf16.mxu0 0
    %3999 = vmatpush1.bf16.msra.mxu0 %v3905
    %4000 = vmatprep.subr.bf16.mxu0 0
    %4001 = vmatpush1.bf16.msra.mxu0 %v3906
    %4002 = vmatprep.subr.bf16.mxu0 0
    %4003 = vmatpush1.bf16.msra.mxu0 %v3907
    %4004 = vmatprep.subr.bf16.mxu0 0
    %4005 = vmatpush1.bf16.msra.mxu0 %v3908
    %4006 = vmatprep.subr.bf16.mxu0 0
    %4007 = vmatpush1.bf16.msra.mxu0 %v3909
    %4008 = vmatprep.subr.bf16.mxu0 0
    %4009 = vmatpush1.bf16.msra.mxu0 %v3910
    %4010 = vmatprep.subr.bf16.mxu0 0
    %4011 = vmatpush1.bf16.msra.mxu0 %v3911
    %4012 = vmatprep.subr.bf16.mxu0 0
    %4013 = vmatpush1.bf16.msra.mxu0 %v3912
    %4014 = vmatprep.subr.bf16.mxu0 0
    %4015 = vmatpush1.bf16.msra.mxu0 %v3913
    %4016 = vmatprep.subr.bf16.mxu0 0
    %4017 = vmatpush1.bf16.msra.mxu0 %v3914
    %4018 = vmatprep.subr.bf16.mxu0 0
    %4019 = vmatpush1.bf16.msra.mxu0 %v3915
    %4020 = vmatprep.mubr.bf16.mxu0 %v2804
    %4021 = vmatmul.mubr.bf16.gmra.mrb[0].mxu0 %v2803
    %v4022 = vpop.f32.mrb[0].mxu0
    %v4023 = vadd.f32 %v3983, %v4022
    %v4024 = vpop.f32.mrb[0].mxu0
    %v4025 = vpop.f32.mrb[0].mxu0
    %v4026 = vpop.f32.mrb[0].mxu0
    %4027 = vdwg.mxu0
    %s4028 = scalar_lea.vmem %s0, 16
    %v4029 = vld [vmem:[%s4028] sm:$0xff]
    %4030 = vset.pattern.permute.xlu0 0
    %4031 = vperm.xlu0 %4030, %v4029
    %v4032 = vpop.permute.xlu0 %4031
    %vm4033 = vcmp.eq.s32.totalorder %v4032, %v145
    %v4034 = vsel %vm4033, 1, 0
    %v4035 = vcvt.s32.f32 %v4034
    %v4036 = vpack.c.bf16 %v4035, %v4035
    %s4037 = scalar_lea.vmem %s1, 80
    %v4038 = vld [vmem:[%s4037] sm:$0xff]
    %v4039 = vld [vmem:[%s4037 + $0x8] sm:$0xff]
    %v4040 = vld [vmem:[%s4037 + $0x10] sm:$0xff]
    %v4041 = vld [vmem:[%s4037 + $0x18] sm:$0xff]
    %v4042 = vld [vmem:[%s4037 + $0x20] sm:$0xff]
    %v4048 = vunpack.c.l.b16 %v4038
    %v4049 = vunpack.c.h.b16 %v4038
    %v4050 = vunpack.c.l.b16 %v4039
    %v4051 = vunpack.c.h.b16 %v4039
    %v4052 = vunpack.c.l.b16 %v4040
    %v4053 = vunpack.c.h.b16 %v4040
    %v4054 = vunpack.c.l.b16 %v4041
    %v4055 = vunpack.c.h.b16 %v4041
    %v4056 = vunpack.c.l.b16 %v4042
    %v4057 = vunpack.c.h.b16 %v4042
    %v4058 = vpack.c.b16 %v4048, %v4048
    %v4059 = vpack.c.b16 %v4049, %v4049
    %v4060 = vpack.c.b16 %v4050, %v4050
    %v4061 = vpack.c.b16 %v4051, %v4051
    %v4062 = vpack.c.b16 %v4052, %v4052
    %v4063 = vpack.c.b16 %v4053, %v4053
    %v4064 = vpack.c.b16 %v4054, %v4054
    %v4065 = vpack.c.b16 %v4055, %v4055
    %v4066 = vpack.c.b16 %v4056, %v4056
    %v4067 = vpack.c.b16 %v4057, %v4057
    %4078 = vmatprep.subr.bf16.mxu0 %v1506
    %4079 = vmatpush1.bf16.msra.mxu0 %v1505
    %4080 = vmatprep.subr.bf16.mxu0 %v1510
    %4081 = vmatpush1.bf16.msra.mxu0 %v1509
    %4082 = vmatprep.subr.bf16.mxu0 %v1514
    %4083 = vmatpush1.bf16.msra.mxu0 %v1513
    %4084 = vmatprep.subr.bf16.mxu0 %v1518
    %4085 = vmatpush1.bf16.msra.mxu0 %v1517
    %4086 = vmatprep.subr.bf16.mxu0 %v1522
    %4087 = vmatpush1.bf16.msra.mxu0 %v1521
    %4088 = vmatprep.subr.bf16.mxu0 %v1526
    %4089 = vmatpush1.bf16.msra.mxu0 %v1525
    %4090 = vmatprep.subr.bf16.mxu0 %v1530
    %4091 = vmatpush1.bf16.msra.mxu0 %v1529
    %4092 = vmatprep.subr.bf16.mxu0 %v1534
    %4093 = vmatpush1.bf16.msra.mxu0 %v1533
    %4094 = vmatprep.subr.bf16.mxu0 %v1538
    %4095 = vmatpush1.bf16.msra.mxu0 %v1537
    %4096 = vmatprep.subr.bf16.mxu0 %v1542
    %4097 = vmatpush1.bf16.msra.mxu0 %v1541
    %4098 = vmatprep.subr.bf16.mxu0 %v1546
    %4099 = vmatpush1.bf16.msra.mxu0 %v1545
    %4100 = vmatprep.subr.bf16.mxu0 %v1550
    %4101 = vmatpush1.bf16.msra.mxu0 %v1549
    %4102 = vmatprep.subr.bf16.mxu0 %v1554
    %4103 = vmatpush1.bf16.msra.mxu0 %v1553
    %4104 = vmatprep.subr.bf16.mxu0 %v1558
    %4105 = vmatpush1.bf16.msra.mxu0 %v1557
    %4106 = vmatprep.subr.bf16.mxu0 %v1562
    %4107 = vmatpush1.bf16.msra.mxu0 %v1561
    %4108 = vmatprep.subr.bf16.mxu0 %v1566
    %4109 = vmatpush1.bf16.msra.mxu0 %v1565
    %4110 = vmatprep.mubr.bf16.mxu0 %v4059
    %4111 = vmatmul.mubr.bf16.gmra.mrb[0].mxu0 %v4058
    %v4112 = vpop.f32.mrb[0].mxu0
    %v4113 = vadd.f32 0.0, %v4112
    %v4114 = vpop.f32.mrb[0].mxu0
    %v4115 = vadd.f32 0.0, %v4114
    %v4116 = vpop.f32.mrb[0].mxu0
    %v4117 = vpop.f32.mrb[0].mxu0
    %4118 = vdwg.mxu0
    %4119 = vmatprep.subr.bf16.mxu0 %v1570
    %4120 = vmatpush1.bf16.msra.mxu0 %v1569
    %4121 = vmatprep.subr.bf16.mxu0 %v1574
    %4122 = vmatpush1.bf16.msra.mxu0 %v1573
    %4123 = vmatprep.subr.bf16.mxu0 %v1578
    %4124 = vmatpush1.bf16.msra.mxu0 %v1577
    %4125 = vmatprep.subr.bf16.mxu0 %v1582
    %4126 = vmatpush1.bf16.msra.mxu0 %v1581
    %4127 = vmatprep.subr.bf16.mxu0 %v1586
    %4128 = vmatpush1.bf16.msra.mxu0 %v1585
    %4129 = vmatprep.subr.bf16.mxu0 %v1590
    %4130 = vmatpush1.bf16.msra.mxu0 %v1589
    %4131 = vmatprep.subr.bf16.mxu0 %v1594
    %4132 = vmatpush1.bf16.msra.mxu0 %v1593
    %4133 = vmatprep.subr.bf16.mxu0 %v1598
    %4134 = vmatpush1.bf16.msra.mxu0 %v1597
    %4135 = vmatprep.subr.bf16.mxu0 %v1602
    %4136 = vmatpush1.bf16.msra.mxu0 %v1601
    %4137 = vmatprep.subr.bf16.mxu0 %v1606
    %4138 = vmatpush1.bf16.msra.mxu0 %v1605
    %4139 = vmatprep.subr.bf16.mxu0 %v1610
    %4140 = vmatpush1.bf16.msra.mxu0 %v1609
    %4141 = vmatprep.subr.bf16.mxu0 %v1614
    %4142 = vmatpush1.bf16.msra.mxu0 %v1613
    %4143 = vmatprep.subr.bf16.mxu0 %v1618
    %4144 = vmatpush1.bf16.msra.mxu0 %v1617
    %4145 = vmatprep.subr.bf16.mxu0 %v1622
    %4146 = vmatpush1.bf16.msra.mxu0 %v1621
    %4147 = vmatprep.subr.bf16.mxu0 %v1626
    %4148 = vmatpush1.bf16.msra.mxu0 %v1625
    %4149 = vmatprep.subr.bf16.mxu0 %v1630
    %4150 = vmatpush1.bf16.msra.mxu0 %v1629
    %4151 = vmatprep.mubr.bf16.mxu0 %v4061
    %4152 = vmatmul.mubr.bf16.gmra.mrb[0].mxu0 %v4060
    %v4153 = vpop.f32.mrb[0].mxu0
    %v4154 = vadd.f32 %v4113, %v4153
    %v4155 = vpop.f32.mrb[0].mxu0
    %v4156 = vadd.f32 %v4115, %v4155
    %v4157 = vpop.f32.mrb[0].mxu0
    %v4158 = vpop.f32.mrb[0].mxu0
    %4159 = vdwg.mxu0
    %4160 = vmatprep.subr.bf16.mxu0 %v1634
    %4161 = vmatpush1.bf16.msra.mxu0 %v1633
    %4162 = vmatprep.subr.bf16.mxu0 %v1638
    %4163 = vmatpush1.bf16.msra.mxu0 %v1637
    %4164 = vmatprep.subr.bf16.mxu0 %v1642
    %4165 = vmatpush1.bf16.msra.mxu0 %v1641
    %4166 = vmatprep.subr.bf16.mxu0 %v1646
    %4167 = vmatpush1.bf16.msra.mxu0 %v1645
    %4168 = vmatprep.subr.bf16.mxu0 %v1650
    %4169 = vmatpush1.bf16.msra.mxu0 %v1649
    %4170 = vmatprep.subr.bf16.mxu0 %v1654
    %4171 = vmatpush1.bf16.msra.mxu0 %v1653
    %4172 = vmatprep.subr.bf16.mxu0 %v1658
    %4173 = vmatpush1.bf16.msra.mxu0 %v1657
    %4174 = vmatprep.subr.bf16.mxu0 %v1662
    %4175 = vmatpush1.bf16.msra.mxu0 %v1661
    %4176 = vmatprep.subr.bf16.mxu0 %v1666
    %4177 = vmatpush1.bf16.msra.mxu0 %v1665
    %4178 = vmatprep.subr.bf16.mxu0 %v1670
    %4179 = vmatpush1.bf16.msra.mxu0 %v1669
    %4180 = vmatprep.subr.bf16.mxu0 %v1674
    %4181 = vmatpush1.bf16.msra.mxu0 %v1673
    %4182 = vmatprep.subr.bf16.mxu0 %v1678
    %4183 = vmatpush1.bf16.msra.mxu0 %v1677
    %4184 = vmatprep.subr.bf16.mxu0 %v1682
    %4185 = vmatpush1.bf16.msra.mxu0 %v1681
    %4186 = vmatprep.subr.bf16.mxu0 %v1686
    %4187 = vmatpush1.bf16.msra.mxu0 %v1685
    %4188 = vmatprep.subr.bf16.mxu0 %v1690
    %4189 = vmatpush1.bf16.msra.mxu0 %v1689
    %4190 = vmatprep.subr.bf16.mxu0 %v1694
    %4191 = vmatpush1.bf16.msra.mxu0 %v1693
    %4192 = vmatprep.mubr.bf16.mxu0 %v4063
    %4193 = vmatmul.mubr.bf16.gmra.mrb[0].mxu0 %v4062
    %v4194 = vpop.f32.mrb[0].mxu0
    %v4195 = vadd.f32 %v4154, %v4194
    %v4196 = vpop.f32.mrb[0].mxu0
    %v4197 = vadd.f32 %v4156, %v4196
    %v4198 = vpop.f32.mrb[0].mxu0
    %v4199 = vpop.f32.mrb[0].mxu0
    %4200 = vdwg.mxu0
    %4201 = vmatprep.subr.bf16.mxu0 %v1698
    %4202 = vmatpush1.bf16.msra.mxu0 %v1697
    %4203 = vmatprep.subr.bf16.mxu0 %v1702
    %4204 = vmatpush1.bf16.msra.mxu0 %v1701
    %4205 = vmatprep.subr.bf16.mxu0 %v1706
    %4206 = vmatpush1.bf16.msra.mxu0 %v1705
    %4207 = vmatprep.subr.bf16.mxu0 %v1710
    %4208 = vmatpush1.bf16.msra.mxu0 %v1709
    %4209 = vmatprep.subr.bf16.mxu0 %v1714
    %4210 = vmatpush1.bf16.msra.mxu0 %v1713
    %4211 = vmatprep.subr.bf16.mxu0 %v1718
    %4212 = vmatpush1.bf16.msra.mxu0 %v1717
    %4213 = vmatprep.subr.bf16.mxu0 %v1722
    %4214 = vmatpush1.bf16.msra.mxu0 %v1721
    %4215 = vmatprep.subr.bf16.mxu0 %v1726
    %4216 = vmatpush1.bf16.msra.mxu0 %v1725
    %4217 = vmatprep.subr.bf16.mxu0 %v1730
    %4218 = vmatpush1.bf16.msra.mxu0 %v1729
    %4219 = vmatprep.subr.bf16.mxu0 %v1734
    %4220 = vmatpush1.bf16.msra.mxu0 %v1733
    %4221 = vmatprep.subr.bf16.mxu0 %v1738
    %4222 = vmatpush1.bf16.msra.mxu0 %v1737
    %4223 = vmatprep.subr.bf16.mxu0 %v1742
    %4224 = vmatpush1.bf16.msra.mxu0 %v1741
    %4225 = vmatprep.subr.bf16.mxu0 %v1746
    %4226 = vmatpush1.bf16.msra.mxu0 %v1745
    %4227 = vmatprep.subr.bf16.mxu0 %v1750
    %4228 = vmatpush1.bf16.msra.mxu0 %v1749
    %4229 = vmatprep.subr.bf16.mxu0 %v1754
    %4230 = vmatpush1.bf16.msra.mxu0 %v1753
    %4231 = vmatprep.subr.bf16.mxu0 %v1758
    %4232 = vmatpush1.bf16.msra.mxu0 %v1757
    %4233 = vmatprep.mubr.bf16.mxu0 %v4065
    %4234 = vmatmul.mubr.bf16.gmra.mrb[0].mxu0 %v4064
    %v4235 = vpop.f32.mrb[0].mxu0
    %v4236 = vadd.f32 %v4195, %v4235
    %v4237 = vpop.f32.mrb[0].mxu0
    %v4238 = vadd.f32 %v4197, %v4237
    %v4239 = vpop.f32.mrb[0].mxu0
    %v4240 = vpop.f32.mrb[0].mxu0
    %4241 = vdwg.mxu0
    %4242 = vmatprep.subr.bf16.mxu0 %v1762
    %4243 = vmatpush1.bf16.msra.mxu0 %v1761
    %4244 = vmatprep.subr.bf16.mxu0 %v1766
    %4245 = vmatpush1.bf16.msra.mxu0 %v1765
    %4246 = vmatprep.subr.bf16.mxu0 %v1770
    %4247 = vmatpush1.bf16.msra.mxu0 %v1769
    %4248 = vmatprep.subr.bf16.mxu0 %v1774
    %4249 = vmatpush1.bf16.msra.mxu0 %v1773
    %4250 = vmatprep.subr.bf16.mxu0 %v1778
    %4251 = vmatpush1.bf16.msra.mxu0 %v1777
    %4252 = vmatprep.subr.bf16.mxu0 %v1782
    %4253 = vmatpush1.bf16.msra.mxu0 %v1781
    %4254 = vmatprep.subr.bf16.mxu0 %v1786
    %4255 = vmatpush1.bf16.msra.mxu0 %v1785
    %4256 = vmatprep.subr.bf16.mxu0 %v1790
    %4257 = vmatpush1.bf16.msra.mxu0 %v1789
    %4258 = vmatprep.subr.bf16.mxu0 %v1794
    %4259 = vmatpush1.bf16.msra.mxu0 %v1793
    %4260 = vmatprep.subr.bf16.mxu0 %v1798
    %4261 = vmatpush1.bf16.msra.mxu0 %v1797
    %4262 = vmatprep.subr.bf16.mxu0 %v1802
    %4263 = vmatpush1.bf16.msra.mxu0 %v1801
    %4264 = vmatprep.subr.bf16.mxu0 %v1806
    %4265 = vmatpush1.bf16.msra.mxu0 %v1805
    %4266 = vmatprep.subr.bf16.mxu0 %v1810
    %4267 = vmatpush1.bf16.msra.mxu0 %v1809
    %4268 = vmatprep.subr.bf16.mxu0 %v1814
    %4269 = vmatpush1.bf16.msra.mxu0 %v1813
    %4270 = vmatprep.subr.bf16.mxu0 %v1818
    %4271 = vmatpush1.bf16.msra.mxu0 %v1817
    %4272 = vmatprep.subr.bf16.mxu0 %v1822
    %4273 = vmatpush1.bf16.msra.mxu0 %v1821
    %4274 = vmatprep.mubr.bf16.mxu0 %v4067
    %4275 = vmatmul.mubr.bf16.gmra.mrb[0].mxu0 %v4066
    %v4276 = vpop.f32.mrb[0].mxu0
    %v4277 = vadd.f32 %v4236, %v4276
    %v4278 = vpop.f32.mrb[0].mxu0
    %v4279 = vadd.f32 %v4238, %v4278
    %v4280 = vpop.f32.mrb[0].mxu0
    %v4281 = vpop.f32.mrb[0].mxu0
    %4282 = vdwg.mxu0
    %4283 = vmatprep.subr.bf16.mxu0 %v1508
    %4284 = vmatpush1.bf16.msra.mxu0 %v1507
    %4285 = vmatprep.subr.bf16.mxu0 %v1512
    %4286 = vmatpush1.bf16.msra.mxu0 %v1511
    %4287 = vmatprep.subr.bf16.mxu0 %v1516
    %4288 = vmatpush1.bf16.msra.mxu0 %v1515
    %4289 = vmatprep.subr.bf16.mxu0 %v1520
    %4290 = vmatpush1.bf16.msra.mxu0 %v1519
    %4291 = vmatprep.subr.bf16.mxu0 %v1524
    %4292 = vmatpush1.bf16.msra.mxu0 %v1523
    %4293 = vmatprep.subr.bf16.mxu0 %v1528
    %4294 = vmatpush1.bf16.msra.mxu0 %v1527
    %4295 = vmatprep.subr.bf16.mxu0 %v1532
    %4296 = vmatpush1.bf16.msra.mxu0 %v1531
    %4297 = vmatprep.subr.bf16.mxu0 %v1536
    %4298 = vmatpush1.bf16.msra.mxu0 %v1535
    %4299 = vmatprep.subr.bf16.mxu0 %v1540
    %4300 = vmatpush1.bf16.msra.mxu0 %v1539
    %4301 = vmatprep.subr.bf16.mxu0 %v1544
    %4302 = vmatpush1.bf16.msra.mxu0 %v1543
    %4303 = vmatprep.subr.bf16.mxu0 %v1548
    %4304 = vmatpush1.bf16.msra.mxu0 %v1547
    %4305 = vmatprep.subr.bf16.mxu0 %v1552
    %4306 = vmatpush1.bf16.msra.mxu0 %v1551
    %4307 = vmatprep.subr.bf16.mxu0 %v1556
    %4308 = vmatpush1.bf16.msra.mxu0 %v1555
    %4309 = vmatprep.subr.bf16.mxu0 %v1560
    %4310 = vmatpush1.bf16.msra.mxu0 %v1559
    %4311 = vmatprep.subr.bf16.mxu0 %v1564
    %4312 = vmatpush1.bf16.msra.mxu0 %v1563
    %4313 = vmatprep.subr.bf16.mxu0 %v1568
    %4314 = vmatpush1.bf16.msra.mxu0 %v1567
    %4315 = vmatprep.mubr.bf16.mxu0 %v4059
    %4316 = vmatmul.mubr.bf16.gmra.mrb[0].mxu0 %v4058
    %v4317 = vpop.f32.mrb[0].mxu0
    %v4318 = vadd.f32 0.0, %v4317
    %v4319 = vpop.f32.mrb[0].mxu0
    %v4320 = vadd.f32 0.0, %v4319
    %v4321 = vpop.f32.mrb[0].mxu0
    %v4322 = vpop.f32.mrb[0].mxu0
    %4323 = vdwg.mxu0
    %4324 = vmatprep.subr.bf16.mxu0 %v1572
    %4325 = vmatpush1.bf16.msra.mxu0 %v1571
    %4326 = vmatprep.subr.bf16.mxu0 %v1576
    %4327 = vmatpush1.bf16.msra.mxu0 %v1575
    %4328 = vmatprep.subr.bf16.mxu0 %v1580
    %4329 = vmatpush1.bf16.msra.mxu0 %v1579
    %4330 = vmatprep.subr.bf16.mxu0 %v1584
    %4331 = vmatpush1.bf16.msra.mxu0 %v1583
    %4332 = vmatprep.subr.bf16.mxu0 %v1588
    %4333 = vmatpush1.bf16.msra.mxu0 %v1587
    %4334 = vmatprep.subr.bf16.mxu0 %v1592
    %4335 = vmatpush1.bf16.msra.mxu0 %v1591
    %4336 = vmatprep.subr.bf16.mxu0 %v1596
    %4337 = vmatpush1.bf16.msra.mxu0 %v1595
    %4338 = vmatprep.subr.bf16.mxu0 %v1600
    %4339 = vmatpush1.bf16.msra.mxu0 %v1599
    %4340 = vmatprep.subr.bf16.mxu0 %v1604
    %4341 = vmatpush1.bf16.msra.mxu0 %v1603
    %4342 = vmatprep.subr.bf16.mxu0 %v1608
    %4343 = vmatpush1.bf16.msra.mxu0 %v1607
    %4344 = vmatprep.subr.bf16.mxu0 %v1612
    %4345 = vmatpush1.bf16.msra.mxu0 %v1611
    %4346 = vmatprep.subr.bf16.mxu0 %v1616
    %4347 = vmatpush1.bf16.msra.mxu0 %v1615
    %4348 = vmatprep.subr.bf16.mxu0 %v1620
    %4349 = vmatpush1.bf16.msra.mxu0 %v1619
    %4350 = vmatprep.subr.bf16.mxu0 %v1624
    %4351 = vmatpush1.bf16.msra.mxu0 %v1623
    %4352 = vmatprep.subr.bf16.mxu0 %v1628
    %4353 = vmatpush1.bf16.msra.mxu0 %v1627
    %4354 = vmatprep.subr.bf16.mxu0 %v1632
    %4355 = vmatpush1.bf16.msra.mxu0 %v1631
    %4356 = vmatprep.mubr.bf16.mxu0 %v4061
    %4357 = vmatmul.mubr.bf16.gmra.mrb[0].mxu0 %v4060
    %v4358 = vpop.f32.mrb[0].mxu0
    %v4359 = vadd.f32 %v4318, %v4358
    %v4360 = vpop.f32.mrb[0].mxu0
    %v4361 = vadd.f32 %v4320, %v4360
    %v4362 = vpop.f32.mrb[0].mxu0
    %v4363 = vpop.f32.mrb[0].mxu0
    %4364 = vdwg.mxu0
    %4365 = vmatprep.subr.bf16.mxu0 %v1636
    %4366 = vmatpush1.bf16.msra.mxu0 %v1635
    %4367 = vmatprep.subr.bf16.mxu0 %v1640
    %4368 = vmatpush1.bf16.msra.mxu0 %v1639
    %4369 = vmatprep.subr.bf16.mxu0 %v1644
    %4370 = vmatpush1.bf16.msra.mxu0 %v1643
    %4371 = vmatprep.subr.bf16.mxu0 %v1648
    %4372 = vmatpush1.bf16.msra.mxu0 %v1647
    %4373 = vmatprep.subr.bf16.mxu0 %v1652
    %4374 = vmatpush1.bf16.msra.mxu0 %v1651
    %4375 = vmatprep.subr.bf16.mxu0 %v1656
    %4376 = vmatpush1.bf16.msra.mxu0 %v1655
    %4377 = vmatprep.subr.bf16.mxu0 %v1660
    %4378 = vmatpush1.bf16.msra.mxu0 %v1659
    %4379 = vmatprep.subr.bf16.mxu0 %v1664
    %4380 = vmatpush1.bf16.msra.mxu0 %v1663
    %4381 = vmatprep.subr.bf16.mxu0 %v1668
    %4382 = vmatpush1.bf16.msra.mxu0 %v1667
    %4383 = vmatprep.subr.bf16.mxu0 %v1672
    %4384 = vmatpush1.bf16.msra.mxu0 %v1671
    %4385 = vmatprep.subr.bf16.mxu0 %v1676
    %4386 = vmatpush1.bf16.msra.mxu0 %v1675
    %4387 = vmatprep.subr.bf16.mxu0 %v1680
    %4388 = vmatpush1.bf16.msra.mxu0 %v1679
    %4389 = vmatprep.subr.bf16.mxu0 %v1684
    %4390 = vmatpush1.bf16.msra.mxu0 %v1683
    %4391 = vmatprep.subr.bf16.mxu0 %v1688
    %4392 = vmatpush1.bf16.msra.mxu0 %v1687
    %4393 = vmatprep.subr.bf16.mxu0 %v1692
    %4394 = vmatpush1.bf16.msra.mxu0 %v1691
    %4395 = vmatprep.subr.bf16.mxu0 %v1696
    %4396 = vmatpush1.bf16.msra.mxu0 %v1695
    %4397 = vmatprep.mubr.bf16.mxu0 %v4063
    %4398 = vmatmul.mubr.bf16.gmra.mrb[0].mxu0 %v4062
    %v4399 = vpop.f32.mrb[0].mxu0
    %v4400 = vadd.f32 %v4359, %v4399
    %v4401 = vpop.f32.mrb[0].mxu0
    %v4402 = vadd.f32 %v4361, %v4401
    %v4403 = vpop.f32.mrb[0].mxu0
    %v4404 = vpop.f32.mrb[0].mxu0
    %4405 = vdwg.mxu0
    %4406 = vmatprep.subr.bf16.mxu0 %v1700
    %4407 = vmatpush1.bf16.msra.mxu0 %v1699
    %4408 = vmatprep.subr.bf16.mxu0 %v1704
    %4409 = vmatpush1.bf16.msra.mxu0 %v1703
    %4410 = vmatprep.subr.bf16.mxu0 %v1708
    %4411 = vmatpush1.bf16.msra.mxu0 %v1707
    %4412 = vmatprep.subr.bf16.mxu0 %v1712
    %4413 = vmatpush1.bf16.msra.mxu0 %v1711
    %4414 = vmatprep.subr.bf16.mxu0 %v1716
    %4415 = vmatpush1.bf16.msra.mxu0 %v1715
    %4416 = vmatprep.subr.bf16.mxu0 %v1720
    %4417 = vmatpush1.bf16.msra.mxu0 %v1719
    %4418 = vmatprep.subr.bf16.mxu0 %v1724
    %4419 = vmatpush1.bf16.msra.mxu0 %v1723
    %4420 = vmatprep.subr.bf16.mxu0 %v1728
    %4421 = vmatpush1.bf16.msra.mxu0 %v1727
    %4422 = vmatprep.subr.bf16.mxu0 %v1732
    %4423 = vmatpush1.bf16.msra.mxu0 %v1731
    %4424 = vmatprep.subr.bf16.mxu0 %v1736
    %4425 = vmatpush1.bf16.msra.mxu0 %v1735
    %4426 = vmatprep.subr.bf16.mxu0 %v1740
    %4427 = vmatpush1.bf16.msra.mxu0 %v1739
    %4428 = vmatprep.subr.bf16.mxu0 %v1744
    %4429 = vmatpush1.bf16.msra.mxu0 %v1743
    %4430 = vmatprep.subr.bf16.mxu0 %v1748
    %4431 = vmatpush1.bf16.msra.mxu0 %v1747
    %4432 = vmatprep.subr.bf16.mxu0 %v1752
    %4433 = vmatpush1.bf16.msra.mxu0 %v1751
    %4434 = vmatprep.subr.bf16.mxu0 %v1756
    %4435 = vmatpush1.bf16.msra.mxu0 %v1755
    %4436 = vmatprep.subr.bf16.mxu0 %v1760
    %4437 = vmatpush1.bf16.msra.mxu0 %v1759
    %4438 = vmatprep.mubr.bf16.mxu0 %v4065
    %4439 = vmatmul.mubr.bf16.gmra.mrb[0].mxu0 %v4064
    %v4440 = vpop.f32.mrb[0].mxu0
    %v4441 = vadd.f32 %v4400, %v4440
    %v4442 = vpop.f32.mrb[0].mxu0
    %v4443 = vadd.f32 %v4402, %v4442
    %v4444 = vpop.f32.mrb[0].mxu0
    %v4445 = vpop.f32.mrb[0].mxu0
    %4446 = vdwg.mxu0
    %4447 = vmatprep.subr.bf16.mxu0 %v1764
    %4448 = vmatpush1.bf16.msra.mxu0 %v1763
    %4449 = vmatprep.subr.bf16.mxu0 %v1768
    %4450 = vmatpush1.bf16.msra.mxu0 %v1767
    %4451 = vmatprep.subr.bf16.mxu0 %v1772
    %4452 = vmatpush1.bf16.msra.mxu0 %v1771
    %4453 = vmatprep.subr.bf16.mxu0 %v1776
    %4454 = vmatpush1.bf16.msra.mxu0 %v1775
    %4455 = vmatprep.subr.bf16.mxu0 %v1780
    %4456 = vmatpush1.bf16.msra.mxu0 %v1779
    %4457 = vmatprep.subr.bf16.mxu0 %v1784
    %4458 = vmatpush1.bf16.msra.mxu0 %v1783
    %4459 = vmatprep.subr.bf16.mxu0 %v1788
    %4460 = vmatpush1.bf16.msra.mxu0 %v1787
    %4461 = vmatprep.subr.bf16.mxu0 %v1792
    %4462 = vmatpush1.bf16.msra.mxu0 %v1791
    %4463 = vmatprep.subr.bf16.mxu0 %v1796
    %4464 = vmatpush1.bf16.msra.mxu0 %v1795
    %4465 = vmatprep.subr.bf16.mxu0 %v1800
    %4466 = vmatpush1.bf16.msra.mxu0 %v1799
    %4467 = vmatprep.subr.bf16.mxu0 %v1804
    %4468 = vmatpush1.bf16.msra.mxu0 %v1803
    %4469 = vmatprep.subr.bf16.mxu0 %v1808
    %4470 = vmatpush1.bf16.msra.mxu0 %v1807
    %4471 = vmatprep.subr.bf16.mxu0 %v1812
    %4472 = vmatpush1.bf16.msra.mxu0 %v1811
    %4473 = vmatprep.subr.bf16.mxu0 %v1816
    %4474 = vmatpush1.bf16.msra.mxu0 %v1815
    %4475 = vmatprep.subr.bf16.mxu0 %v1820
    %4476 = vmatpush1.bf16.msra.mxu0 %v1819
    %4477 = vmatprep.subr.bf16.mxu0 %v1824
    %4478 = vmatpush1.bf16.msra.mxu0 %v1823
    %4479 = vmatprep.mubr.bf16.mxu0 %v4067
    %4480 = vmatmul.mubr.bf16.gmra.mrb[0].mxu0 %v4066
    %v4481 = vpop.f32.mrb[0].mxu0
    %v4482 = vadd.f32 %v4441, %v4481
    %v4483 = vpop.f32.mrb[0].mxu0
    %v4484 = vadd.f32 %v4443, %v4483
    %v4485 = vpop.f32.mrb[0].mxu0
    %v4486 = vpop.f32.mrb[0].mxu0
    %4487 = vdwg.mxu0
    %4488 = vmatprep.subr.bf16.mxu0 %v2652
    %4489 = vmatpush1.bf16.msra.mxu0 %v2651
    %4490 = vmatprep.subr.bf16.mxu0 %v2656
    %4491 = vmatpush1.bf16.msra.mxu0 %v2655
    %4492 = vmatprep.subr.bf16.mxu0 %v2660
    %4493 = vmatpush1.bf16.msra.mxu0 %v2659
    %4494 = vmatprep.subr.bf16.mxu0 %v2664
    %4495 = vmatpush1.bf16.msra.mxu0 %v2663
    %4496 = vmatprep.subr.bf16.mxu0 %v2668
    %4497 = vmatpush1.bf16.msra.mxu0 %v2667
    %4498 = vmatprep.subr.bf16.mxu0 %v2672
    %4499 = vmatpush1.bf16.msra.mxu0 %v2671
    %4500 = vmatprep.subr.bf16.mxu0 %v2676
    %4501 = vmatpush1.bf16.msra.mxu0 %v2675
    %4502 = vmatprep.subr.bf16.mxu0 %v2680
    %4503 = vmatpush1.bf16.msra.mxu0 %v2679
    %4504 = vmatprep.subr.bf16.mxu0 0
    %4505 = vmatpush1.bf16.msra.mxu0 0
    %4506 = vmatprep.subr.bf16.mxu0 0
    %4507 = vmatpush1.bf16.msra.mxu0 0
    %4508 = vmatprep.subr.bf16.mxu0 0
    %4509 = vmatpush1.bf16.msra.mxu0 0
    %4510 = vmatprep.subr.bf16.mxu0 0
    %4511 = vmatpush1.bf16.msra.mxu0 0
    %4512 = vmatprep.subr.bf16.mxu0 0
    %4513 = vmatpush1.bf16.msra.mxu0 0
    %4514 = vmatprep.subr.bf16.mxu0 0
    %4515 = vmatpush1.bf16.msra.mxu0 0
    %4516 = vmatprep.subr.bf16.mxu0 0
    %4517 = vmatpush1.bf16.msra.mxu0 0
    %4518 = vmatprep.subr.bf16.mxu0 0
    %4519 = vmatpush1.bf16.msra.mxu0 0
    %4520 = vmatprep.mubr.bf16.mxu0 0
    %4521 = vmatmul.mubr.bf16.gmra.mrb[0].mxu0 %v4036
    %v4522 = vpop.f32.mrb[0].mxu0
    %v4523 = vadd.f32 %v4277, %v4522
    %v4524 = vpop.f32.mrb[0].mxu0
    %v4525 = vadd.f32 %v4279, %v4524
    %v4526 = vpop.f32.mrb[0].mxu0
    %v4527 = vpop.f32.mrb[0].mxu0
    %4528 = vdwg.mxu0
    %4529 = vmatprep.subr.bf16.mxu0 %v2654
    %4530 = vmatpush1.bf16.msra.mxu0 %v2653
    %4531 = vmatprep.subr.bf16.mxu0 %v2658
    %4532 = vmatpush1.bf16.msra.mxu0 %v2657
    %4533 = vmatprep.subr.bf16.mxu0 %v2662
    %4534 = vmatpush1.bf16.msra.mxu0 %v2661
    %4535 = vmatprep.subr.bf16.mxu0 %v2666
    %4536 = vmatpush1.bf16.msra.mxu0 %v2665
    %4537 = vmatprep.subr.bf16.mxu0 %v2670
    %4538 = vmatpush1.bf16.msra.mxu0 %v2669
    %4539 = vmatprep.subr.bf16.mxu0 %v2674
    %4540 = vmatpush1.bf16.msra.mxu0 %v2673
    %4541 = vmatprep.subr.bf16.mxu0 %v2678
    %4542 = vmatpush1.bf16.msra.mxu0 %v2677
    %4543 = vmatprep.subr.bf16.mxu0 %v2682
    %4544 = vmatpush1.bf16.msra.mxu0 %v2681
    %4545 = vmatprep.subr.bf16.mxu0 0
    %4546 = vmatpush1.bf16.msra.mxu0 0
    %4547 = vmatprep.subr.bf16.mxu0 0
    %4548 = vmatpush1.bf16.msra.mxu0 0
    %4549 = vmatprep.subr.bf16.mxu0 0
    %4550 = vmatpush1.bf16.msra.mxu0 0
    %4551 = vmatprep.subr.bf16.mxu0 0
    %4552 = vmatpush1.bf16.msra.mxu0 0
    %4553 = vmatprep.subr.bf16.mxu0 0
    %4554 = vmatpush1.bf16.msra.mxu0 0
    %4555 = vmatprep.subr.bf16.mxu0 0
    %4556 = vmatpush1.bf16.msra.mxu0 0
    %4557 = vmatprep.subr.bf16.mxu0 0
    %4558 = vmatpush1.bf16.msra.mxu0 0
    %4559 = vmatprep.subr.bf16.mxu0 0
    %4560 = vmatpush1.bf16.msra.mxu0 0
    %4561 = vmatprep.mubr.bf16.mxu0 0
    %4562 = vmatmul.mubr.bf16.gmra.mrb[0].mxu0 %v4036
    %v4563 = vpop.f32.mrb[0].mxu0
    %v4564 = vadd.f32 %v4482, %v4563
    %v4565 = vpop.f32.mrb[0].mxu0
    %v4566 = vadd.f32 %v4484, %v4565
    %v4567 = vpop.f32.mrb[0].mxu0
    %v4568 = vpop.f32.mrb[0].mxu0
    %4569 = vdwg.mxu0
    %v4570 = vmax.f32 %v4523, 0.0
    %v4571 = vmax.f32 %v4525, 0.0
    %v4572 = vmax.f32 %v4564, 0.0
    %v4573 = vmax.f32 %v4566, 0.0
    %v4574 = vpack.c.bf16 %v4570, %v4570
    %v4575 = vpack.c.bf16 %v4571, %v4571
    %v4576 = vpack.c.bf16 %v4572, %v4572
    %v4577 = vpack.c.bf16 %v4573, %v4573
    %s4578 = scalar_lea.vmem %s4, 512
    %v4579 = vld [vmem:[%s4578] sm:$0xf]
    %v4580 = vld [vmem:[%s4578 + $0x4] sm:$0xf]
    %v4581 = vld [vmem:[%s4578 + $0x8] sm:$0xf]
    %v4582 = vld [vmem:[%s4578 + $0xc] sm:$0xf]
    %v4583 = vld [vmem:[%s4578 + $0x10] sm:$0xf]
    %v4584 = vld [vmem:[%s4578 + $0x14] sm:$0xf]
    %v4585 = vld [vmem:[%s4578 + $0x18] sm:$0xf]
    %v4586 = vld [vmem:[%s4578 + $0x1c] sm:$0xf]
    %v4587 = vld [vmem:[%s4578 + $0x20] sm:$0xf]
    %v4588 = vld [vmem:[%s4578 + $0x24] sm:$0xf]
    %v4589 = vld [vmem:[%s4578 + $0x28] sm:$0xf]
    %v4590 = vld [vmem:[%s4578 + $0x2c] sm:$0xf]
    %v4591 = vld [vmem:[%s4578 + $0x30] sm:$0xf]
    %v4592 = vld [vmem:[%s4578 + $0x34] sm:$0xf]
    %v4593 = vld [vmem:[%s4578 + $0x38] sm:$0xf]
    %v4594 = vld [vmem:[%s4578 + $0x3c] sm:$0xf]
    %v4595 = vld [vmem:[%s4578 + $0x40] sm:$0xf]
    %v4596 = vld [vmem:[%s4578 + $0x44] sm:$0xf]
    %v4597 = vld [vmem:[%s4578 + $0x48] sm:$0xf]
    %v4598 = vld [vmem:[%s4578 + $0x4c] sm:$0xf]
    %v4599 = vld [vmem:[%s4578 + $0x50] sm:$0xf]
    %v4600 = vld [vmem:[%s4578 + $0x54] sm:$0xf]
    %v4601 = vld [vmem:[%s4578 + $0x58] sm:$0xf]
    %v4602 = vld [vmem:[%s4578 + $0x5c] sm:$0xf]
    %v4603 = vld [vmem:[%s4578 + $0x60] sm:$0xf]
    %v4604 = vld [vmem:[%s4578 + $0x64] sm:$0xf]
    %v4605 = vld [vmem:[%s4578 + $0x68] sm:$0xf]
    %v4606 = vld [vmem:[%s4578 + $0x6c] sm:$0xf]
    %v4607 = vld [vmem:[%s4578 + $0x70] sm:$0xf]
    %v4608 = vld [vmem:[%s4578 + $0x74] sm:$0xf]
    %v4609 = vld [vmem:[%s4578 + $0x78] sm:$0xf]
    %v4610 = vld [vmem:[%s4578 + $0x7c] sm:$0xf]
    %v4611 = vld [vmem:[%s4578 + $0x80] sm:$0xf]
    %v4612 = vld [vmem:[%s4578 + $0x84] sm:$0xf]
    %v4613 = vld [vmem:[%s4578 + $0x88] sm:$0xf]
    %v4614 = vld [vmem:[%s4578 + $0x8c] sm:$0xf]
    %v4615 = vld [vmem:[%s4578 + $0x90] sm:$0xf]
    %v4616 = vld [vmem:[%s4578 + $0x94] sm:$0xf]
    %v4617 = vld [vmem:[%s4578 + $0x98] sm:$0xf]
    %v4618 = vld [vmem:[%s4578 + $0x9c] sm:$0xf]
    %v4619 = vld [vmem:[%s4578 + $0xa0] sm:$0xf]
    %v4620 = vld [vmem:[%s4578 + $0xa4] sm:$0xf]
    %v4621 = vld [vmem:[%s4578 + $0xa8] sm:$0xf]
    %v4622 = vld [vmem:[%s4578 + $0xac] sm:$0xf]
    %v4623 = vld [vmem:[%s4578 + $0xb0] sm:$0xf]
    %v4624 = vld [vmem:[%s4578 + $0xb4] sm:$0xf]
    %v4625 = vld [vmem:[%s4578 + $0xb8] sm:$0xf]
    %v4626 = vld [vmem:[%s4578 + $0xbc] sm:$0xf]
    %v4627 = vld [vmem:[%s4578 + $0xc0] sm:$0xf]
    %v4628 = vld [vmem:[%s4578 + $0xc4] sm:$0xf]
    %v4629 = vld [vmem:[%s4578 + $0xc8] sm:$0xf]
    %v4630 = vld [vmem:[%s4578 + $0xcc] sm:$0xf]
    %v4631 = vld [vmem:[%s4578 + $0xd0] sm:$0xf]
    %v4632 = vld [vmem:[%s4578 + $0xd4] sm:$0xf]
    %v4633 = vld [vmem:[%s4578 + $0xd8] sm:$0xf]
    %v4634 = vld [vmem:[%s4578 + $0xdc] sm:$0xf]
    %v4635 = vld [vmem:[%s4578 + $0xe0] sm:$0xf]
    %v4636 = vld [vmem:[%s4578 + $0xe4] sm:$0xf]
    %v4637 = vld [vmem:[%s4578 + $0xe8] sm:$0xf]
    %v4638 = vld [vmem:[%s4578 + $0xec] sm:$0xf]
    %v4639 = vld [vmem:[%s4578 + $0xf0] sm:$0xf]
    %v4640 = vld [vmem:[%s4578 + $0xf4] sm:$0xf]
    %v4641 = vld [vmem:[%s4578 + $0xf8] sm:$0xf]
    %v4642 = vld [vmem:[%s4578 + $0xfc] sm:$0xf]
    %v4707 = vunpack.c.l.b16 %v4579
    %v4708 = vunpack.c.l.b16 %v4580
    %v4709 = vunpack.c.l.b16 %v4581
    %v4710 = vunpack.c.l.b16 %v4582
    %v4711 = vunpack.c.l.b16 %v4583
    %v4712 = vunpack.c.l.b16 %v4584
    %v4713 = vunpack.c.l.b16 %v4585
    %v4714 = vunpack.c.l.b16 %v4586
    %v4715 = vunpack.c.l.b16 %v4587
    %v4716 = vunpack.c.l.b16 %v4588
    %v4717 = vunpack.c.l.b16 %v4589
    %v4718 = vunpack.c.l.b16 %v4590
    %v4719 = vunpack.c.l.b16 %v4591
    %v4720 = vunpack.c.l.b16 %v4592
    %v4721 = vunpack.c.l.b16 %v4593
    %v4722 = vunpack.c.l.b16 %v4594
    %v4723 = vunpack.c.l.b16 %v4595
    %v4724 = vunpack.c.l.b16 %v4596
    %v4725 = vunpack.c.l.b16 %v4597
    %v4726 = vunpack.c.l.b16 %v4598
    %v4727 = vunpack.c.l.b16 %v4599
    %v4728 = vunpack.c.l.b16 %v4600
    %v4729 = vunpack.c.l.b16 %v4601
    %v4730 = vunpack.c.l.b16 %v4602
    %v4731 = vunpack.c.l.b16 %v4603
    %v4732 = vunpack.c.l.b16 %v4604
    %v4733 = vunpack.c.l.b16 %v4605
    %v4734 = vunpack.c.l.b16 %v4606
    %v4735 = vunpack.c.l.b16 %v4607
    %v4736 = vunpack.c.l.b16 %v4608
    %v4737 = vunpack.c.l.b16 %v4609
    %v4738 = vunpack.c.l.b16 %v4610
    %v4739 = vunpack.c.l.b16 %v4611
    %v4740 = vunpack.c.l.b16 %v4612
    %v4741 = vunpack.c.l.b16 %v4613
    %v4742 = vunpack.c.l.b16 %v4614
    %v4743 = vunpack.c.l.b16 %v4615
    %v4744 = vunpack.c.l.b16 %v4616
    %v4745 = vunpack.c.l.b16 %v4617
    %v4746 = vunpack.c.l.b16 %v4618
    %v4747 = vunpack.c.l.b16 %v4619
    %v4748 = vunpack.c.l.b16 %v4620
    %v4749 = vunpack.c.l.b16 %v4621
    %v4750 = vunpack.c.l.b16 %v4622
    %v4751 = vunpack.c.l.b16 %v4623
    %v4752 = vunpack.c.l.b16 %v4624
    %v4753 = vunpack.c.l.b16 %v4625
    %v4754 = vunpack.c.l.b16 %v4626
    %v4755 = vunpack.c.l.b16 %v4627
    %v4756 = vunpack.c.l.b16 %v4628
    %v4757 = vunpack.c.l.b16 %v4629
    %v4758 = vunpack.c.l.b16 %v4630
    %v4759 = vunpack.c.l.b16 %v4631
    %v4760 = vunpack.c.l.b16 %v4632
    %v4761 = vunpack.c.l.b16 %v4633
    %v4762 = vunpack.c.l.b16 %v4634
    %v4763 = vunpack.c.l.b16 %v4635
    %v4764 = vunpack.c.l.b16 %v4636
    %v4765 = vunpack.c.l.b16 %v4637
    %v4766 = vunpack.c.l.b16 %v4638
    %v4767 = vunpack.c.l.b16 %v4639
    %v4768 = vunpack.c.l.b16 %v4640
    %v4769 = vunpack.c.l.b16 %v4641
    %v4770 = vunpack.c.l.b16 %v4642
    %v4771 = vpack.c.b16 %v4708, %v4707
    %v4772 = vpack.c.b16 %v4710, %v4709
    %v4773 = vpack.c.b16 %v4712, %v4711
    %v4774 = vpack.c.b16 %v4714, %v4713
    %v4775 = vpack.c.b16 %v4716, %v4715
    %v4776 = vpack.c.b16 %v4718, %v4717
    %v4777 = vpack.c.b16 %v4720, %v4719
    %v4778 = vpack.c.b16 %v4722, %v4721
    %v4779 = vpack.c.b16 %v4724, %v4723
    %v4780 = vpack.c.b16 %v4726, %v4725
    %v4781 = vpack.c.b16 %v4728, %v4727
    %v4782 = vpack.c.b16 %v4730, %v4729
    %v4783 = vpack.c.b16 %v4732, %v4731
    %v4784 = vpack.c.b16 %v4734, %v4733
    %v4785 = vpack.c.b16 %v4736, %v4735
    %v4786 = vpack.c.b16 %v4738, %v4737
    %v4787 = vpack.c.b16 %v4740, %v4739
    %v4788 = vpack.c.b16 %v4742, %v4741
    %v4789 = vpack.c.b16 %v4744, %v4743
    %v4790 = vpack.c.b16 %v4746, %v4745
    %v4791 = vpack.c.b16 %v4748, %v4747
    %v4792 = vpack.c.b16 %v4750, %v4749
    %v4793 = vpack.c.b16 %v4752, %v4751
    %v4794 = vpack.c.b16 %v4754, %v4753
    %v4795 = vpack.c.b16 %v4756, %v4755
    %v4796 = vpack.c.b16 %v4758, %v4757
    %v4797 = vpack.c.b16 %v4760, %v4759
    %v4798 = vpack.c.b16 %v4762, %v4761
    %v4799 = vpack.c.b16 %v4764, %v4763
    %v4800 = vpack.c.b16 %v4766, %v4765
    %v4801 = vpack.c.b16 %v4768, %v4767
    %v4802 = vpack.c.b16 %v4770, %v4769
    %4835 = vmatprep.subr.bf16.mxu0 0
    %4836 = vmatpush1.bf16.msra.mxu0 %v4771
    %4837 = vmatprep.subr.bf16.mxu0 0
    %4838 = vmatpush1.bf16.msra.mxu0 %v4772
    %4839 = vmatprep.subr.bf16.mxu0 0
    %4840 = vmatpush1.bf16.msra.mxu0 %v4773
    %4841 = vmatprep.subr.bf16.mxu0 0
    %4842 = vmatpush1.bf16.msra.mxu0 %v4774
    %4843 = vmatprep.subr.bf16.mxu0 0
    %4844 = vmatpush1.bf16.msra.mxu0 %v4775
    %4845 = vmatprep.subr.bf16.mxu0 0
    %4846 = vmatpush1.bf16.msra.mxu0 %v4776
    %4847 = vmatprep.subr.bf16.mxu0 0
    %4848 = vmatpush1.bf16.msra.mxu0 %v4777
    %4849 = vmatprep.subr.bf16.mxu0 0
    %4850 = vmatpush1.bf16.msra.mxu0 %v4778
    %4851 = vmatprep.subr.bf16.mxu0 0
    %4852 = vmatpush1.bf16.msra.mxu0 %v4779
    %4853 = vmatprep.subr.bf16.mxu0 0
    %4854 = vmatpush1.bf16.msra.mxu0 %v4780
    %4855 = vmatprep.subr.bf16.mxu0 0
    %4856 = vmatpush1.bf16.msra.mxu0 %v4781
    %4857 = vmatprep.subr.bf16.mxu0 0
    %4858 = vmatpush1.bf16.msra.mxu0 %v4782
    %4859 = vmatprep.subr.bf16.mxu0 0
    %4860 = vmatpush1.bf16.msra.mxu0 %v4783
    %4861 = vmatprep.subr.bf16.mxu0 0
    %4862 = vmatpush1.bf16.msra.mxu0 %v4784
    %4863 = vmatprep.subr.bf16.mxu0 0
    %4864 = vmatpush1.bf16.msra.mxu0 %v4785
    %4865 = vmatprep.subr.bf16.mxu0 0
    %4866 = vmatpush1.bf16.msra.mxu0 %v4786
    %4867 = vmatprep.mubr.bf16.mxu0 %v4575
    %4868 = vmatmul.mubr.bf16.gmra.mrb[0].mxu0 %v4574
    %v4869 = vpop.f32.mrb[0].mxu0
    %v4870 = vadd.f32 0.0, %v4869
    %v4871 = vpop.f32.mrb[0].mxu0
    %v4872 = vpop.f32.mrb[0].mxu0
    %v4873 = vpop.f32.mrb[0].mxu0
    %4874 = vdwg.mxu0
    %4875 = vmatprep.subr.bf16.mxu0 0
    %4876 = vmatpush1.bf16.msra.mxu0 %v4787
    %4877 = vmatprep.subr.bf16.mxu0 0
    %4878 = vmatpush1.bf16.msra.mxu0 %v4788
    %4879 = vmatprep.subr.bf16.mxu0 0
    %4880 = vmatpush1.bf16.msra.mxu0 %v4789
    %4881 = vmatprep.subr.bf16.mxu0 0
    %4882 = vmatpush1.bf16.msra.mxu0 %v4790
    %4883 = vmatprep.subr.bf16.mxu0 0
    %4884 = vmatpush1.bf16.msra.mxu0 %v4791
    %4885 = vmatprep.subr.bf16.mxu0 0
    %4886 = vmatpush1.bf16.msra.mxu0 %v4792
    %4887 = vmatprep.subr.bf16.mxu0 0
    %4888 = vmatpush1.bf16.msra.mxu0 %v4793
    %4889 = vmatprep.subr.bf16.mxu0 0
    %4890 = vmatpush1.bf16.msra.mxu0 %v4794
    %4891 = vmatprep.subr.bf16.mxu0 0
    %4892 = vmatpush1.bf16.msra.mxu0 %v4795
    %4893 = vmatprep.subr.bf16.mxu0 0
    %4894 = vmatpush1.bf16.msra.mxu0 %v4796
    %4895 = vmatprep.subr.bf16.mxu0 0
    %4896 = vmatpush1.bf16.msra.mxu0 %v4797
    %4897 = vmatprep.subr.bf16.mxu0 0
    %4898 = vmatpush1.bf16.msra.mxu0 %v4798
    %4899 = vmatprep.subr.bf16.mxu0 0
    %4900 = vmatpush1.bf16.msra.mxu0 %v4799
    %4901 = vmatprep.subr.bf16.mxu0 0
    %4902 = vmatpush1.bf16.msra.mxu0 %v4800
    %4903 = vmatprep.subr.bf16.mxu0 0
    %4904 = vmatpush1.bf16.msra.mxu0 %v4801
    %4905 = vmatprep.subr.bf16.mxu0 0
    %4906 = vmatpush1.bf16.msra.mxu0 %v4802
    %4907 = vmatprep.mubr.bf16.mxu0 %v4577
    %4908 = vmatmul.mubr.bf16.gmra.mrb[0].mxu0 %v4576
    %v4909 = vpop.f32.mrb[0].mxu0
    %v4910 = vadd.f32 %v4870, %v4909
    %v4911 = vpop.f32.mrb[0].mxu0
    %v4912 = vpop.f32.mrb[0].mxu0
    %v4913 = vpop.f32.mrb[0].mxu0
    %4914 = vdwg.mxu0
    %v4915 = vadd.f32 %v4023, %v4910
    %v4916 = vld [vmem:[#allocation6] sm:$0x1]
    %v4918 = vlaneseq
    %v4919 = vshrl.u32 %v4918, 7
    %v4920 = vsub.s32 0, %v4919
    %v4921 = vrot.slane %v4916, %v4920
    %v4923 = vadd.f32 %v4915, %v4921
    %v4924 = vpack.c.bf16 %v4923, %v4923
    %v4925 = vld [vmem:[#allocation7] sm:$0xf]
    %v4926 = vld [vmem:[#allocation7 + $0x4] sm:$0xf]
    %v4927 = vld [vmem:[#allocation7 + $0x8] sm:$0xf]
    %v4928 = vld [vmem:[#allocation7 + $0xc] sm:$0xf]
    %v4929 = vld [vmem:[#allocation9] sm:$0x1]
    %v4931 = vlaneseq
    %v4932 = vshrl.u32 %v4931, 7
    %v4933 = vsub.s32 0, %v4932
    %v4934 = vrot.slane %v4929, %v4933
    %v4940 = vunpack.c.l.b16 %v4925
    %v4941 = vunpack.c.l.b16 %v4926
    %v4942 = vunpack.c.l.b16 %v4927
    %v4943 = vunpack.c.l.b16 %v4928
    %v4944 = vpack.c.b16 %v4941, %v4940
    %v4945 = vpack.c.b16 %v4943, %v4942
    %vm4948 = vcmask 261120
    %v4950 = vsel %vm4948, %v4924, 0
    %4952 = vmatprep.subr.bf16.mxu0 0
    %4953 = vmatpush1.bf16.msra.mxu0 %v4944
    %4954 = vmatprep.subr.bf16.mxu0 0
    %4955 = vmatpush1.bf16.msra.mxu0 %v4945
    %4956 = vmatprep.subr.bf16.mxu0 0
    %4957 = vmatpush1.bf16.msra.mxu0 0
    %4958 = vmatprep.subr.bf16.mxu0 0
    %4959 = vmatpush1.bf16.msra.mxu0 0
    %4960 = vmatprep.subr.bf16.mxu0 0
    %4961 = vmatpush1.bf16.msra.mxu0 0
    %4962 = vmatprep.subr.bf16.mxu0 0
    %4963 = vmatpush1.bf16.msra.mxu0 0
    %4964 = vmatprep.subr.bf16.mxu0 0
    %4965 = vmatpush1.bf16.msra.mxu0 0
    %4966 = vmatprep.subr.bf16.mxu0 0
    %4967 = vmatpush1.bf16.msra.mxu0 0
    %4968 = vmatprep.subr.bf16.mxu0 0
    %4969 = vmatpush1.bf16.msra.mxu0 0
    %4970 = vmatprep.subr.bf16.mxu0 0
    %4971 = vmatpush1.bf16.msra.mxu0 0
    %4972 = vmatprep.subr.bf16.mxu0 0
    %4973 = vmatpush1.bf16.msra.mxu0 0
    %4974 = vmatprep.subr.bf16.mxu0 0
    %4975 = vmatpush1.bf16.msra.mxu0 0
    %4976 = vmatprep.subr.bf16.mxu0 0
    %4977 = vmatpush1.bf16.msra.mxu0 0
    %4978 = vmatprep.subr.bf16.mxu0 0
    %4979 = vmatpush1.bf16.msra.mxu0 0
    %4980 = vmatprep.subr.bf16.mxu0 0
    %4981 = vmatpush1.bf16.msra.mxu0 0
    %4982 = vmatprep.subr.bf16.mxu0 0
    %4983 = vmatpush1.bf16.msra.mxu0 0
    %4984 = vmatprep.mubr.bf16.mxu0 0
    %4985 = vmatmul.mubr.bf16.gmra.mrb[0].mxu0 %v4950
    %v4986 = vpop.f32.mrb[0].mxu0
    %v4987 = vadd.f32 %v4934, %v4986
    %v4988 = vpop.f32.mrb[0].mxu0
    %v4989 = vpop.f32.mrb[0].mxu0
    %v4990 = vpop.f32.mrb[0].mxu0
    %4991 = vdwg.mxu0
    %v4992 = vmax.f32 %v4987, 0.0
    %v4993 = vpack.c.bf16 %v4992, %v4992
    %v4994 = vld [vmem:[%s8] sm:$0xf]
    %v4995 = vld [vmem:[%s8 + $0x4] sm:$0xf]
    %v4996 = vld [vmem:[%s8 + $0x8] sm:$0xf]
    %v4997 = vld [vmem:[%s8 + $0xc] sm:$0xf]
    %v4998 = vld [vmem:[%s8 + $0x10] sm:$0xf]
    %v4999 = vld [vmem:[%s8 + $0x14] sm:$0xf]
    %v5000 = vld [vmem:[%s8 + $0x18] sm:$0xf]
    %v5001 = vld [vmem:[%s8 + $0x1c] sm:$0xf]
    %v5002 = vld [vmem:[%s8 + $0x20] sm:$0xf]
    %v5003 = vld [vmem:[%s8 + $0x24] sm:$0xf]
    %v5004 = vld [vmem:[%s8 + $0x28] sm:$0xf]
    %v5005 = vld [vmem:[%s8 + $0x2c] sm:$0xf]
    %v5006 = vld [vmem:[#allocation10] sm:$0x1]
    %v5008 = vlaneseq
    %v5009 = vshrl.u32 %v5008, 7
    %v5010 = vsub.s32 0, %v5009
    %v5011 = vrot.slane %v5006, %v5010
    %v5025 = vunpack.c.l.b16 %v4994
    %v5026 = vunpack.c.l.b16 %v4995
    %v5027 = vunpack.c.l.b16 %v4996
    %v5028 = vunpack.c.l.b16 %v4997
    %v5029 = vunpack.c.l.b16 %v4998
    %v5030 = vunpack.c.l.b16 %v4999
    %v5031 = vunpack.c.l.b16 %v5000
    %v5032 = vunpack.c.l.b16 %v5001
    %v5033 = vunpack.c.l.b16 %v5002
    %v5034 = vunpack.c.l.b16 %v5003
    %v5035 = vunpack.c.l.b16 %v5004
    %v5036 = vunpack.c.l.b16 %v5005
    %v5037 = vpack.c.b16 %v5026, %v5025
    %v5038 = vpack.c.b16 %v5028, %v5027
    %v5039 = vpack.c.b16 %v5030, %v5029
    %v5040 = vpack.c.b16 %v5032, %v5031
    %v5041 = vpack.c.b16 %v5034, %v5033
    %v5042 = vpack.c.b16 %v5036, %v5035
    %vm5049 = vcmask 785408
    %v5051 = vsel %vm5049, %v4993, 0
    %5053 = vmatprep.subr.bf16.mxu0 0
    %5054 = vmatpush1.bf16.msra.mxu0 %v5037
    %5055 = vmatprep.subr.bf16.mxu0 0
    %5056 = vmatpush1.bf16.msra.mxu0 %v5038
    %5057 = vmatprep.subr.bf16.mxu0 0
    %5058 = vmatpush1.bf16.msra.mxu0 %v5039
    %5059 = vmatprep.subr.bf16.mxu0 0
    %5060 = vmatpush1.bf16.msra.mxu0 %v5040
    %5061 = vmatprep.subr.bf16.mxu0 0
    %5062 = vmatpush1.bf16.msra.mxu0 %v5041
    %5063 = vmatprep.subr.bf16.mxu0 0
    %5064 = vmatpush1.bf16.msra.mxu0 %v5042
    %5065 = vmatprep.subr.bf16.mxu0 0
    %5066 = vmatpush1.bf16.msra.mxu0 0
    %5067 = vmatprep.subr.bf16.mxu0 0
    %5068 = vmatpush1.bf16.msra.mxu0 0
    %5069 = vmatprep.subr.bf16.mxu0 0
    %5070 = vmatpush1.bf16.msra.mxu0 0
    %5071 = vmatprep.subr.bf16.mxu0 0
    %5072 = vmatpush1.bf16.msra.mxu0 0
    %5073 = vmatprep.subr.bf16.mxu0 0
    %5074 = vmatpush1.bf16.msra.mxu0 0
    %5075 = vmatprep.subr.bf16.mxu0 0
    %5076 = vmatpush1.bf16.msra.mxu0 0
    %5077 = vmatprep.subr.bf16.mxu0 0
    %5078 = vmatpush1.bf16.msra.mxu0 0
    %5079 = vmatprep.subr.bf16.mxu0 0
    %5080 = vmatpush1.bf16.msra.mxu0 0
    %5081 = vmatprep.subr.bf16.mxu0 0
    %5082 = vmatpush1.bf16.msra.mxu0 0
    %5083 = vmatprep.subr.bf16.mxu0 0
    %5084 = vmatpush1.bf16.msra.mxu0 0
    %5085 = vmatprep.mubr.bf16.mxu0 0
    %5086 = vmatmul.mubr.bf16.gmra.mrb[0].mxu0 %v5051
    %v5087 = vpop.f32.mrb[0].mxu0
    %v5088 = vadd.f32 %v5011, %v5087
    %v5089 = vpop.f32.mrb[0].mxu0
    %v5090 = vpop.f32.mrb[0].mxu0
    %v5091 = vpop.f32.mrb[0].mxu0
    %5092 = vdwg.mxu0
    %v5093 = vmax.f32 %v5088, 0.0
    %v5094 = vadd.f32 %v4923, %v5093
    %v5095 = vpack.c.bf16 %v5094, %v5094
    %v5096 = vld [vmem:[#allocation12] sm:$0xf]
    %v5097 = vld [vmem:[#allocation12 + $0x4] sm:$0xf]
    %v5098 = vld [vmem:[#allocation12 + $0x8] sm:$0xf]
    %v5099 = vld [vmem:[#allocation12 + $0xc] sm:$0xf]
    %v5100 = vld [vmem:[#allocation13] sm:$0x1]
    %v5102 = vlaneseq
    %v5103 = vshrl.u32 %v5102, 7
    %v5104 = vsub.s32 0, %v5103
    %v5105 = vrot.slane %v5100, %v5104
    %v5111 = vunpack.c.l.b16 %v5096
    %v5112 = vunpack.c.l.b16 %v5097
    %v5113 = vunpack.c.l.b16 %v5098
    %v5114 = vunpack.c.l.b16 %v5099
    %v5115 = vpack.c.b16 %v5112, %v5111
    %v5116 = vpack.c.b16 %v5114, %v5113
    %v5120 = vsel %vm4948, %v5095, 0
    %5122 = vmatprep.subr.bf16.mxu0 0
    %5123 = vmatpush1.bf16.msra.mxu0 %v5115
    %5124 = vmatprep.subr.bf16.mxu0 0
    %5125 = vmatpush1.bf16.msra.mxu0 %v5116
    %5126 = vmatprep.subr.bf16.mxu0 0
    %5127 = vmatpush1.bf16.msra.mxu0 0
    %5128 = vmatprep.subr.bf16.mxu0 0
    %5129 = vmatpush1.bf16.msra.mxu0 0
    %5130 = vmatprep.subr.bf16.mxu0 0
    %5131 = vmatpush1.bf16.msra.mxu0 0
    %5132 = vmatprep.subr.bf16.mxu0 0
    %5133 = vmatpush1.bf16.msra.mxu0 0
    %5134 = vmatprep.subr.bf16.mxu0 0
    %5135 = vmatpush1.bf16.msra.mxu0 0
    %5136 = vmatprep.subr.bf16.mxu0 0
    %5137 = vmatpush1.bf16.msra.mxu0 0
    %5138 = vmatprep.subr.bf16.mxu0 0
    %5139 = vmatpush1.bf16.msra.mxu0 0
    %5140 = vmatprep.subr.bf16.mxu0 0
    %5141 = vmatpush1.bf16.msra.mxu0 0
    %5142 = vmatprep.subr.bf16.mxu0 0
    %5143 = vmatpush1.bf16.msra.mxu0 0
    %5144 = vmatprep.subr.bf16.mxu0 0
    %5145 = vmatpush1.bf16.msra.mxu0 0
    %5146 = vmatprep.subr.bf16.mxu0 0
    %5147 = vmatpush1.bf16.msra.mxu0 0
    %5148 = vmatprep.subr.bf16.mxu0 0
    %5149 = vmatpush1.bf16.msra.mxu0 0
    %5150 = vmatprep.subr.bf16.mxu0 0
    %5151 = vmatpush1.bf16.msra.mxu0 0
    %5152 = vmatprep.subr.bf16.mxu0 0
    %5153 = vmatpush1.bf16.msra.mxu0 0
    %5154 = vmatprep.mubr.bf16.mxu0 0
    %5155 = vmatmul.mubr.bf16.gmra.mrb[0].mxu0 %v5120
    %v5156 = vpop.f32.mrb[0].mxu0
    %v5157 = vadd.f32 %v5105, %v5156
    %v5158 = vpop.f32.mrb[0].mxu0
    %v5159 = vpop.f32.mrb[0].mxu0
    %v5160 = vpop.f32.mrb[0].mxu0
    %5161 = vdwg.mxu0
    %v5162 = vand.u32 2147483647, %v5157
    %v5163 = vsub.f32 0.0, %v5162
    %v5164 = vmul.f32 %v5163, 1.442695
    %v5165 = vpow.pop %v5164
    %vm5166 = vcmp.ge.f32.partialorder %v5157, 0.0
    %v5167 = vsel %vm5166, 1.0, %v5165
    %v5168 = vadd.f32 %v5165, 1.0
    %v5169 = vrcp.pop %v5168
    %v5170 = vmul.f32 %v5167, %v5169
    %5171 = vst [vmem:[%s12] sm:$0xff] %v5170
    // Predicated region
    $region82: #{mcnn_forward.1} parent=1 // pred_check
      _
    $region83: #{mcnn_forward.1} parent=1 // pred_check_branch
      %5173 = sbr.rel (0) target = $region85
    $region84: #{mcnn_forward.1} parent=1 // pred_region
      _
    $region85: #{mcnn_forward.1} parent=1 // pred_fallthru
      _
    // Predicated region
    $region86: #{mcnn_forward.1} parent=1 // pred_check
      _
    $region87: #{mcnn_forward.1} parent=1 // pred_check_branch
      %5175 = sbr.rel (0) target = $region89
    $region88: #{mcnn_forward.1} parent=1 // pred_region
      _
    $region89: #{mcnn_forward.1} parent=1 // pred_fallthru
      _
    %5176 = vsyncpa [#allocation3], 1
    %5177 = vsyncpa [#allocation5], 1
    %5178 = vsyncpa [#allocation8], 1
    %5179 = vsyncpa [#allocation11], 1
    %5180 = vsyncpa [#allocation14], 1

</llo_original>
